<compile_context>
chip_gen: v7x
topology: tpu7x:2x2x1
jax: 0.10.0
libtpu: 0.0.40
codegen_flags: <defaults>
</compile_context>

<pallas_src>
import math
import jax
import jax.numpy as jnp
from jax.experimental import pallas as pl
from jax.experimental.pallas import tpu as pltpu

D_MODEL = 32
N_HEADS = 2
FF_DIM = 64
N_LAYERS = 4
EPS = 1e-5                       # PyTorch layer_norm_eps default

W_ROWS = 3 * D_MODEL + FF_DIM    # 160 rows per layer in the matrix slab
LANES = 128                      # pad lane dim to 128

# Flip to jnp.bfloat16 when the kernel stops being latency-bound (large B*T);
# accumulation stays f32 via preferred_element_type.
MATMUL_DTYPE = jnp.float32


def _mm(a, b):
    return jnp.dot(a.astype(MATMUL_DTYPE), b.astype(MATMUL_DTYPE),
                   preferred_element_type=jnp.float32)


def _mm_nt(a, b):  # a @ b.T without materializing a transpose
    return jax.lax.dot_general(a.astype(MATMUL_DTYPE), b.astype(MATMUL_DTYPE),
                               (((1,), (1,)), ((), ())),
                               preferred_element_type=jnp.float32)


def _layer_norm(x, gamma, beta):
    mean = jnp.mean(x, axis=-1, keepdims=True)
    var = jnp.mean(jnp.square(x - mean), axis=-1, keepdims=True)
    return (x - mean) * jax.lax.rsqrt(var + EPS) * gamma + beta


# ---------------------------------------------------------------------------
# host-side weight packing (pre-transpose, scale-fold, pad, pack)
# ---------------------------------------------------------------------------
def pack_weights(layers):
    d, ff = D_MODEL, FF_DIM
    scale = 1.0 / math.sqrt(d // N_HEADS)
    col_scale = jnp.concatenate(
        [jnp.full((d,), scale, jnp.float32), jnp.ones((2 * d,), jnp.float32)])
    w_slabs, v_slabs = [], []
    for p in layers:
        in_w_t = p["in_w"].T * col_scale[None, :]     # (D, 3D), Q cols pre-scaled
        in_b = p["in_b"] * col_scale                  # (3D,)
        w = jnp.zeros((W_ROWS, LANES), jnp.float32)
        w = w.at[0:d, 0:3 * d].set(in_w_t)
        w = w.at[d:2 * d, 0:d].set(p["out_w"].T)
        w = w.at[2 * d:3 * d, 0:ff].set(p["lin1_w"].T)
        w = w.at[3 * d:3 * d + ff, 0:d].set(p["lin2_w"].T)
        v = jnp.zeros((8, LANES), jnp.float32)
        v = v.at[0, 0:3 * d].set(in_b)
        v = v.at[1, 0:d].set(p["out_b"])
        v = v.at[2, 0:ff].set(p["lin1_b"])
        v = v.at[3, 0:d].set(p["lin2_b"])
        v = v.at[4, 0:d].set(p["n1_g"])
        v = v.at[5, 0:d].set(p["n1_b"])
        v = v.at[6, 0:d].set(p["n2_g"])
        v = v.at[7, 0:d].set(p["n2_b"])
        w_slabs.append(w)
        v_slabs.append(v)
    return jnp.stack(w_slabs), jnp.stack(v_slabs)


def _block_diag_bias(bc, t):
    """(bc*t, bc*t) additive mask: 0 within a batch element, -1e30 across."""
    ids = jnp.repeat(jnp.arange(bc, dtype=jnp.int32), t)
    return jnp.where(ids[:, None] == ids[None, :], 0.0, -1e30).astype(jnp.float32)


def _want_core_split(B, T):
    """Only split the batch over a 2-step grid when the device actually has
    two TensorCores (v7x) AND the problem is big enough that each core's
    compute outweighs the duplicated ~330 KiB weight DMA + extra grid step."""
    kind = getattr(jax.devices()[0], "device_kind", "") or ""
    multi_tc = "v7" in kind
    return (multi_tc and B % 2 == 0 and ((B // 2) * T) % 8 == 0
            and B * T >= 2048)


# ---------------------------------------------------------------------------
# Pallas kernel: all N_LAYERS encoder layers for one batch chunk, fully in VMEM
# ---------------------------------------------------------------------------
def encoder_stack_kernel(x_ref, bias_ref, w_ref, v_ref, out_ref):
    m, d = x_ref.shape            # m = Bc*T rows, d = 32
    dh = d // N_HEADS
    ff = FF_DIM

    attn_bias = bias_ref[...]     # (m, m) block-diagonal mask, reused by all layers
    x = x_ref[...]                # (m, d)

    for l in range(w_ref.shape[0]):            # static unroll over layers
        w_qkv = w_ref[l, 0:d, :]               # (D, 128) full lanes, Q pre-scaled
        w_out = w_ref[l, d:2 * d, :]           # (D, 128)
        w_ff1 = w_ref[l, 2 * d:3 * d, :]       # (D, 128)
        w_ff2 = w_ref[l, 3 * d:3 * d + ff, :]  # (FF, 128)
        b_qkv = v_ref[l, 0:1, :]               # (1, 128), padded cols are zero
        b_out = v_ref[l, 1:2, 0:d]
        b_ff1 = v_ref[l, 2:3, :]
        b_ff2 = v_ref[l, 3:4, 0:d]
        g1 = v_ref[l, 4:5, 0:d]
        be1 = v_ref[l, 5:6, 0:d]
        g2 = v_ref[l, 6:7, 0:d]
        be2 = v_ref[l, 7:8, 0:d]

        # ---- self-attention (all batch rows at once, block-diag masked) ----
        qkv = _mm(x, w_qkv) + b_qkv            # (m, 128); cols >= 96 stay zero

        heads = []
        for h in range(N_HEADS):               # static, N_HEADS = 2
            q = qkv[:, h * dh:(h + 1) * dh]
            k = qkv[:, d + h * dh:d + (h + 1) * dh]
            v = qkv[:, 2 * d + h * dh:2 * d + (h + 1) * dh]
            s = _mm_nt(q, k) + attn_bias       # (m, m); cross-batch -> -1e30
            s = s - jnp.max(s, axis=-1, keepdims=True)
            e = jnp.exp(s)                     # masked entries -> exactly 0
            p = e / jnp.sum(e, axis=-1, keepdims=True)   # exact softmax
            heads.append(_mm(p, v))            # (m, dh)
        attn = jnp.concatenate(heads, axis=-1)  # (m, D)
        attn = _mm(attn, w_out)[:, 0:d] + b_out

        x = _layer_norm(x + attn, g1, be1)

        # ---- feed-forward ---------------------------------------------------
        h1 = jnp.maximum(_mm(x, w_ff1) + b_ff1, 0.0)        # (m, 128)
        ffo = _mm(h1[:, 0:ff], w_ff2)[:, 0:d] + b_ff2       # (m, D)
        x = _layer_norm(x + ffo, g2, be2)

    out_ref[...] = x


def transformer_encoder(x, layers):
    B, T, D = x.shape
    assert D == D_MODEL
    w_slab, v_slab = pack_weights(layers)
    L = w_slab.shape[0]

    G = 2 if _want_core_split(B, T) else 1
    Bc = B // G
    M, Mc = B * T, (B // G) * T

    x2d = x.reshape(M, D)                       # free at the XLA level
    attn_bias = _block_diag_bias(Bc, T)         # (Mc, Mc), same for every chunk

    out2d = pl.pallas_call(
        encoder_stack_kernel,
        out_shape=jax.ShapeDtypeStruct((M, D), jnp.float32),
        grid=(G,),
        in_specs=[
            pl.BlockSpec((Mc, D), lambda g: (g, 0)),
            pl.BlockSpec((Mc, Mc), lambda g: (0, 0)),
            pl.BlockSpec((L, W_ROWS, LANES), lambda g: (0, 0, 0)),
            pl.BlockSpec((L, 8, LANES), lambda g: (0, 0, 0)),
        ],
        out_specs=pl.BlockSpec((Mc, D), lambda g: (g, 0)),
        compiler_params=pltpu.CompilerParams(
            dimension_semantics=("parallel",)),
    )(x2d, attn_bias, w_slab, v_slab)
    return out2d.reshape(B, T, D)


# ---------------------------------------------------------------------------
# pure-JAX reference (exact PyTorch TransformerEncoderLayer math, eval mode)
# ---------------------------------------------------------------------------
def transformer_encoder_ref(x, layers):
    d, dh = D_MODEL, D_MODEL // N_HEADS

    def layer_fn(xb, p):          # xb: (T, D)
        qkv = xb @ p["in_w"].T + p["in_b"]
        q, k, v = qkv[:, :d], qkv[:, d:2 * d], qkv[:, 2 * d:]
        heads = []
        for h in range(N_HEADS):
            sl = slice(h * dh, (h + 1) * dh)
            s = (q[:, sl] @ k[:, sl].T) / math.sqrt(dh)
            a = jax.nn.softmax(s, axis=-1)
            heads.append(a @ v[:, sl])
        attn = jnp.concatenate(heads, -1) @ p["out_w"].T + p["out_b"]
        xb = _layer_norm(xb + attn, p["n1_g"], p["n1_b"])
        h1 = jnp.maximum(xb @ p["lin1_w"].T + p["lin1_b"], 0.0)
        ffo = h1 @ p["lin2_w"].T + p["lin2_b"]
        return _layer_norm(xb + ffo, p["n2_g"], p["n2_b"])

    out = x
    for p in layers:
        out = jax.vmap(lambda xb: layer_fn(xb, p))(out)
    return out


# ---------------------------------------------------------------------------
# deterministic synthetic params (PyTorch (out_features, in_features) layout)
# ---------------------------------------------------------------------------
def init_params(key, d_model, ff_dim, n_layers):
    def uniform(k, shape, fan_in):
        bound = 1.0 / math.sqrt(fan_in)
        return jax.random.uniform(k, shape, jnp.float32, -bound, bound)

    layers = []
    for l in range(n_layers):
        ks = jax.random.split(jax.random.fold_in(key, l), 8)
        layers.append({
            "in_w": uniform(ks[0], (3 * d_model, d_model), d_model),
            "in_b": uniform(ks[1], (3 * d_model,), d_model),
            "out_w": uniform(ks[2], (d_model, d_model), d_model),
            "out_b": uniform(ks[3], (d_model,), d_model),
            "lin1_w": uniform(ks[4], (ff_dim, d_model), d_model),
            "lin1_b": uniform(ks[5], (ff_dim,), d_model),
            "lin2_w": uniform(ks[6], (d_model, ff_dim), ff_dim),
            "lin2_b": uniform(ks[7], (d_model,), ff_dim),
            "n1_g": jnp.ones((d_model,), jnp.float32),
            "n1_b": jnp.zeros((d_model,), jnp.float32),
            "n2_g": jnp.ones((d_model,), jnp.float32),
            "n2_b": jnp.zeros((d_model,), jnp.float32),
        })
    return layers


if __name__ == "__main__":
    key = jax.random.PRNGKey(0)
    B, T = 2, 8  # T kept a multiple of 8 (sublane-aligned)
    kx, kp = jax.random.split(key)
    x = jax.random.normal(kx, (B, T, D_MODEL), dtype=jnp.float32)
    params = init_params(kp, D_MODEL, FF_DIM, N_LAYERS)

    out = jax.block_until_ready(transformer_encoder(x, params))

    ref = transformer_encoder_ref(x, params)
    assert out.shape == (B, T, D_MODEL)
    assert jnp.allclose(out, ref, atol=2e-3, rtol=2e-3), "mismatch vs JAX reference"

    print("KERNEL_OK")
</pallas_src>

<mosaic_0001>
module attributes {stable_mosaic.version = 11 : i64} {
  func.func @encoder_stack_kernel(%arg0: i32, %arg1: memref<16x32xf32, #tpu.memory_space<vmem>>, %arg2: memref<16x16xf32, #tpu.memory_space<vmem>>, %arg3: memref<4x160x128xf32, #tpu.memory_space<vmem>>, %arg4: memref<4x8x128xf32, #tpu.memory_space<vmem>>, %arg5: memref<16x32xf32, #tpu.memory_space<vmem>>) attributes {dimension_semantics = [#tpu.dimension_semantics<parallel>], iteration_bounds = array<i64: 1>, scalar_prefetch = 0 : i64, scratch_operands = 0 : i64, tpu.core_type = #tpu.core_type<tc>, window_params = [{transform_indices = @transform_0, window_bounds = array<i64: 16, 32>}, {pipeline_mode = #tpu.pipeline_mode<synchronous>, transform_indices = @transform_1, window_bounds = array<i64: 16, 16>}, {pipeline_mode = #tpu.pipeline_mode<synchronous>, transform_indices = @transform_2, window_bounds = array<i64: 4, 160, 128>}, {pipeline_mode = #tpu.pipeline_mode<synchronous>, transform_indices = @transform_3, window_bounds = array<i64: 4, 8, 128>}, {transform_indices = @transform_4, window_bounds = array<i64: 16, 32>}]} {
    %c0 = arith.constant 0 : index
    %c0_0 = arith.constant 0 : index
    %0 = vector.load %arg2[%c0, %c0_0] : memref<16x16xf32, #tpu.memory_space<vmem>>, vector<16x16xf32>
    %c0_1 = arith.constant 0 : index
    %c0_2 = arith.constant 0 : index
    %1 = vector.load %arg1[%c0_1, %c0_2] : memref<16x32xf32, #tpu.memory_space<vmem>>, vector<16x32xf32>
    %c0_3 = arith.constant 0 : index
    %c0_4 = arith.constant 0 : index
    %c0_5 = arith.constant 0 : index
    %2 = vector.load %arg3[%c0_3, %c0_4, %c0_5] : memref<4x160x128xf32, #tpu.memory_space<vmem>>, vector<1x32x128xf32>
    %3 = vector.shape_cast %2 : vector<1x32x128xf32> to vector<32x128xf32>
    %c0_6 = arith.constant 0 : index
    %c32 = arith.constant 32 : index
    %c0_7 = arith.constant 0 : index
    %4 = vector.load %arg3[%c0_6, %c32, %c0_7] : memref<4x160x128xf32, #tpu.memory_space<vmem>>, vector<1x32x128xf32>
    %5 = vector.shape_cast %4 : vector<1x32x128xf32> to vector<32x128xf32>
    %c0_8 = arith.constant 0 : index
    %c64 = arith.constant 64 : index
    %c0_9 = arith.constant 0 : index
    %6 = vector.load %arg3[%c0_8, %c64, %c0_9] : memref<4x160x128xf32, #tpu.memory_space<vmem>>, vector<1x32x128xf32>
    %7 = vector.shape_cast %6 : vector<1x32x128xf32> to vector<32x128xf32>
    %c0_10 = arith.constant 0 : index
    %c96 = arith.constant 96 : index
    %c0_11 = arith.constant 0 : index
    %8 = vector.load %arg3[%c0_10, %c96, %c0_11] : memref<4x160x128xf32, #tpu.memory_space<vmem>>, vector<1x64x128xf32>
    %9 = vector.shape_cast %8 : vector<1x64x128xf32> to vector<64x128xf32>
    %c0_12 = arith.constant 0 : index
    %c0_13 = arith.constant 0 : index
    %c0_14 = arith.constant 0 : index
    %10 = vector.load %arg4[%c0_12, %c0_13, %c0_14] : memref<4x8x128xf32, #tpu.memory_space<vmem>>, vector<1x1x128xf32>
    %11 = vector.shape_cast %10 : vector<1x1x128xf32> to vector<1x128xf32>
    %c0_15 = arith.constant 0 : index
    %c1 = arith.constant 1 : index
    %c0_16 = arith.constant 0 : index
    %12 = vector.load %arg4[%c0_15, %c1, %c0_16] : memref<4x8x128xf32, #tpu.memory_space<vmem>>, vector<1x1x32xf32>
    %13 = vector.shape_cast %12 : vector<1x1x32xf32> to vector<1x32xf32>
    %c0_17 = arith.constant 0 : index
    %c2 = arith.constant 2 : index
    %c0_18 = arith.constant 0 : index
    %14 = vector.load %arg4[%c0_17, %c2, %c0_18] : memref<4x8x128xf32, #tpu.memory_space<vmem>>, vector<1x1x128xf32>
    %15 = vector.shape_cast %14 : vector<1x1x128xf32> to vector<1x128xf32>
    %c0_19 = arith.constant 0 : index
    %c3 = arith.constant 3 : index
    %c0_20 = arith.constant 0 : index
    %16 = vector.load %arg4[%c0_19, %c3, %c0_20] : memref<4x8x128xf32, #tpu.memory_space<vmem>>, vector<1x1x32xf32>
    %17 = vector.shape_cast %16 : vector<1x1x32xf32> to vector<1x32xf32>
    %c0_21 = arith.constant 0 : index
    %c4 = arith.constant 4 : index
    %c0_22 = arith.constant 0 : index
    %18 = vector.load %arg4[%c0_21, %c4, %c0_22] : memref<4x8x128xf32, #tpu.memory_space<vmem>>, vector<1x1x32xf32>
    %19 = vector.shape_cast %18 : vector<1x1x32xf32> to vector<1x32xf32>
    %c0_23 = arith.constant 0 : index
    %c5 = arith.constant 5 : index
    %c0_24 = arith.constant 0 : index
    %20 = vector.load %arg4[%c0_23, %c5, %c0_24] : memref<4x8x128xf32, #tpu.memory_space<vmem>>, vector<1x1x32xf32>
    %21 = vector.shape_cast %20 : vector<1x1x32xf32> to vector<1x32xf32>
    %c0_25 = arith.constant 0 : index
    %c6 = arith.constant 6 : index
    %c0_26 = arith.constant 0 : index
    %22 = vector.load %arg4[%c0_25, %c6, %c0_26] : memref<4x8x128xf32, #tpu.memory_space<vmem>>, vector<1x1x32xf32>
    %23 = vector.shape_cast %22 : vector<1x1x32xf32> to vector<1x32xf32>
    %c0_27 = arith.constant 0 : index
    %c7 = arith.constant 7 : index
    %c0_28 = arith.constant 0 : index
    %24 = vector.load %arg4[%c0_27, %c7, %c0_28] : memref<4x8x128xf32, #tpu.memory_space<vmem>>, vector<1x1x32xf32>
    %25 = vector.shape_cast %24 : vector<1x1x32xf32> to vector<1x32xf32>
    %cst = arith.constant dense<0.000000e+00> : vector<16x128xf32>
    %26 = tpu.matmul %1, %3, %cst {dimension_numbers = #tpu.dot_dimension_numbers<[1], [0], [0], [1], [0, 0, 1, 1], [], []>} : vector<16x32xf32>, vector<32x128xf32>, vector<16x128xf32> -> vector<16x128xf32>
    %27 = vector.broadcast %11 : vector<1x128xf32> to vector<16x128xf32>
    %28 = arith.addf %26, %27 : vector<16x128xf32>
    %29 = vector.extract_strided_slice %28 {offsets = [0, 0], sizes = [16, 16], strides = [1, 1]} : vector<16x128xf32> to vector<16x16xf32>
    %30 = vector.extract_strided_slice %28 {offsets = [0, 32], sizes = [16, 16], strides = [1, 1]} : vector<16x128xf32> to vector<16x16xf32>
    %31 = vector.extract_strided_slice %28 {offsets = [0, 64], sizes = [16, 16], strides = [1, 1]} : vector<16x128xf32> to vector<16x16xf32>
    %cst_29 = arith.constant dense<0.000000e+00> : vector<16x16xf32>
    %32 = tpu.matmul %29, %30, %cst_29 {dimension_numbers = #tpu.dot_dimension_numbers<[1], [1], [0], [0], [0, 0, 1, 0], [], []>} : vector<16x16xf32>, vector<16x16xf32>, vector<16x16xf32> -> vector<16x16xf32>
    %33 = arith.addf %32, %0 : vector<16x16xf32>
    %cst_30 = arith.constant dense<0xFF800000> : vector<16xf32>
    %34 = vector.multi_reduction <maximumf>, %33, %cst_30 [1] : vector<16x16xf32> to vector<16xf32>
    %35 = vector.shape_cast %34 : vector<16xf32> to vector<16x1xf32>
    %36 = vector.broadcast %35 : vector<16x1xf32> to vector<16x16xf32>
    %37 = arith.subf %33, %36 : vector<16x16xf32>
    %38 = math.exp %37 : vector<16x16xf32>
    %cst_31 = arith.constant dense<0.000000e+00> : vector<16xf32>
    %39 = vector.multi_reduction <add>, %38, %cst_31 [1] : vector<16x16xf32> to vector<16xf32>
    %40 = vector.shape_cast %39 : vector<16xf32> to vector<16x1xf32>
    %41 = vector.broadcast %40 : vector<16x1xf32> to vector<16x16xf32>
    %42 = arith.divf %38, %41 : vector<16x16xf32>
    %cst_32 = arith.constant dense<0.000000e+00> : vector<16x16xf32>
    %43 = tpu.matmul %42, %31, %cst_32 {dimension_numbers = #tpu.dot_dimension_numbers<[1], [0], [0], [1], [0, 0, 1, 1], [], []>} : vector<16x16xf32>, vector<16x16xf32>, vector<16x16xf32> -> vector<16x16xf32>
    %44 = vector.extract_strided_slice %28 {offsets = [0, 16], sizes = [16, 16], strides = [1, 1]} : vector<16x128xf32> to vector<16x16xf32>
    %45 = vector.extract_strided_slice %28 {offsets = [0, 48], sizes = [16, 16], strides = [1, 1]} : vector<16x128xf32> to vector<16x16xf32>
    %46 = vector.extract_strided_slice %28 {offsets = [0, 80], sizes = [16, 16], strides = [1, 1]} : vector<16x128xf32> to vector<16x16xf32>
    %cst_33 = arith.constant dense<0.000000e+00> : vector<16x16xf32>
    %47 = tpu.matmul %44, %45, %cst_33 {dimension_numbers = #tpu.dot_dimension_numbers<[1], [1], [0], [0], [0, 0, 1, 0], [], []>} : vector<16x16xf32>, vector<16x16xf32>, vector<16x16xf32> -> vector<16x16xf32>
    %48 = arith.addf %47, %0 : vector<16x16xf32>
    %cst_34 = arith.constant dense<0xFF800000> : vector<16xf32>
    %49 = vector.multi_reduction <maximumf>, %48, %cst_34 [1] : vector<16x16xf32> to vector<16xf32>
    %50 = vector.shape_cast %49 : vector<16xf32> to vector<16x1xf32>
    %51 = vector.broadcast %50 : vector<16x1xf32> to vector<16x16xf32>
    %52 = arith.subf %48, %51 : vector<16x16xf32>
    %53 = math.exp %52 : vector<16x16xf32>
    %cst_35 = arith.constant dense<0.000000e+00> : vector<16xf32>
    %54 = vector.multi_reduction <add>, %53, %cst_35 [1] : vector<16x16xf32> to vector<16xf32>
    %55 = vector.shape_cast %54 : vector<16xf32> to vector<16x1xf32>
    %56 = vector.broadcast %55 : vector<16x1xf32> to vector<16x16xf32>
    %57 = arith.divf %53, %56 : vector<16x16xf32>
    %cst_36 = arith.constant dense<0.000000e+00> : vector<16x16xf32>
    %58 = tpu.matmul %57, %46, %cst_36 {dimension_numbers = #tpu.dot_dimension_numbers<[1], [0], [0], [1], [0, 0, 1, 1], [], []>} : vector<16x16xf32>, vector<16x16xf32>, vector<16x16xf32> -> vector<16x16xf32>
    %59 = tpu.concatenate %43, %58 in 1 : vector<16x16xf32>, vector<16x16xf32> -> vector<16x32xf32>
    %cst_37 = arith.constant dense<0.000000e+00> : vector<16x128xf32>
    %60 = tpu.matmul %59, %5, %cst_37 {dimension_numbers = #tpu.dot_dimension_numbers<[1], [0], [0], [1], [0, 0, 1, 1], [], []>} : vector<16x32xf32>, vector<32x128xf32>, vector<16x128xf32> -> vector<16x128xf32>
    %61 = vector.extract_strided_slice %60 {offsets = [0, 0], sizes = [16, 32], strides = [1, 1]} : vector<16x128xf32> to vector<16x32xf32>
    %62 = vector.broadcast %13 : vector<1x32xf32> to vector<16x32xf32>
    %63 = arith.addf %61, %62 : vector<16x32xf32>
    %64 = arith.addf %1, %63 : vector<16x32xf32>
    %cst_38 = arith.constant dense<0.000000e+00> : vector<16xf32>
    %65 = vector.multi_reduction <add>, %64, %cst_38 [1] : vector<16x32xf32> to vector<16xf32>
    %66 = vector.shape_cast %65 : vector<16xf32> to vector<16x1xf32>
    %cst_39 = arith.constant 3.200000e+01 : f32
    %67 = vector.broadcast %cst_39 : f32 to vector<16x1xf32>
    %68 = arith.divf %66, %67 : vector<16x1xf32>
    %69 = vector.broadcast %68 : vector<16x1xf32> to vector<16x32xf32>
    %70 = arith.subf %64, %69 : vector<16x32xf32>
    %71 = arith.mulf %70, %70 : vector<16x32xf32>
    %cst_40 = arith.constant dense<0.000000e+00> : vector<16xf32>
    %72 = vector.multi_reduction <add>, %71, %cst_40 [1] : vector<16x32xf32> to vector<16xf32>
    %73 = vector.shape_cast %72 : vector<16xf32> to vector<16x1xf32>
    %cst_41 = arith.constant 3.200000e+01 : f32
    %74 = vector.broadcast %cst_41 : f32 to vector<16x1xf32>
    %75 = arith.divf %73, %74 : vector<16x1xf32>
    %76 = vector.broadcast %68 : vector<16x1xf32> to vector<16x32xf32>
    %77 = arith.subf %64, %76 : vector<16x32xf32>
    %cst_42 = arith.constant 9.99999974E-6 : f32
    %78 = vector.broadcast %cst_42 : f32 to vector<16x1xf32>
    %79 = arith.addf %75, %78 : vector<16x1xf32>
    %80 = math.rsqrt %79 : vector<16x1xf32>
    %81 = vector.broadcast %80 : vector<16x1xf32> to vector<16x32xf32>
    %82 = arith.mulf %77, %81 : vector<16x32xf32>
    %83 = vector.broadcast %19 : vector<1x32xf32> to vector<16x32xf32>
    %84 = arith.mulf %82, %83 : vector<16x32xf32>
    %85 = vector.broadcast %21 : vector<1x32xf32> to vector<16x32xf32>
    %86 = arith.addf %84, %85 : vector<16x32xf32>
    %cst_43 = arith.constant dense<0.000000e+00> : vector<16x128xf32>
    %87 = tpu.matmul %86, %7, %cst_43 {dimension_numbers = #tpu.dot_dimension_numbers<[1], [0], [0], [1], [0, 0, 1, 1], [], []>} : vector<16x32xf32>, vector<32x128xf32>, vector<16x128xf32> -> vector<16x128xf32>
    %88 = vector.broadcast %15 : vector<1x128xf32> to vector<16x128xf32>
    %89 = arith.addf %87, %88 : vector<16x128xf32>
    %cst_44 = arith.constant 0.000000e+00 : f32
    %90 = vector.broadcast %cst_44 : f32 to vector<16x128xf32>
    %91 = arith.maximumf %89, %90 : vector<16x128xf32>
    %92 = vector.extract_strided_slice %91 {offsets = [0, 0], sizes = [16, 64], strides = [1, 1]} : vector<16x128xf32> to vector<16x64xf32>
    %cst_45 = arith.constant dense<0.000000e+00> : vector<16x128xf32>
    %93 = tpu.matmul %92, %9, %cst_45 {dimension_numbers = #tpu.dot_dimension_numbers<[1], [0], [0], [1], [0, 0, 1, 1], [], []>} : vector<16x64xf32>, vector<64x128xf32>, vector<16x128xf32> -> vector<16x128xf32>
    %94 = vector.extract_strided_slice %93 {offsets = [0, 0], sizes = [16, 32], strides = [1, 1]} : vector<16x128xf32> to vector<16x32xf32>
    %95 = vector.broadcast %17 : vector<1x32xf32> to vector<16x32xf32>
    %96 = arith.addf %94, %95 : vector<16x32xf32>
    %97 = arith.addf %86, %96 : vector<16x32xf32>
    %cst_46 = arith.constant dense<0.000000e+00> : vector<16xf32>
    %98 = vector.multi_reduction <add>, %97, %cst_46 [1] : vector<16x32xf32> to vector<16xf32>
    %99 = vector.shape_cast %98 : vector<16xf32> to vector<16x1xf32>
    %cst_47 = arith.constant 3.200000e+01 : f32
    %100 = vector.broadcast %cst_47 : f32 to vector<16x1xf32>
    %101 = arith.divf %99, %100 : vector<16x1xf32>
    %102 = vector.broadcast %101 : vector<16x1xf32> to vector<16x32xf32>
    %103 = arith.subf %97, %102 : vector<16x32xf32>
    %104 = arith.mulf %103, %103 : vector<16x32xf32>
    %cst_48 = arith.constant dense<0.000000e+00> : vector<16xf32>
    %105 = vector.multi_reduction <add>, %104, %cst_48 [1] : vector<16x32xf32> to vector<16xf32>
    %106 = vector.shape_cast %105 : vector<16xf32> to vector<16x1xf32>
    %cst_49 = arith.constant 3.200000e+01 : f32
    %107 = vector.broadcast %cst_49 : f32 to vector<16x1xf32>
    %108 = arith.divf %106, %107 : vector<16x1xf32>
    %109 = vector.broadcast %101 : vector<16x1xf32> to vector<16x32xf32>
    %110 = arith.subf %97, %109 : vector<16x32xf32>
    %cst_50 = arith.constant 9.99999974E-6 : f32
    %111 = vector.broadcast %cst_50 : f32 to vector<16x1xf32>
    %112 = arith.addf %108, %111 : vector<16x1xf32>
    %113 = math.rsqrt %112 : vector<16x1xf32>
    %114 = vector.broadcast %113 : vector<16x1xf32> to vector<16x32xf32>
    %115 = arith.mulf %110, %114 : vector<16x32xf32>
    %116 = vector.broadcast %23 : vector<1x32xf32> to vector<16x32xf32>
    %117 = arith.mulf %115, %116 : vector<16x32xf32>
    %118 = vector.broadcast %25 : vector<1x32xf32> to vector<16x32xf32>
    %119 = arith.addf %117, %118 : vector<16x32xf32>
    %c1_51 = arith.constant 1 : index
    %c0_52 = arith.constant 0 : index
    %c0_53 = arith.constant 0 : index
    %120 = vector.load %arg3[%c1_51, %c0_52, %c0_53] : memref<4x160x128xf32, #tpu.memory_space<vmem>>, vector<1x32x128xf32>
    %121 = vector.shape_cast %120 : vector<1x32x128xf32> to vector<32x128xf32>
    %c1_54 = arith.constant 1 : index
    %c32_55 = arith.constant 32 : index
    %c0_56 = arith.constant 0 : index
    %122 = vector.load %arg3[%c1_54, %c32_55, %c0_56] : memref<4x160x128xf32, #tpu.memory_space<vmem>>, vector<1x32x128xf32>
    %123 = vector.shape_cast %122 : vector<1x32x128xf32> to vector<32x128xf32>
    %c1_57 = arith.constant 1 : index
    %c64_58 = arith.constant 64 : index
    %c0_59 = arith.constant 0 : index
    %124 = vector.load %arg3[%c1_57, %c64_58, %c0_59] : memref<4x160x128xf32, #tpu.memory_space<vmem>>, vector<1x32x128xf32>
    %125 = vector.shape_cast %124 : vector<1x32x128xf32> to vector<32x128xf32>
    %c1_60 = arith.constant 1 : index
    %c96_61 = arith.constant 96 : index
    %c0_62 = arith.constant 0 : index
    %126 = vector.load %arg3[%c1_60, %c96_61, %c0_62] : memref<4x160x128xf32, #tpu.memory_space<vmem>>, vector<1x64x128xf32>
    %127 = vector.shape_cast %126 : vector<1x64x128xf32> to vector<64x128xf32>
    %c1_63 = arith.constant 1 : index
    %c0_64 = arith.constant 0 : index
    %c0_65 = arith.constant 0 : index
    %128 = vector.load %arg4[%c1_63, %c0_64, %c0_65] : memref<4x8x128xf32, #tpu.memory_space<vmem>>, vector<1x1x128xf32>
    %129 = vector.shape_cast %128 : vector<1x1x128xf32> to vector<1x128xf32>
    %c1_66 = arith.constant 1 : index
    %c1_67 = arith.constant 1 : index
    %c0_68 = arith.constant 0 : index
    %130 = vector.load %arg4[%c1_66, %c1_67, %c0_68] : memref<4x8x128xf32, #tpu.memory_space<vmem>>, vector<1x1x32xf32>
    %131 = vector.shape_cast %130 : vector<1x1x32xf32> to vector<1x32xf32>
    %c1_69 = arith.constant 1 : index
    %c2_70 = arith.constant 2 : index
    %c0_71 = arith.constant 0 : index
    %132 = vector.load %arg4[%c1_69, %c2_70, %c0_71] : memref<4x8x128xf32, #tpu.memory_space<vmem>>, vector<1x1x128xf32>
    %133 = vector.shape_cast %132 : vector<1x1x128xf32> to vector<1x128xf32>
    %c1_72 = arith.constant 1 : index
    %c3_73 = arith.constant 3 : index
    %c0_74 = arith.constant 0 : index
    %134 = vector.load %arg4[%c1_72, %c3_73, %c0_74] : memref<4x8x128xf32, #tpu.memory_space<vmem>>, vector<1x1x32xf32>
    %135 = vector.shape_cast %134 : vector<1x1x32xf32> to vector<1x32xf32>
    %c1_75 = arith.constant 1 : index
    %c4_76 = arith.constant 4 : index
    %c0_77 = arith.constant 0 : index
    %136 = vector.load %arg4[%c1_75, %c4_76, %c0_77] : memref<4x8x128xf32, #tpu.memory_space<vmem>>, vector<1x1x32xf32>
    %137 = vector.shape_cast %136 : vector<1x1x32xf32> to vector<1x32xf32>
    %c1_78 = arith.constant 1 : index
    %c5_79 = arith.constant 5 : index
    %c0_80 = arith.constant 0 : index
    %138 = vector.load %arg4[%c1_78, %c5_79, %c0_80] : memref<4x8x128xf32, #tpu.memory_space<vmem>>, vector<1x1x32xf32>
    %139 = vector.shape_cast %138 : vector<1x1x32xf32> to vector<1x32xf32>
    %c1_81 = arith.constant 1 : index
    %c6_82 = arith.constant 6 : index
    %c0_83 = arith.constant 0 : index
    %140 = vector.load %arg4[%c1_81, %c6_82, %c0_83] : memref<4x8x128xf32, #tpu.memory_space<vmem>>, vector<1x1x32xf32>
    %141 = vector.shape_cast %140 : vector<1x1x32xf32> to vector<1x32xf32>
    %c1_84 = arith.constant 1 : index
    %c7_85 = arith.constant 7 : index
    %c0_86 = arith.constant 0 : index
    %142 = vector.load %arg4[%c1_84, %c7_85, %c0_86] : memref<4x8x128xf32, #tpu.memory_space<vmem>>, vector<1x1x32xf32>
    %143 = vector.shape_cast %142 : vector<1x1x32xf32> to vector<1x32xf32>
    %cst_87 = arith.constant dense<0.000000e+00> : vector<16x128xf32>
    %144 = tpu.matmul %119, %121, %cst_87 {dimension_numbers = #tpu.dot_dimension_numbers<[1], [0], [0], [1], [0, 0, 1, 1], [], []>} : vector<16x32xf32>, vector<32x128xf32>, vector<16x128xf32> -> vector<16x128xf32>
    %145 = vector.broadcast %129 : vector<1x128xf32> to vector<16x128xf32>
    %146 = arith.addf %144, %145 : vector<16x128xf32>
    %147 = vector.extract_strided_slice %146 {offsets = [0, 0], sizes = [16, 16], strides = [1, 1]} : vector<16x128xf32> to vector<16x16xf32>
    %148 = vector.extract_strided_slice %146 {offsets = [0, 32], sizes = [16, 16], strides = [1, 1]} : vector<16x128xf32> to vector<16x16xf32>
    %149 = vector.extract_strided_slice %146 {offsets = [0, 64], sizes = [16, 16], strides = [1, 1]} : vector<16x128xf32> to vector<16x16xf32>
    %cst_88 = arith.constant dense<0.000000e+00> : vector<16x16xf32>
    %150 = tpu.matmul %147, %148, %cst_88 {dimension_numbers = #tpu.dot_dimension_numbers<[1], [1], [0], [0], [0, 0, 1, 0], [], []>} : vector<16x16xf32>, vector<16x16xf32>, vector<16x16xf32> -> vector<16x16xf32>
    %151 = arith.addf %150, %0 : vector<16x16xf32>
    %cst_89 = arith.constant dense<0xFF800000> : vector<16xf32>
    %152 = vector.multi_reduction <maximumf>, %151, %cst_89 [1] : vector<16x16xf32> to vector<16xf32>
    %153 = vector.shape_cast %152 : vector<16xf32> to vector<16x1xf32>
    %154 = vector.broadcast %153 : vector<16x1xf32> to vector<16x16xf32>
    %155 = arith.subf %151, %154 : vector<16x16xf32>
    %156 = math.exp %155 : vector<16x16xf32>
    %cst_90 = arith.constant dense<0.000000e+00> : vector<16xf32>
    %157 = vector.multi_reduction <add>, %156, %cst_90 [1] : vector<16x16xf32> to vector<16xf32>
    %158 = vector.shape_cast %157 : vector<16xf32> to vector<16x1xf32>
    %159 = vector.broadcast %158 : vector<16x1xf32> to vector<16x16xf32>
    %160 = arith.divf %156, %159 : vector<16x16xf32>
    %cst_91 = arith.constant dense<0.000000e+00> : vector<16x16xf32>
    %161 = tpu.matmul %160, %149, %cst_91 {dimension_numbers = #tpu.dot_dimension_numbers<[1], [0], [0], [1], [0, 0, 1, 1], [], []>} : vector<16x16xf32>, vector<16x16xf32>, vector<16x16xf32> -> vector<16x16xf32>
    %162 = vector.extract_strided_slice %146 {offsets = [0, 16], sizes = [16, 16], strides = [1, 1]} : vector<16x128xf32> to vector<16x16xf32>
    %163 = vector.extract_strided_slice %146 {offsets = [0, 48], sizes = [16, 16], strides = [1, 1]} : vector<16x128xf32> to vector<16x16xf32>
    %164 = vector.extract_strided_slice %146 {offsets = [0, 80], sizes = [16, 16], strides = [1, 1]} : vector<16x128xf32> to vector<16x16xf32>
    %cst_92 = arith.constant dense<0.000000e+00> : vector<16x16xf32>
    %165 = tpu.matmul %162, %163, %cst_92 {dimension_numbers = #tpu.dot_dimension_numbers<[1], [1], [0], [0], [0, 0, 1, 0], [], []>} : vector<16x16xf32>, vector<16x16xf32>, vector<16x16xf32> -> vector<16x16xf32>
    %166 = arith.addf %165, %0 : vector<16x16xf32>
    %cst_93 = arith.constant dense<0xFF800000> : vector<16xf32>
    %167 = vector.multi_reduction <maximumf>, %166, %cst_93 [1] : vector<16x16xf32> to vector<16xf32>
    %168 = vector.shape_cast %167 : vector<16xf32> to vector<16x1xf32>
    %169 = vector.broadcast %168 : vector<16x1xf32> to vector<16x16xf32>
    %170 = arith.subf %166, %169 : vector<16x16xf32>
    %171 = math.exp %170 : vector<16x16xf32>
    %cst_94 = arith.constant dense<0.000000e+00> : vector<16xf32>
    %172 = vector.multi_reduction <add>, %171, %cst_94 [1] : vector<16x16xf32> to vector<16xf32>
    %173 = vector.shape_cast %172 : vector<16xf32> to vector<16x1xf32>
    %174 = vector.broadcast %173 : vector<16x1xf32> to vector<16x16xf32>
    %175 = arith.divf %171, %174 : vector<16x16xf32>
    %cst_95 = arith.constant dense<0.000000e+00> : vector<16x16xf32>
    %176 = tpu.matmul %175, %164, %cst_95 {dimension_numbers = #tpu.dot_dimension_numbers<[1], [0], [0], [1], [0, 0, 1, 1], [], []>} : vector<16x16xf32>, vector<16x16xf32>, vector<16x16xf32> -> vector<16x16xf32>
    %177 = tpu.concatenate %161, %176 in 1 : vector<16x16xf32>, vector<16x16xf32> -> vector<16x32xf32>
    %cst_96 = arith.constant dense<0.000000e+00> : vector<16x128xf32>
    %178 = tpu.matmul %177, %123, %cst_96 {dimension_numbers = #tpu.dot_dimension_numbers<[1], [0], [0], [1], [0, 0, 1, 1], [], []>} : vector<16x32xf32>, vector<32x128xf32>, vector<16x128xf32> -> vector<16x128xf32>
    %179 = vector.extract_strided_slice %178 {offsets = [0, 0], sizes = [16, 32], strides = [1, 1]} : vector<16x128xf32> to vector<16x32xf32>
    %180 = vector.broadcast %131 : vector<1x32xf32> to vector<16x32xf32>
    %181 = arith.addf %179, %180 : vector<16x32xf32>
    %182 = arith.addf %119, %181 : vector<16x32xf32>
    %cst_97 = arith.constant dense<0.000000e+00> : vector<16xf32>
    %183 = vector.multi_reduction <add>, %182, %cst_97 [1] : vector<16x32xf32> to vector<16xf32>
    %184 = vector.shape_cast %183 : vector<16xf32> to vector<16x1xf32>
    %cst_98 = arith.constant 3.200000e+01 : f32
    %185 = vector.broadcast %cst_98 : f32 to vector<16x1xf32>
    %186 = arith.divf %184, %185 : vector<16x1xf32>
    %187 = vector.broadcast %186 : vector<16x1xf32> to vector<16x32xf32>
    %188 = arith.subf %182, %187 : vector<16x32xf32>
    %189 = arith.mulf %188, %188 : vector<16x32xf32>
    %cst_99 = arith.constant dense<0.000000e+00> : vector<16xf32>
    %190 = vector.multi_reduction <add>, %189, %cst_99 [1] : vector<16x32xf32> to vector<16xf32>
    %191 = vector.shape_cast %190 : vector<16xf32> to vector<16x1xf32>
    %cst_100 = arith.constant 3.200000e+01 : f32
    %192 = vector.broadcast %cst_100 : f32 to vector<16x1xf32>
    %193 = arith.divf %191, %192 : vector<16x1xf32>
    %194 = vector.broadcast %186 : vector<16x1xf32> to vector<16x32xf32>
    %195 = arith.subf %182, %194 : vector<16x32xf32>
    %cst_101 = arith.constant 9.99999974E-6 : f32
    %196 = vector.broadcast %cst_101 : f32 to vector<16x1xf32>
    %197 = arith.addf %193, %196 : vector<16x1xf32>
    %198 = math.rsqrt %197 : vector<16x1xf32>
    %199 = vector.broadcast %198 : vector<16x1xf32> to vector<16x32xf32>
    %200 = arith.mulf %195, %199 : vector<16x32xf32>
    %201 = vector.broadcast %137 : vector<1x32xf32> to vector<16x32xf32>
    %202 = arith.mulf %200, %201 : vector<16x32xf32>
    %203 = vector.broadcast %139 : vector<1x32xf32> to vector<16x32xf32>
    %204 = arith.addf %202, %203 : vector<16x32xf32>
    %cst_102 = arith.constant dense<0.000000e+00> : vector<16x128xf32>
    %205 = tpu.matmul %204, %125, %cst_102 {dimension_numbers = #tpu.dot_dimension_numbers<[1], [0], [0], [1], [0, 0, 1, 1], [], []>} : vector<16x32xf32>, vector<32x128xf32>, vector<16x128xf32> -> vector<16x128xf32>
    %206 = vector.broadcast %133 : vector<1x128xf32> to vector<16x128xf32>
    %207 = arith.addf %205, %206 : vector<16x128xf32>
    %cst_103 = arith.constant 0.000000e+00 : f32
    %208 = vector.broadcast %cst_103 : f32 to vector<16x128xf32>
    %209 = arith.maximumf %207, %208 : vector<16x128xf32>
    %210 = vector.extract_strided_slice %209 {offsets = [0, 0], sizes = [16, 64], strides = [1, 1]} : vector<16x128xf32> to vector<16x64xf32>
    %cst_104 = arith.constant dense<0.000000e+00> : vector<16x128xf32>
    %211 = tpu.matmul %210, %127, %cst_104 {dimension_numbers = #tpu.dot_dimension_numbers<[1], [0], [0], [1], [0, 0, 1, 1], [], []>} : vector<16x64xf32>, vector<64x128xf32>, vector<16x128xf32> -> vector<16x128xf32>
    %212 = vector.extract_strided_slice %211 {offsets = [0, 0], sizes = [16, 32], strides = [1, 1]} : vector<16x128xf32> to vector<16x32xf32>
    %213 = vector.broadcast %135 : vector<1x32xf32> to vector<16x32xf32>
    %214 = arith.addf %212, %213 : vector<16x32xf32>
    %215 = arith.addf %204, %214 : vector<16x32xf32>
    %cst_105 = arith.constant dense<0.000000e+00> : vector<16xf32>
    %216 = vector.multi_reduction <add>, %215, %cst_105 [1] : vector<16x32xf32> to vector<16xf32>
    %217 = vector.shape_cast %216 : vector<16xf32> to vector<16x1xf32>
    %cst_106 = arith.constant 3.200000e+01 : f32
    %218 = vector.broadcast %cst_106 : f32 to vector<16x1xf32>
    %219 = arith.divf %217, %218 : vector<16x1xf32>
    %220 = vector.broadcast %219 : vector<16x1xf32> to vector<16x32xf32>
    %221 = arith.subf %215, %220 : vector<16x32xf32>
    %222 = arith.mulf %221, %221 : vector<16x32xf32>
    %cst_107 = arith.constant dense<0.000000e+00> : vector<16xf32>
    %223 = vector.multi_reduction <add>, %222, %cst_107 [1] : vector<16x32xf32> to vector<16xf32>
    %224 = vector.shape_cast %223 : vector<16xf32> to vector<16x1xf32>
    %cst_108 = arith.constant 3.200000e+01 : f32
    %225 = vector.broadcast %cst_108 : f32 to vector<16x1xf32>
    %226 = arith.divf %224, %225 : vector<16x1xf32>
    %227 = vector.broadcast %219 : vector<16x1xf32> to vector<16x32xf32>
    %228 = arith.subf %215, %227 : vector<16x32xf32>
    %cst_109 = arith.constant 9.99999974E-6 : f32
    %229 = vector.broadcast %cst_109 : f32 to vector<16x1xf32>
    %230 = arith.addf %226, %229 : vector<16x1xf32>
    %231 = math.rsqrt %230 : vector<16x1xf32>
    %232 = vector.broadcast %231 : vector<16x1xf32> to vector<16x32xf32>
    %233 = arith.mulf %228, %232 : vector<16x32xf32>
    %234 = vector.broadcast %141 : vector<1x32xf32> to vector<16x32xf32>
    %235 = arith.mulf %233, %234 : vector<16x32xf32>
    %236 = vector.broadcast %143 : vector<1x32xf32> to vector<16x32xf32>
    %237 = arith.addf %235, %236 : vector<16x32xf32>
    %c2_110 = arith.constant 2 : index
    %c0_111 = arith.constant 0 : index
    %c0_112 = arith.constant 0 : index
    %238 = vector.load %arg3[%c2_110, %c0_111, %c0_112] : memref<4x160x128xf32, #tpu.memory_space<vmem>>, vector<1x32x128xf32>
    %239 = vector.shape_cast %238 : vector<1x32x128xf32> to vector<32x128xf32>
    %c2_113 = arith.constant 2 : index
    %c32_114 = arith.constant 32 : index
    %c0_115 = arith.constant 0 : index
    %240 = vector.load %arg3[%c2_113, %c32_114, %c0_115] : memref<4x160x128xf32, #tpu.memory_space<vmem>>, vector<1x32x128xf32>
    %241 = vector.shape_cast %240 : vector<1x32x128xf32> to vector<32x128xf32>
    %c2_116 = arith.constant 2 : index
    %c64_117 = arith.constant 64 : index
    %c0_118 = arith.constant 0 : index
    %242 = vector.load %arg3[%c2_116, %c64_117, %c0_118] : memref<4x160x128xf32, #tpu.memory_space<vmem>>, vector<1x32x128xf32>
    %243 = vector.shape_cast %242 : vector<1x32x128xf32> to vector<32x128xf32>
    %c2_119 = arith.constant 2 : index
    %c96_120 = arith.constant 96 : index
    %c0_121 = arith.constant 0 : index
    %244 = vector.load %arg3[%c2_119, %c96_120, %c0_121] : memref<4x160x128xf32, #tpu.memory_space<vmem>>, vector<1x64x128xf32>
    %245 = vector.shape_cast %244 : vector<1x64x128xf32> to vector<64x128xf32>
    %c2_122 = arith.constant 2 : index
    %c0_123 = arith.constant 0 : index
    %c0_124 = arith.constant 0 : index
    %246 = vector.load %arg4[%c2_122, %c0_123, %c0_124] : memref<4x8x128xf32, #tpu.memory_space<vmem>>, vector<1x1x128xf32>
    %247 = vector.shape_cast %246 : vector<1x1x128xf32> to vector<1x128xf32>
    %c2_125 = arith.constant 2 : index
    %c1_126 = arith.constant 1 : index
    %c0_127 = arith.constant 0 : index
    %248 = vector.load %arg4[%c2_125, %c1_126, %c0_127] : memref<4x8x128xf32, #tpu.memory_space<vmem>>, vector<1x1x32xf32>
    %249 = vector.shape_cast %248 : vector<1x1x32xf32> to vector<1x32xf32>
    %c2_128 = arith.constant 2 : index
    %c2_129 = arith.constant 2 : index
    %c0_130 = arith.constant 0 : index
    %250 = vector.load %arg4[%c2_128, %c2_129, %c0_130] : memref<4x8x128xf32, #tpu.memory_space<vmem>>, vector<1x1x128xf32>
    %251 = vector.shape_cast %250 : vector<1x1x128xf32> to vector<1x128xf32>
    %c2_131 = arith.constant 2 : index
    %c3_132 = arith.constant 3 : index
    %c0_133 = arith.constant 0 : index
    %252 = vector.load %arg4[%c2_131, %c3_132, %c0_133] : memref<4x8x128xf32, #tpu.memory_space<vmem>>, vector<1x1x32xf32>
    %253 = vector.shape_cast %252 : vector<1x1x32xf32> to vector<1x32xf32>
    %c2_134 = arith.constant 2 : index
    %c4_135 = arith.constant 4 : index
    %c0_136 = arith.constant 0 : index
    %254 = vector.load %arg4[%c2_134, %c4_135, %c0_136] : memref<4x8x128xf32, #tpu.memory_space<vmem>>, vector<1x1x32xf32>
    %255 = vector.shape_cast %254 : vector<1x1x32xf32> to vector<1x32xf32>
    %c2_137 = arith.constant 2 : index
    %c5_138 = arith.constant 5 : index
    %c0_139 = arith.constant 0 : index
    %256 = vector.load %arg4[%c2_137, %c5_138, %c0_139] : memref<4x8x128xf32, #tpu.memory_space<vmem>>, vector<1x1x32xf32>
    %257 = vector.shape_cast %256 : vector<1x1x32xf32> to vector<1x32xf32>
    %c2_140 = arith.constant 2 : index
    %c6_141 = arith.constant 6 : index
    %c0_142 = arith.constant 0 : index
    %258 = vector.load %arg4[%c2_140, %c6_141, %c0_142] : memref<4x8x128xf32, #tpu.memory_space<vmem>>, vector<1x1x32xf32>
    %259 = vector.shape_cast %258 : vector<1x1x32xf32> to vector<1x32xf32>
    %c2_143 = arith.constant 2 : index
    %c7_144 = arith.constant 7 : index
    %c0_145 = arith.constant 0 : index
    %260 = vector.load %arg4[%c2_143, %c7_144, %c0_145] : memref<4x8x128xf32, #tpu.memory_space<vmem>>, vector<1x1x32xf32>
    %261 = vector.shape_cast %260 : vector<1x1x32xf32> to vector<1x32xf32>
    %cst_146 = arith.constant dense<0.000000e+00> : vector<16x128xf32>
    %262 = tpu.matmul %237, %239, %cst_146 {dimension_numbers = #tpu.dot_dimension_numbers<[1], [0], [0], [1], [0, 0, 1, 1], [], []>} : vector<16x32xf32>, vector<32x128xf32>, vector<16x128xf32> -> vector<16x128xf32>
    %263 = vector.broadcast %247 : vector<1x128xf32> to vector<16x128xf32>
    %264 = arith.addf %262, %263 : vector<16x128xf32>
    %265 = vector.extract_strided_slice %264 {offsets = [0, 0], sizes = [16, 16], strides = [1, 1]} : vector<16x128xf32> to vector<16x16xf32>
    %266 = vector.extract_strided_slice %264 {offsets = [0, 32], sizes = [16, 16], strides = [1, 1]} : vector<16x128xf32> to vector<16x16xf32>
    %267 = vector.extract_strided_slice %264 {offsets = [0, 64], sizes = [16, 16], strides = [1, 1]} : vector<16x128xf32> to vector<16x16xf32>
    %cst_147 = arith.constant dense<0.000000e+00> : vector<16x16xf32>
    %268 = tpu.matmul %265, %266, %cst_147 {dimension_numbers = #tpu.dot_dimension_numbers<[1], [1], [0], [0], [0, 0, 1, 0], [], []>} : vector<16x16xf32>, vector<16x16xf32>, vector<16x16xf32> -> vector<16x16xf32>
    %269 = arith.addf %268, %0 : vector<16x16xf32>
    %cst_148 = arith.constant dense<0xFF800000> : vector<16xf32>
    %270 = vector.multi_reduction <maximumf>, %269, %cst_148 [1] : vector<16x16xf32> to vector<16xf32>
    %271 = vector.shape_cast %270 : vector<16xf32> to vector<16x1xf32>
    %272 = vector.broadcast %271 : vector<16x1xf32> to vector<16x16xf32>
    %273 = arith.subf %269, %272 : vector<16x16xf32>
    %274 = math.exp %273 : vector<16x16xf32>
    %cst_149 = arith.constant dense<0.000000e+00> : vector<16xf32>
    %275 = vector.multi_reduction <add>, %274, %cst_149 [1] : vector<16x16xf32> to vector<16xf32>
    %276 = vector.shape_cast %275 : vector<16xf32> to vector<16x1xf32>
    %277 = vector.broadcast %276 : vector<16x1xf32> to vector<16x16xf32>
    %278 = arith.divf %274, %277 : vector<16x16xf32>
    %cst_150 = arith.constant dense<0.000000e+00> : vector<16x16xf32>
    %279 = tpu.matmul %278, %267, %cst_150 {dimension_numbers = #tpu.dot_dimension_numbers<[1], [0], [0], [1], [0, 0, 1, 1], [], []>} : vector<16x16xf32>, vector<16x16xf32>, vector<16x16xf32> -> vector<16x16xf32>
    %280 = vector.extract_strided_slice %264 {offsets = [0, 16], sizes = [16, 16], strides = [1, 1]} : vector<16x128xf32> to vector<16x16xf32>
    %281 = vector.extract_strided_slice %264 {offsets = [0, 48], sizes = [16, 16], strides = [1, 1]} : vector<16x128xf32> to vector<16x16xf32>
    %282 = vector.extract_strided_slice %264 {offsets = [0, 80], sizes = [16, 16], strides = [1, 1]} : vector<16x128xf32> to vector<16x16xf32>
    %cst_151 = arith.constant dense<0.000000e+00> : vector<16x16xf32>
    %283 = tpu.matmul %280, %281, %cst_151 {dimension_numbers = #tpu.dot_dimension_numbers<[1], [1], [0], [0], [0, 0, 1, 0], [], []>} : vector<16x16xf32>, vector<16x16xf32>, vector<16x16xf32> -> vector<16x16xf32>
    %284 = arith.addf %283, %0 : vector<16x16xf32>
    %cst_152 = arith.constant dense<0xFF800000> : vector<16xf32>
    %285 = vector.multi_reduction <maximumf>, %284, %cst_152 [1] : vector<16x16xf32> to vector<16xf32>
    %286 = vector.shape_cast %285 : vector<16xf32> to vector<16x1xf32>
    %287 = vector.broadcast %286 : vector<16x1xf32> to vector<16x16xf32>
    %288 = arith.subf %284, %287 : vector<16x16xf32>
    %289 = math.exp %288 : vector<16x16xf32>
    %cst_153 = arith.constant dense<0.000000e+00> : vector<16xf32>
    %290 = vector.multi_reduction <add>, %289, %cst_153 [1] : vector<16x16xf32> to vector<16xf32>
    %291 = vector.shape_cast %290 : vector<16xf32> to vector<16x1xf32>
    %292 = vector.broadcast %291 : vector<16x1xf32> to vector<16x16xf32>
    %293 = arith.divf %289, %292 : vector<16x16xf32>
    %cst_154 = arith.constant dense<0.000000e+00> : vector<16x16xf32>
    %294 = tpu.matmul %293, %282, %cst_154 {dimension_numbers = #tpu.dot_dimension_numbers<[1], [0], [0], [1], [0, 0, 1, 1], [], []>} : vector<16x16xf32>, vector<16x16xf32>, vector<16x16xf32> -> vector<16x16xf32>
    %295 = tpu.concatenate %279, %294 in 1 : vector<16x16xf32>, vector<16x16xf32> -> vector<16x32xf32>
    %cst_155 = arith.constant dense<0.000000e+00> : vector<16x128xf32>
    %296 = tpu.matmul %295, %241, %cst_155 {dimension_numbers = #tpu.dot_dimension_numbers<[1], [0], [0], [1], [0, 0, 1, 1], [], []>} : vector<16x32xf32>, vector<32x128xf32>, vector<16x128xf32> -> vector<16x128xf32>
    %297 = vector.extract_strided_slice %296 {offsets = [0, 0], sizes = [16, 32], strides = [1, 1]} : vector<16x128xf32> to vector<16x32xf32>
    %298 = vector.broadcast %249 : vector<1x32xf32> to vector<16x32xf32>
    %299 = arith.addf %297, %298 : vector<16x32xf32>
    %300 = arith.addf %237, %299 : vector<16x32xf32>
    %cst_156 = arith.constant dense<0.000000e+00> : vector<16xf32>
    %301 = vector.multi_reduction <add>, %300, %cst_156 [1] : vector<16x32xf32> to vector<16xf32>
    %302 = vector.shape_cast %301 : vector<16xf32> to vector<16x1xf32>
    %cst_157 = arith.constant 3.200000e+01 : f32
    %303 = vector.broadcast %cst_157 : f32 to vector<16x1xf32>
    %304 = arith.divf %302, %303 : vector<16x1xf32>
    %305 = vector.broadcast %304 : vector<16x1xf32> to vector<16x32xf32>
    %306 = arith.subf %300, %305 : vector<16x32xf32>
    %307 = arith.mulf %306, %306 : vector<16x32xf32>
    %cst_158 = arith.constant dense<0.000000e+00> : vector<16xf32>
    %308 = vector.multi_reduction <add>, %307, %cst_158 [1] : vector<16x32xf32> to vector<16xf32>
    %309 = vector.shape_cast %308 : vector<16xf32> to vector<16x1xf32>
    %cst_159 = arith.constant 3.200000e+01 : f32
    %310 = vector.broadcast %cst_159 : f32 to vector<16x1xf32>
    %311 = arith.divf %309, %310 : vector<16x1xf32>
    %312 = vector.broadcast %304 : vector<16x1xf32> to vector<16x32xf32>
    %313 = arith.subf %300, %312 : vector<16x32xf32>
    %cst_160 = arith.constant 9.99999974E-6 : f32
    %314 = vector.broadcast %cst_160 : f32 to vector<16x1xf32>
    %315 = arith.addf %311, %314 : vector<16x1xf32>
    %316 = math.rsqrt %315 : vector<16x1xf32>
    %317 = vector.broadcast %316 : vector<16x1xf32> to vector<16x32xf32>
    %318 = arith.mulf %313, %317 : vector<16x32xf32>
    %319 = vector.broadcast %255 : vector<1x32xf32> to vector<16x32xf32>
    %320 = arith.mulf %318, %319 : vector<16x32xf32>
    %321 = vector.broadcast %257 : vector<1x32xf32> to vector<16x32xf32>
    %322 = arith.addf %320, %321 : vector<16x32xf32>
    %cst_161 = arith.constant dense<0.000000e+00> : vector<16x128xf32>
    %323 = tpu.matmul %322, %243, %cst_161 {dimension_numbers = #tpu.dot_dimension_numbers<[1], [0], [0], [1], [0, 0, 1, 1], [], []>} : vector<16x32xf32>, vector<32x128xf32>, vector<16x128xf32> -> vector<16x128xf32>
    %324 = vector.broadcast %251 : vector<1x128xf32> to vector<16x128xf32>
    %325 = arith.addf %323, %324 : vector<16x128xf32>
    %cst_162 = arith.constant 0.000000e+00 : f32
    %326 = vector.broadcast %cst_162 : f32 to vector<16x128xf32>
    %327 = arith.maximumf %325, %326 : vector<16x128xf32>
    %328 = vector.extract_strided_slice %327 {offsets = [0, 0], sizes = [16, 64], strides = [1, 1]} : vector<16x128xf32> to vector<16x64xf32>
    %cst_163 = arith.constant dense<0.000000e+00> : vector<16x128xf32>
    %329 = tpu.matmul %328, %245, %cst_163 {dimension_numbers = #tpu.dot_dimension_numbers<[1], [0], [0], [1], [0, 0, 1, 1], [], []>} : vector<16x64xf32>, vector<64x128xf32>, vector<16x128xf32> -> vector<16x128xf32>
    %330 = vector.extract_strided_slice %329 {offsets = [0, 0], sizes = [16, 32], strides = [1, 1]} : vector<16x128xf32> to vector<16x32xf32>
    %331 = vector.broadcast %253 : vector<1x32xf32> to vector<16x32xf32>
    %332 = arith.addf %330, %331 : vector<16x32xf32>
    %333 = arith.addf %322, %332 : vector<16x32xf32>
    %cst_164 = arith.constant dense<0.000000e+00> : vector<16xf32>
    %334 = vector.multi_reduction <add>, %333, %cst_164 [1] : vector<16x32xf32> to vector<16xf32>
    %335 = vector.shape_cast %334 : vector<16xf32> to vector<16x1xf32>
    %cst_165 = arith.constant 3.200000e+01 : f32
    %336 = vector.broadcast %cst_165 : f32 to vector<16x1xf32>
    %337 = arith.divf %335, %336 : vector<16x1xf32>
    %338 = vector.broadcast %337 : vector<16x1xf32> to vector<16x32xf32>
    %339 = arith.subf %333, %338 : vector<16x32xf32>
    %340 = arith.mulf %339, %339 : vector<16x32xf32>
    %cst_166 = arith.constant dense<0.000000e+00> : vector<16xf32>
    %341 = vector.multi_reduction <add>, %340, %cst_166 [1] : vector<16x32xf32> to vector<16xf32>
    %342 = vector.shape_cast %341 : vector<16xf32> to vector<16x1xf32>
    %cst_167 = arith.constant 3.200000e+01 : f32
    %343 = vector.broadcast %cst_167 : f32 to vector<16x1xf32>
    %344 = arith.divf %342, %343 : vector<16x1xf32>
    %345 = vector.broadcast %337 : vector<16x1xf32> to vector<16x32xf32>
    %346 = arith.subf %333, %345 : vector<16x32xf32>
    %cst_168 = arith.constant 9.99999974E-6 : f32
    %347 = vector.broadcast %cst_168 : f32 to vector<16x1xf32>
    %348 = arith.addf %344, %347 : vector<16x1xf32>
    %349 = math.rsqrt %348 : vector<16x1xf32>
    %350 = vector.broadcast %349 : vector<16x1xf32> to vector<16x32xf32>
    %351 = arith.mulf %346, %350 : vector<16x32xf32>
    %352 = vector.broadcast %259 : vector<1x32xf32> to vector<16x32xf32>
    %353 = arith.mulf %351, %352 : vector<16x32xf32>
    %354 = vector.broadcast %261 : vector<1x32xf32> to vector<16x32xf32>
    %355 = arith.addf %353, %354 : vector<16x32xf32>
    %c3_169 = arith.constant 3 : index
    %c0_170 = arith.constant 0 : index
    %c0_171 = arith.constant 0 : index
    %356 = vector.load %arg3[%c3_169, %c0_170, %c0_171] : memref<4x160x128xf32, #tpu.memory_space<vmem>>, vector<1x32x128xf32>
    %357 = vector.shape_cast %356 : vector<1x32x128xf32> to vector<32x128xf32>
    %c3_172 = arith.constant 3 : index
    %c32_173 = arith.constant 32 : index
    %c0_174 = arith.constant 0 : index
    %358 = vector.load %arg3[%c3_172, %c32_173, %c0_174] : memref<4x160x128xf32, #tpu.memory_space<vmem>>, vector<1x32x128xf32>
    %359 = vector.shape_cast %358 : vector<1x32x128xf32> to vector<32x128xf32>
    %c3_175 = arith.constant 3 : index
    %c64_176 = arith.constant 64 : index
    %c0_177 = arith.constant 0 : index
    %360 = vector.load %arg3[%c3_175, %c64_176, %c0_177] : memref<4x160x128xf32, #tpu.memory_space<vmem>>, vector<1x32x128xf32>
    %361 = vector.shape_cast %360 : vector<1x32x128xf32> to vector<32x128xf32>
    %c3_178 = arith.constant 3 : index
    %c96_179 = arith.constant 96 : index
    %c0_180 = arith.constant 0 : index
    %362 = vector.load %arg3[%c3_178, %c96_179, %c0_180] : memref<4x160x128xf32, #tpu.memory_space<vmem>>, vector<1x64x128xf32>
    %363 = vector.shape_cast %362 : vector<1x64x128xf32> to vector<64x128xf32>
    %c3_181 = arith.constant 3 : index
    %c0_182 = arith.constant 0 : index
    %c0_183 = arith.constant 0 : index
    %364 = vector.load %arg4[%c3_181, %c0_182, %c0_183] : memref<4x8x128xf32, #tpu.memory_space<vmem>>, vector<1x1x128xf32>
    %365 = vector.shape_cast %364 : vector<1x1x128xf32> to vector<1x128xf32>
    %c3_184 = arith.constant 3 : index
    %c1_185 = arith.constant 1 : index
    %c0_186 = arith.constant 0 : index
    %366 = vector.load %arg4[%c3_184, %c1_185, %c0_186] : memref<4x8x128xf32, #tpu.memory_space<vmem>>, vector<1x1x32xf32>
    %367 = vector.shape_cast %366 : vector<1x1x32xf32> to vector<1x32xf32>
    %c3_187 = arith.constant 3 : index
    %c2_188 = arith.constant 2 : index
    %c0_189 = arith.constant 0 : index
    %368 = vector.load %arg4[%c3_187, %c2_188, %c0_189] : memref<4x8x128xf32, #tpu.memory_space<vmem>>, vector<1x1x128xf32>
    %369 = vector.shape_cast %368 : vector<1x1x128xf32> to vector<1x128xf32>
    %c3_190 = arith.constant 3 : index
    %c3_191 = arith.constant 3 : index
    %c0_192 = arith.constant 0 : index
    %370 = vector.load %arg4[%c3_190, %c3_191, %c0_192] : memref<4x8x128xf32, #tpu.memory_space<vmem>>, vector<1x1x32xf32>
    %371 = vector.shape_cast %370 : vector<1x1x32xf32> to vector<1x32xf32>
    %c3_193 = arith.constant 3 : index
    %c4_194 = arith.constant 4 : index
    %c0_195 = arith.constant 0 : index
    %372 = vector.load %arg4[%c3_193, %c4_194, %c0_195] : memref<4x8x128xf32, #tpu.memory_space<vmem>>, vector<1x1x32xf32>
    %373 = vector.shape_cast %372 : vector<1x1x32xf32> to vector<1x32xf32>
    %c3_196 = arith.constant 3 : index
    %c5_197 = arith.constant 5 : index
    %c0_198 = arith.constant 0 : index
    %374 = vector.load %arg4[%c3_196, %c5_197, %c0_198] : memref<4x8x128xf32, #tpu.memory_space<vmem>>, vector<1x1x32xf32>
    %375 = vector.shape_cast %374 : vector<1x1x32xf32> to vector<1x32xf32>
    %c3_199 = arith.constant 3 : index
    %c6_200 = arith.constant 6 : index
    %c0_201 = arith.constant 0 : index
    %376 = vector.load %arg4[%c3_199, %c6_200, %c0_201] : memref<4x8x128xf32, #tpu.memory_space<vmem>>, vector<1x1x32xf32>
    %377 = vector.shape_cast %376 : vector<1x1x32xf32> to vector<1x32xf32>
    %c3_202 = arith.constant 3 : index
    %c7_203 = arith.constant 7 : index
    %c0_204 = arith.constant 0 : index
    %378 = vector.load %arg4[%c3_202, %c7_203, %c0_204] : memref<4x8x128xf32, #tpu.memory_space<vmem>>, vector<1x1x32xf32>
    %379 = vector.shape_cast %378 : vector<1x1x32xf32> to vector<1x32xf32>
    %cst_205 = arith.constant dense<0.000000e+00> : vector<16x128xf32>
    %380 = tpu.matmul %355, %357, %cst_205 {dimension_numbers = #tpu.dot_dimension_numbers<[1], [0], [0], [1], [0, 0, 1, 1], [], []>} : vector<16x32xf32>, vector<32x128xf32>, vector<16x128xf32> -> vector<16x128xf32>
    %381 = vector.broadcast %365 : vector<1x128xf32> to vector<16x128xf32>
    %382 = arith.addf %380, %381 : vector<16x128xf32>
    %383 = vector.extract_strided_slice %382 {offsets = [0, 0], sizes = [16, 16], strides = [1, 1]} : vector<16x128xf32> to vector<16x16xf32>
    %384 = vector.extract_strided_slice %382 {offsets = [0, 32], sizes = [16, 16], strides = [1, 1]} : vector<16x128xf32> to vector<16x16xf32>
    %385 = vector.extract_strided_slice %382 {offsets = [0, 64], sizes = [16, 16], strides = [1, 1]} : vector<16x128xf32> to vector<16x16xf32>
    %cst_206 = arith.constant dense<0.000000e+00> : vector<16x16xf32>
    %386 = tpu.matmul %383, %384, %cst_206 {dimension_numbers = #tpu.dot_dimension_numbers<[1], [1], [0], [0], [0, 0, 1, 0], [], []>} : vector<16x16xf32>, vector<16x16xf32>, vector<16x16xf32> -> vector<16x16xf32>
    %387 = arith.addf %386, %0 : vector<16x16xf32>
    %cst_207 = arith.constant dense<0xFF800000> : vector<16xf32>
    %388 = vector.multi_reduction <maximumf>, %387, %cst_207 [1] : vector<16x16xf32> to vector<16xf32>
    %389 = vector.shape_cast %388 : vector<16xf32> to vector<16x1xf32>
    %390 = vector.broadcast %389 : vector<16x1xf32> to vector<16x16xf32>
    %391 = arith.subf %387, %390 : vector<16x16xf32>
    %392 = math.exp %391 : vector<16x16xf32>
    %cst_208 = arith.constant dense<0.000000e+00> : vector<16xf32>
    %393 = vector.multi_reduction <add>, %392, %cst_208 [1] : vector<16x16xf32> to vector<16xf32>
    %394 = vector.shape_cast %393 : vector<16xf32> to vector<16x1xf32>
    %395 = vector.broadcast %394 : vector<16x1xf32> to vector<16x16xf32>
    %396 = arith.divf %392, %395 : vector<16x16xf32>
    %cst_209 = arith.constant dense<0.000000e+00> : vector<16x16xf32>
    %397 = tpu.matmul %396, %385, %cst_209 {dimension_numbers = #tpu.dot_dimension_numbers<[1], [0], [0], [1], [0, 0, 1, 1], [], []>} : vector<16x16xf32>, vector<16x16xf32>, vector<16x16xf32> -> vector<16x16xf32>
    %398 = vector.extract_strided_slice %382 {offsets = [0, 16], sizes = [16, 16], strides = [1, 1]} : vector<16x128xf32> to vector<16x16xf32>
    %399 = vector.extract_strided_slice %382 {offsets = [0, 48], sizes = [16, 16], strides = [1, 1]} : vector<16x128xf32> to vector<16x16xf32>
    %400 = vector.extract_strided_slice %382 {offsets = [0, 80], sizes = [16, 16], strides = [1, 1]} : vector<16x128xf32> to vector<16x16xf32>
    %cst_210 = arith.constant dense<0.000000e+00> : vector<16x16xf32>
    %401 = tpu.matmul %398, %399, %cst_210 {dimension_numbers = #tpu.dot_dimension_numbers<[1], [1], [0], [0], [0, 0, 1, 0], [], []>} : vector<16x16xf32>, vector<16x16xf32>, vector<16x16xf32> -> vector<16x16xf32>
    %402 = arith.addf %401, %0 : vector<16x16xf32>
    %cst_211 = arith.constant dense<0xFF800000> : vector<16xf32>
    %403 = vector.multi_reduction <maximumf>, %402, %cst_211 [1] : vector<16x16xf32> to vector<16xf32>
    %404 = vector.shape_cast %403 : vector<16xf32> to vector<16x1xf32>
    %405 = vector.broadcast %404 : vector<16x1xf32> to vector<16x16xf32>
    %406 = arith.subf %402, %405 : vector<16x16xf32>
    %407 = math.exp %406 : vector<16x16xf32>
    %cst_212 = arith.constant dense<0.000000e+00> : vector<16xf32>
    %408 = vector.multi_reduction <add>, %407, %cst_212 [1] : vector<16x16xf32> to vector<16xf32>
    %409 = vector.shape_cast %408 : vector<16xf32> to vector<16x1xf32>
    %410 = vector.broadcast %409 : vector<16x1xf32> to vector<16x16xf32>
    %411 = arith.divf %407, %410 : vector<16x16xf32>
    %cst_213 = arith.constant dense<0.000000e+00> : vector<16x16xf32>
    %412 = tpu.matmul %411, %400, %cst_213 {dimension_numbers = #tpu.dot_dimension_numbers<[1], [0], [0], [1], [0, 0, 1, 1], [], []>} : vector<16x16xf32>, vector<16x16xf32>, vector<16x16xf32> -> vector<16x16xf32>
    %413 = tpu.concatenate %397, %412 in 1 : vector<16x16xf32>, vector<16x16xf32> -> vector<16x32xf32>
    %cst_214 = arith.constant dense<0.000000e+00> : vector<16x128xf32>
    %414 = tpu.matmul %413, %359, %cst_214 {dimension_numbers = #tpu.dot_dimension_numbers<[1], [0], [0], [1], [0, 0, 1, 1], [], []>} : vector<16x32xf32>, vector<32x128xf32>, vector<16x128xf32> -> vector<16x128xf32>
    %415 = vector.extract_strided_slice %414 {offsets = [0, 0], sizes = [16, 32], strides = [1, 1]} : vector<16x128xf32> to vector<16x32xf32>
    %416 = vector.broadcast %367 : vector<1x32xf32> to vector<16x32xf32>
    %417 = arith.addf %415, %416 : vector<16x32xf32>
    %418 = arith.addf %355, %417 : vector<16x32xf32>
    %cst_215 = arith.constant dense<0.000000e+00> : vector<16xf32>
    %419 = vector.multi_reduction <add>, %418, %cst_215 [1] : vector<16x32xf32> to vector<16xf32>
    %420 = vector.shape_cast %419 : vector<16xf32> to vector<16x1xf32>
    %cst_216 = arith.constant 3.200000e+01 : f32
    %421 = vector.broadcast %cst_216 : f32 to vector<16x1xf32>
    %422 = arith.divf %420, %421 : vector<16x1xf32>
    %423 = vector.broadcast %422 : vector<16x1xf32> to vector<16x32xf32>
    %424 = arith.subf %418, %423 : vector<16x32xf32>
    %425 = arith.mulf %424, %424 : vector<16x32xf32>
    %cst_217 = arith.constant dense<0.000000e+00> : vector<16xf32>
    %426 = vector.multi_reduction <add>, %425, %cst_217 [1] : vector<16x32xf32> to vector<16xf32>
    %427 = vector.shape_cast %426 : vector<16xf32> to vector<16x1xf32>
    %cst_218 = arith.constant 3.200000e+01 : f32
    %428 = vector.broadcast %cst_218 : f32 to vector<16x1xf32>
    %429 = arith.divf %427, %428 : vector<16x1xf32>
    %430 = vector.broadcast %422 : vector<16x1xf32> to vector<16x32xf32>
    %431 = arith.subf %418, %430 : vector<16x32xf32>
    %cst_219 = arith.constant 9.99999974E-6 : f32
    %432 = vector.broadcast %cst_219 : f32 to vector<16x1xf32>
    %433 = arith.addf %429, %432 : vector<16x1xf32>
    %434 = math.rsqrt %433 : vector<16x1xf32>
    %435 = vector.broadcast %434 : vector<16x1xf32> to vector<16x32xf32>
    %436 = arith.mulf %431, %435 : vector<16x32xf32>
    %437 = vector.broadcast %373 : vector<1x32xf32> to vector<16x32xf32>
    %438 = arith.mulf %436, %437 : vector<16x32xf32>
    %439 = vector.broadcast %375 : vector<1x32xf32> to vector<16x32xf32>
    %440 = arith.addf %438, %439 : vector<16x32xf32>
    %cst_220 = arith.constant dense<0.000000e+00> : vector<16x128xf32>
    %441 = tpu.matmul %440, %361, %cst_220 {dimension_numbers = #tpu.dot_dimension_numbers<[1], [0], [0], [1], [0, 0, 1, 1], [], []>} : vector<16x32xf32>, vector<32x128xf32>, vector<16x128xf32> -> vector<16x128xf32>
    %442 = vector.broadcast %369 : vector<1x128xf32> to vector<16x128xf32>
    %443 = arith.addf %441, %442 : vector<16x128xf32>
    %cst_221 = arith.constant 0.000000e+00 : f32
    %444 = vector.broadcast %cst_221 : f32 to vector<16x128xf32>
    %445 = arith.maximumf %443, %444 : vector<16x128xf32>
    %446 = vector.extract_strided_slice %445 {offsets = [0, 0], sizes = [16, 64], strides = [1, 1]} : vector<16x128xf32> to vector<16x64xf32>
    %cst_222 = arith.constant dense<0.000000e+00> : vector<16x128xf32>
    %447 = tpu.matmul %446, %363, %cst_222 {dimension_numbers = #tpu.dot_dimension_numbers<[1], [0], [0], [1], [0, 0, 1, 1], [], []>} : vector<16x64xf32>, vector<64x128xf32>, vector<16x128xf32> -> vector<16x128xf32>
    %448 = vector.extract_strided_slice %447 {offsets = [0, 0], sizes = [16, 32], strides = [1, 1]} : vector<16x128xf32> to vector<16x32xf32>
    %449 = vector.broadcast %371 : vector<1x32xf32> to vector<16x32xf32>
    %450 = arith.addf %448, %449 : vector<16x32xf32>
    %451 = arith.addf %440, %450 : vector<16x32xf32>
    %cst_223 = arith.constant dense<0.000000e+00> : vector<16xf32>
    %452 = vector.multi_reduction <add>, %451, %cst_223 [1] : vector<16x32xf32> to vector<16xf32>
    %453 = vector.shape_cast %452 : vector<16xf32> to vector<16x1xf32>
    %cst_224 = arith.constant 3.200000e+01 : f32
    %454 = vector.broadcast %cst_224 : f32 to vector<16x1xf32>
    %455 = arith.divf %453, %454 : vector<16x1xf32>
    %456 = vector.broadcast %455 : vector<16x1xf32> to vector<16x32xf32>
    %457 = arith.subf %451, %456 : vector<16x32xf32>
    %458 = arith.mulf %457, %457 : vector<16x32xf32>
    %cst_225 = arith.constant dense<0.000000e+00> : vector<16xf32>
    %459 = vector.multi_reduction <add>, %458, %cst_225 [1] : vector<16x32xf32> to vector<16xf32>
    %460 = vector.shape_cast %459 : vector<16xf32> to vector<16x1xf32>
    %cst_226 = arith.constant 3.200000e+01 : f32
    %461 = vector.broadcast %cst_226 : f32 to vector<16x1xf32>
    %462 = arith.divf %460, %461 : vector<16x1xf32>
    %463 = vector.broadcast %455 : vector<16x1xf32> to vector<16x32xf32>
    %464 = arith.subf %451, %463 : vector<16x32xf32>
    %cst_227 = arith.constant 9.99999974E-6 : f32
    %465 = vector.broadcast %cst_227 : f32 to vector<16x1xf32>
    %466 = arith.addf %462, %465 : vector<16x1xf32>
    %467 = math.rsqrt %466 : vector<16x1xf32>
    %468 = vector.broadcast %467 : vector<16x1xf32> to vector<16x32xf32>
    %469 = arith.mulf %464, %468 : vector<16x32xf32>
    %470 = vector.broadcast %377 : vector<1x32xf32> to vector<16x32xf32>
    %471 = arith.mulf %469, %470 : vector<16x32xf32>
    %472 = vector.broadcast %379 : vector<1x32xf32> to vector<16x32xf32>
    %473 = arith.addf %471, %472 : vector<16x32xf32>
    %c0_228 = arith.constant 0 : index
    %c0_229 = arith.constant 0 : index
    %474 = vector.load %arg5[%c0_228, %c0_229] : memref<16x32xf32, #tpu.memory_space<vmem>>, vector<16x32xf32>
    tpu.vector_store %arg5[%c0_228, %c0_229], %473 {strides = array<i32>} : memref<16x32xf32, #tpu.memory_space<vmem>>, vector<16x32xf32>,
    return
  }
  func.func @transform_0(%arg0: i32) -> (i32, i32) {
    %c0_i32 = arith.constant 0 : i32
    %c0_i32_0 = arith.constant 0 : i32
    return %arg0, %c0_i32 : i32, i32
  }
  func.func @transform_1(%arg0: i32) -> (i32, i32) {
    %c0_i32 = arith.constant 0 : i32
    %c0_i32_0 = arith.constant 0 : i32
    %c0_i32_1 = arith.constant 0 : i32
    return %c0_i32, %c0_i32_0 : i32, i32
  }
  func.func @transform_2(%arg0: i32) -> (i32, i32, i32) {
    %c0_i32 = arith.constant 0 : i32
    %c0_i32_0 = arith.constant 0 : i32
    %c0_i32_1 = arith.constant 0 : i32
    %c0_i32_2 = arith.constant 0 : i32
    return %c0_i32, %c0_i32_0, %c0_i32_1 : i32, i32, i32
  }
  func.func @transform_3(%arg0: i32) -> (i32, i32, i32) {
    %c0_i32 = arith.constant 0 : i32
    %c0_i32_0 = arith.constant 0 : i32
    %c0_i32_1 = arith.constant 0 : i32
    %c0_i32_2 = arith.constant 0 : i32
    return %c0_i32, %c0_i32_0, %c0_i32_1 : i32, i32, i32
  }
  func.func @transform_4(%arg0: i32) -> (i32, i32) {
    %c0_i32 = arith.constant 0 : i32
    %c0_i32_0 = arith.constant 0 : i32
    return %arg0, %c0_i32 : i32, i32
  }
}

</mosaic_0001>

<llo_original>
// kernel: tpu_custom_call.1
$region0: #{tpu_custom_call.1}
  #allocation0 [shape = 'u32[]', space=smem, size = 0x4, offset = 0x4, fixed_abs, tag = 'smem constant byte address 0x4 - core index']
  #allocation1 [shape = 'u32[144,128]{1,0:T(1,128)}', space=vmem, size = 0x12000, scoped, tag = 'internal scratch']
  %s0 = inlined_call_operand.hbm [shape: f32[16,32], index: 0, kind: input, shape index: {}]
  %s1 = inlined_call_operand.hbm [shape: f32[16,16], index: 1, kind: input, shape index: {}]
  %s2 = inlined_call_operand.hbm [shape: f32[4,160,128], index: 2, kind: input, shape index: {}]
  %s3 = inlined_call_operand.hbm [shape: f32[4,8,128], index: 3, kind: input, shape index: {}]
  %s4 = inlined_call_operand.hbm [shape: f32[16,32], index: 4, kind: output, shape index: {}]
  %s5 = sld [smem:[#allocation0]]
  $region42: #{tpu_custom_call.1} parent=0
    _
  %s7 = ssub.s32 1, %s5
  %s8 = scalar_select 0, %s7, %s5
  $region1: #{tpu_custom_call.1} parent=0
    #allocation2 [shape = 'u8[8192]{0}', space=vmem, size = 0x2000, scoped, tag = 'input window, operand 0, single buffered']
    #allocation3 [shape = 's32[1]{0}', space=sflag, size = 0x4, scoped, tag = 'scoped memory for tpu_custom_call.1']
    #allocation4 [shape = 's32[1]{0}', space=sflag, size = 0x4, scoped, tag = 'scoped memory for tpu_custom_call.1']
    #allocation5 [shape = 'u8[8192]{0}', space=vmem, size = 0x2000, scoped, tag = 'input window, operand 1, single buffered']
    #allocation6 [shape = 's32[1]{0}', space=sflag, size = 0x4, scoped, tag = 'scoped memory for tpu_custom_call.1']
    #allocation7 [shape = 'u8[327680]{0}', space=vmem, size = 0x50000, scoped, tag = 'input window, operand 2, single buffered']
    #allocation8 [shape = 'u8[16384]{0}', space=vmem, size = 0x4000, scoped, tag = 'input window, operand 3, single buffered']
    #allocation9 [shape = 's32[1]{0}', space=sflag, size = 0x4, scoped, tag = 'scoped memory for tpu_custom_call.1']
    #allocation10 [shape = 'u8[8192]{0}', space=vmem, size = 0x2000, scoped, tag = 'output window, operand 0, single buffered']
    %9 = vsyncpa [#allocation3], 0
    %10 = vsyncpa [#allocation6], 0
    %11 = vsyncpa [#allocation9], 0
    %12 = vsyncpa [#allocation4], 0
    // Predicated region
    $region2: #{tpu_custom_call.1} parent=1 // pred_check
      _
    $region3: #{tpu_custom_call.1} parent=1 // pred_check_branch
      %14 = sbr.rel (0) target = $region5
    $region4: #{tpu_custom_call.1} parent=1 // pred_region
      %s16 = ssub.s32 256, 256
      %17 = vsyncadd [#allocation3], %s16
      %s18 = sshll.u32 [#allocation2], 4
      %s19 = int_to_ptr.vmem [resolvable:$true] %s18
      %24 = dma.hbm_to_vmem [thread:$0]  %s0, 256, %s19, [#allocation3], 128, 128, 8
    $region5: #{tpu_custom_call.1} parent=1 // pred_fallthru
      _
    // Predicated region
    $region6: #{tpu_custom_call.1} parent=1 // pred_check
      _
    $region7: #{tpu_custom_call.1} parent=1 // pred_check_branch
      %26 = sbr.rel (0) target = $region9
    $region8: #{tpu_custom_call.1} parent=1 // pred_region
      %s28 = ssub.s32 256, 256
      %29 = vsyncadd [#allocation6], %s28
      %s30 = sshll.u32 [#allocation5], 4
      %s31 = int_to_ptr.vmem [resolvable:$true] %s30
      %36 = dma.hbm_to_vmem [thread:$0]  %s1, 256, %s31, [#allocation6], 128, 128, 8
    $region9: #{tpu_custom_call.1} parent=1 // pred_fallthru
      _
    // Predicated region
    $region10: #{tpu_custom_call.1} parent=1 // pred_check
      _
    $region11: #{tpu_custom_call.1} parent=1 // pred_check_branch
      %38 = sbr.rel (0) target = $region13
    $region12: #{tpu_custom_call.1} parent=1 // pred_region
      %s40 = ssub.s32 10240, 10240
      %41 = vsyncadd [#allocation6], %s40
      %s42 = sshll.u32 [#allocation7], 4
      %s43 = int_to_ptr.vmem [resolvable:$true] %s42
      %48 = dma.hbm_to_vmem [thread:$0]  %s2, 10240, %s43, [#allocation6], 128, 128, 8
    $region13: #{tpu_custom_call.1} parent=1 // pred_fallthru
      _
    // Predicated region
    $region14: #{tpu_custom_call.1} parent=1 // pred_check
      _
    $region15: #{tpu_custom_call.1} parent=1 // pred_check_branch
      %50 = sbr.rel (0) target = $region17
    $region16: #{tpu_custom_call.1} parent=1 // pred_region
      %s52 = ssub.s32 512, 512
      %53 = vsyncadd [#allocation9], %s52
      %s54 = sshll.u32 [#allocation8], 4
      %s55 = int_to_ptr.vmem [resolvable:$true] %s54
      %60 = dma.hbm_to_vmem [thread:$0]  %s3, 512, %s55, [#allocation9], 128, 128, 8
    $region17: #{tpu_custom_call.1} parent=1 // pred_fallthru
      _
    // Predicated region
    $region18: #{tpu_custom_call.1} parent=1 // pred_check
      _
    $region19: #{tpu_custom_call.1} parent=1 // pred_check_branch
      %62 = sbr.rel (0) target = $region21
    $region20: #{tpu_custom_call.1} parent=1 // pred_region
      %63 = dma.done [#allocation3], 256
    $region21: #{tpu_custom_call.1} parent=1 // pred_fallthru
      _
    // Predicated region
    $region22: #{tpu_custom_call.1} parent=1 // pred_check
      _
    $region23: #{tpu_custom_call.1} parent=1 // pred_check_branch
      %65 = sbr.rel (0) target = $region25
    $region24: #{tpu_custom_call.1} parent=1 // pred_region
      %66 = dma.done [#allocation6], 256
    $region25: #{tpu_custom_call.1} parent=1 // pred_fallthru
      _
    // Predicated region
    $region26: #{tpu_custom_call.1} parent=1 // pred_check
      _
    $region27: #{tpu_custom_call.1} parent=1 // pred_check_branch
      %68 = sbr.rel (0) target = $region29
    $region28: #{tpu_custom_call.1} parent=1 // pred_region
      %69 = dma.done [#allocation6], 10240
    $region29: #{tpu_custom_call.1} parent=1 // pred_fallthru
      _
    // Predicated region
    $region30: #{tpu_custom_call.1} parent=1 // pred_check
      _
    $region31: #{tpu_custom_call.1} parent=1 // pred_check_branch
      %71 = sbr.rel (0) target = $region33
    $region32: #{tpu_custom_call.1} parent=1 // pred_region
      %72 = dma.done [#allocation9], 512
    $region33: #{tpu_custom_call.1} parent=1 // pred_fallthru
      _
    %v73 = vld [vmem:[#allocation5] sm:$0xff]
    %v74 = vld [vmem:[#allocation5 + $0x8] sm:$0xff]
    %v75 = vld [vmem:[#allocation2] sm:$0xff]
    %v76 = vld [vmem:[#allocation2 + $0x8] sm:$0xff]
    %v77 = vld [vmem:[#allocation7] sm:$0xff]
    %v78 = vld [vmem:[#allocation7 + $0x8] sm:$0xff]
    %v79 = vld [vmem:[#allocation7 + $0x10] sm:$0xff]
    %v80 = vld [vmem:[#allocation7 + $0x18] sm:$0xff]
    %v81 = vld [vmem:[#allocation7 + $0x20] sm:$0xff]
    %v82 = vld [vmem:[#allocation7 + $0x28] sm:$0xff]
    %v83 = vld [vmem:[#allocation7 + $0x30] sm:$0xff]
    %v84 = vld [vmem:[#allocation7 + $0x38] sm:$0xff]
    %v85 = vld [vmem:[#allocation7 + $0x40] sm:$0xff]
    %v86 = vld [vmem:[#allocation7 + $0x48] sm:$0xff]
    %v87 = vld [vmem:[#allocation7 + $0x50] sm:$0xff]
    %v88 = vld [vmem:[#allocation7 + $0x58] sm:$0xff]
    %v89 = vld [vmem:[#allocation7 + $0x60] sm:$0xff]
    %v90 = vld [vmem:[#allocation7 + $0x68] sm:$0xff]
    %v91 = vld [vmem:[#allocation7 + $0x70] sm:$0xff]
    %v92 = vld [vmem:[#allocation7 + $0x78] sm:$0xff]
    %v93 = vld [vmem:[#allocation7 + $0x80] sm:$0xff]
    %v94 = vld [vmem:[#allocation7 + $0x88] sm:$0xff]
    %v95 = vld [vmem:[#allocation7 + $0x90] sm:$0xff]
    %v96 = vld [vmem:[#allocation7 + $0x98] sm:$0xff]
    %v97 = vld [vmem:[#allocation8] sm:$0x1]
    %v98 = vld [vmem:[#allocation8 + $0x1] sm:$0x1]
    %v99 = vld [vmem:[#allocation8 + $0x2] sm:$0x1]
    %v100 = vld [vmem:[#allocation8 + $0x3] sm:$0x1]
    %v101 = vld [vmem:[#allocation8 + $0x4] sm:$0x1]
    %v102 = vld [vmem:[#allocation8 + $0x5] sm:$0x1]
    %v103 = vld [vmem:[#allocation8 + $0x6] sm:$0x1]
    %v104 = vld [vmem:[#allocation8 + $0x7] sm:$0x1]
    %v105 = vlaneseq
    %v106 = vshrl.u32 %v105, 7
    %v107 = vsub.s32 0, %v106
    %v108 = vrot.slane %v97, %v107
    %vm109 = vcmask 261120
    %v111 = vsel %vm109, %v75, 0
    %v114 = vsel %vm109, %v76, 0
    %116 = vmatprep.subr.mxu0 0.0
    %117 = vmatpush1.msra.mxu0 %v77
    %118 = vmatprep.subr.mxu0 0.0
    %119 = vmatpush1.msra.mxu0 %v78
    %120 = vmatprep.subr.mxu0 0.0
    %121 = vmatpush1.msra.mxu0 %v79
    %122 = vmatprep.subr.mxu0 0.0
    %123 = vmatpush1.msra.mxu0 %v80
    %124 = vmatprep.subr.mxu0 0.0
    %125 = vmatpush1.msra.mxu0 0.0
    %126 = vmatprep.subr.mxu0 0.0
    %127 = vmatpush1.msra.mxu0 0.0
    %128 = vmatprep.subr.mxu0 0.0
    %129 = vmatpush1.msra.mxu0 0.0
    %130 = vmatprep.subr.mxu0 0.0
    %131 = vmatpush1.msra.mxu0 0.0
    %132 = vmatprep.subr.mxu0 0.0
    %133 = vmatpush1.msra.mxu0 0.0
    %134 = vmatprep.subr.mxu0 0.0
    %135 = vmatpush1.msra.mxu0 0.0
    %136 = vmatprep.subr.mxu0 0.0
    %137 = vmatpush1.msra.mxu0 0.0
    %138 = vmatprep.subr.mxu0 0.0
    %139 = vmatpush1.msra.mxu0 0.0
    %140 = vmatprep.subr.mxu0 0.0
    %141 = vmatpush1.msra.mxu0 0.0
    %142 = vmatprep.subr.mxu0 0.0
    %143 = vmatpush1.msra.mxu0 0.0
    %144 = vmatprep.subr.mxu0 0.0
    %145 = vmatpush1.msra.mxu0 0.0
    %146 = vmatprep.subr.mxu0 0.0
    %147 = vmatpush1.msra.mxu0 0.0
    %148 = vmatprep.subr.mxu0 0.0
    %149 = vmatpush1.msra.mxu0 0.0
    %150 = vmatprep.subr.mxu0 0.0
    %151 = vmatpush1.msra.mxu0 0.0
    %152 = vmatprep.subr.mxu0 0.0
    %153 = vmatpush1.msra.mxu0 0.0
    %154 = vmatprep.subr.mxu0 0.0
    %155 = vmatpush1.msra.mxu0 0.0
    %156 = vmatprep.subr.mxu0 0.0
    %157 = vmatpush1.msra.mxu0 0.0
    %158 = vmatprep.subr.mxu0 0.0
    %159 = vmatpush1.msra.mxu0 0.0
    %160 = vmatprep.subr.mxu0 0.0
    %161 = vmatpush1.msra.mxu0 0.0
    %162 = vmatprep.subr.mxu0 0.0
    %163 = vmatpush1.msra.mxu0 0.0
    %164 = vmatprep.subr.mxu0 0.0
    %165 = vmatpush1.msra.mxu0 0.0
    %166 = vmatprep.subr.mxu0 0.0
    %167 = vmatpush1.msra.mxu0 0.0
    %168 = vmatprep.subr.mxu0 0.0
    %169 = vmatpush1.msra.mxu0 0.0
    %170 = vmatprep.subr.mxu0 0.0
    %171 = vmatpush1.msra.mxu0 0.0
    %172 = vmatprep.subr.mxu0 0.0
    %173 = vmatpush1.msra.mxu0 0.0
    %174 = vmatprep.subr.mxu0 0.0
    %175 = vmatpush1.msra.mxu0 0.0
    %176 = vmatprep.subr.mxu0 0.0
    %177 = vmatpush1.msra.mxu0 0.0
    %178 = vmatprep.subr.mxu0 0.0
    %179 = vmatpush1.msra.mxu0 0.0
    %180 = vmatprep.mubr.f32.mxu0 0.0
    %181 = vmatmul.mubr.f32.gmra.mrb[0].mxu0 %v111
    %v182 = vpop.f32.mrb[0].mxu0
    %v183 = vadd.f32 %v108, %v182
    %v184 = vpop.f32.mrb[0].mxu0
    %185 = vmatprep.mubr.f32.mxu0 0.0
    %186 = vmatmul.mubr.f32.gmra.mrb[0].mxu0 %v114
    %v187 = vpop.f32.mrb[0].mxu0
    %v188 = vadd.f32 %v108, %v187
    %v189 = vpop.f32.mrb[0].mxu0
    %190 = vdwg.mxu0
    %193 = vrot.lane.b32.xlu0 %v183, 96
    %v194 = vpop.permute.xlu0 %193
    %195 = vrot.lane.b32.xlu0 %v188, 96
    %v196 = vpop.permute.xlu0 %195
    %vm197 = vcmask 130048
    %v198 = vsel %vm197, %v183, 0
    %v200 = vsel %vm197, %v188, 0
    %v202 = vsel %vm197, %v194, 0
    %v204 = vsel %vm197, %v196, 0
    %206 = vmatprep.subr.mxu0 0.0
    %207 = vmatpush1.xpose.msra.mxu0 %v202
    %208 = vmatprep.subr.mxu0 0.0
    %209 = vmatpush1.xpose.msra.mxu0 %v204
    %210 = vmatprep.subr.mxu0 0.0
    %211 = vmatpush1.xpose.msra.mxu0 0.0
    %212 = vmatprep.subr.mxu0 0.0
    %213 = vmatpush1.xpose.msra.mxu0 0.0
    %214 = vmatprep.subr.mxu0 0.0
    %215 = vmatpush1.xpose.msra.mxu0 0.0
    %216 = vmatprep.subr.mxu0 0.0
    %217 = vmatpush1.xpose.msra.mxu0 0.0
    %218 = vmatprep.subr.mxu0 0.0
    %219 = vmatpush1.xpose.msra.mxu0 0.0
    %220 = vmatprep.subr.mxu0 0.0
    %221 = vmatpush1.xpose.msra.mxu0 0.0
    %222 = vmatprep.subr.mxu0 0.0
    %223 = vmatpush1.xpose.msra.mxu0 0.0
    %224 = vmatprep.subr.mxu0 0.0
    %225 = vmatpush1.xpose.msra.mxu0 0.0
    %226 = vmatprep.subr.mxu0 0.0
    %227 = vmatpush1.xpose.msra.mxu0 0.0
    %228 = vmatprep.subr.mxu0 0.0
    %229 = vmatpush1.xpose.msra.mxu0 0.0
    %230 = vmatprep.subr.mxu0 0.0
    %231 = vmatpush1.xpose.msra.mxu0 0.0
    %232 = vmatprep.subr.mxu0 0.0
    %233 = vmatpush1.xpose.msra.mxu0 0.0
    %234 = vmatprep.subr.mxu0 0.0
    %235 = vmatpush1.xpose.msra.mxu0 0.0
    %236 = vmatprep.subr.mxu0 0.0
    %237 = vmatpush1.xpose.msra.mxu0 0.0
    %238 = vmatprep.subr.mxu0 0.0
    %239 = vmatpush1.xpose.msra.mxu0 0.0
    %240 = vmatprep.subr.mxu0 0.0
    %241 = vmatpush1.xpose.msra.mxu0 0.0
    %242 = vmatprep.subr.mxu0 0.0
    %243 = vmatpush1.xpose.msra.mxu0 0.0
    %244 = vmatprep.subr.mxu0 0.0
    %245 = vmatpush1.xpose.msra.mxu0 0.0
    %246 = vmatprep.subr.mxu0 0.0
    %247 = vmatpush1.xpose.msra.mxu0 0.0
    %248 = vmatprep.subr.mxu0 0.0
    %249 = vmatpush1.xpose.msra.mxu0 0.0
    %250 = vmatprep.subr.mxu0 0.0
    %251 = vmatpush1.xpose.msra.mxu0 0.0
    %252 = vmatprep.subr.mxu0 0.0
    %253 = vmatpush1.xpose.msra.mxu0 0.0
    %254 = vmatprep.subr.mxu0 0.0
    %255 = vmatpush1.xpose.msra.mxu0 0.0
    %256 = vmatprep.subr.mxu0 0.0
    %257 = vmatpush1.xpose.msra.mxu0 0.0
    %258 = vmatprep.subr.mxu0 0.0
    %259 = vmatpush1.xpose.msra.mxu0 0.0
    %260 = vmatprep.subr.mxu0 0.0
    %261 = vmatpush1.xpose.msra.mxu0 0.0
    %262 = vmatprep.subr.mxu0 0.0
    %263 = vmatpush1.xpose.msra.mxu0 0.0
    %264 = vmatprep.subr.mxu0 0.0
    %265 = vmatpush1.xpose.msra.mxu0 0.0
    %266 = vmatprep.subr.mxu0 0.0
    %267 = vmatpush1.xpose.msra.mxu0 0.0
    %268 = vmatprep.subr.mxu0 0.0
    %269 = vmatpush1.xpose.msra.mxu0 0.0
    %270 = vmatprep.mubr.f32.mxu0 0.0
    %271 = vmatmul.mubr.f32.gmra.mrb[0].mxu0 %v198
    %v272 = vpop.f32.mrb[0].mxu0
    %v273 = vadd.f32 %v73, %v272
    %v274 = vpop.f32.mrb[0].mxu0
    %275 = vmatprep.mubr.f32.mxu0 0.0
    %276 = vmatmul.mubr.f32.gmra.mrb[0].mxu0 %v200
    %v277 = vpop.f32.mrb[0].mxu0
    %v278 = vadd.f32 %v74, %v277
    %v279 = vpop.f32.mrb[0].mxu0
    %280 = vdwg.mxu0
    %v281 = vsel %vm197, %v273, -inf
    %282 = vmax.xlane.f32.xlu0 %v281
    %v283 = vpop.xlane.xlu0 %282
    %v284 = vsel %vm197, %v278, -inf
    %285 = vmax.xlane.f32.xlu0 %v284
    %v286 = vpop.xlane.xlu0 %285
    %v287 = vsub.f32 %v273, %v283
    %v288 = vsub.f32 %v278, %v286
    %v289 = vmul.f32 %v287, 1.442695
    %v290 = vpow.pop %v289
    %v291 = vmul.f32 %v288, 1.442695
    %v292 = vpow.pop %v291
    %v293 = vsel %vm197, %v290, 0.0
    %294 = vadd.xlane.f32.xlu0 %v293
    %v295 = vpop.xlane.xlu0 %294
    %v296 = vsel %vm197, %v292, 0.0
    %297 = vadd.xlane.f32.xlu0 %v296
    %v298 = vpop.xlane.xlu0 %297
    %v299 = vrcp.pop %v295
    %v300 = vmul.f32 %v290, %v299
    %v301 = vrcp.pop %v298
    %v302 = vmul.f32 %v292, %v301
    %303 = vrot.lane.b32.xlu0 %v183, 64
    %v304 = vpop.permute.xlu0 %303
    %305 = vrot.lane.b32.xlu0 %v188, 64
    %v306 = vpop.permute.xlu0 %305
    %v310 = vsel %vm197, %v300, 0
    %v313 = vsel %vm197, %v302, 0
    %315 = vmatprep.subr.mxu0 0.0
    %316 = vmatpush1.msra.mxu0 %v304
    %317 = vmatprep.subr.mxu0 0.0
    %318 = vmatpush1.msra.mxu0 %v306
    %319 = vmatprep.subr.mxu0 0.0
    %320 = vmatpush1.msra.mxu0 0.0
    %321 = vmatprep.subr.mxu0 0.0
    %322 = vmatpush1.msra.mxu0 0.0
    %323 = vmatprep.subr.mxu0 0.0
    %324 = vmatpush1.msra.mxu0 0.0
    %325 = vmatprep.subr.mxu0 0.0
    %326 = vmatpush1.msra.mxu0 0.0
    %327 = vmatprep.subr.mxu0 0.0
    %328 = vmatpush1.msra.mxu0 0.0
    %329 = vmatprep.subr.mxu0 0.0
    %330 = vmatpush1.msra.mxu0 0.0
    %331 = vmatprep.subr.mxu0 0.0
    %332 = vmatpush1.msra.mxu0 0.0
    %333 = vmatprep.subr.mxu0 0.0
    %334 = vmatpush1.msra.mxu0 0.0
    %335 = vmatprep.subr.mxu0 0.0
    %336 = vmatpush1.msra.mxu0 0.0
    %337 = vmatprep.subr.mxu0 0.0
    %338 = vmatpush1.msra.mxu0 0.0
    %339 = vmatprep.subr.mxu0 0.0
    %340 = vmatpush1.msra.mxu0 0.0
    %341 = vmatprep.subr.mxu0 0.0
    %342 = vmatpush1.msra.mxu0 0.0
    %343 = vmatprep.subr.mxu0 0.0
    %344 = vmatpush1.msra.mxu0 0.0
    %345 = vmatprep.subr.mxu0 0.0
    %346 = vmatpush1.msra.mxu0 0.0
    %347 = vmatprep.subr.mxu0 0.0
    %348 = vmatpush1.msra.mxu0 0.0
    %349 = vmatprep.subr.mxu0 0.0
    %350 = vmatpush1.msra.mxu0 0.0
    %351 = vmatprep.subr.mxu0 0.0
    %352 = vmatpush1.msra.mxu0 0.0
    %353 = vmatprep.subr.mxu0 0.0
    %354 = vmatpush1.msra.mxu0 0.0
    %355 = vmatprep.subr.mxu0 0.0
    %356 = vmatpush1.msra.mxu0 0.0
    %357 = vmatprep.subr.mxu0 0.0
    %358 = vmatpush1.msra.mxu0 0.0
    %359 = vmatprep.subr.mxu0 0.0
    %360 = vmatpush1.msra.mxu0 0.0
    %361 = vmatprep.subr.mxu0 0.0
    %362 = vmatpush1.msra.mxu0 0.0
    %363 = vmatprep.subr.mxu0 0.0
    %364 = vmatpush1.msra.mxu0 0.0
    %365 = vmatprep.subr.mxu0 0.0
    %366 = vmatpush1.msra.mxu0 0.0
    %367 = vmatprep.subr.mxu0 0.0
    %368 = vmatpush1.msra.mxu0 0.0
    %369 = vmatprep.subr.mxu0 0.0
    %370 = vmatpush1.msra.mxu0 0.0
    %371 = vmatprep.subr.mxu0 0.0
    %372 = vmatpush1.msra.mxu0 0.0
    %373 = vmatprep.subr.mxu0 0.0
    %374 = vmatpush1.msra.mxu0 0.0
    %375 = vmatprep.subr.mxu0 0.0
    %376 = vmatpush1.msra.mxu0 0.0
    %377 = vmatprep.subr.mxu0 0.0
    %378 = vmatpush1.msra.mxu0 0.0
    %379 = vmatprep.mubr.f32.mxu0 0.0
    %380 = vmatmul.mubr.f32.gmra.mrb[0].mxu0 %v310
    %v381 = vpop.f32.mrb[0].mxu0
    %v382 = vadd.f32 0.0, %v381
    %v383 = vpop.f32.mrb[0].mxu0
    %384 = vmatprep.mubr.f32.mxu0 0.0
    %385 = vmatmul.mubr.f32.gmra.mrb[0].mxu0 %v313
    %v386 = vpop.f32.mrb[0].mxu0
    %v387 = vadd.f32 0.0, %v386
    %v388 = vpop.f32.mrb[0].mxu0
    %389 = vdwg.mxu0
    %390 = vrot.lane.b32.xlu0 %v183, 112
    %v391 = vpop.permute.xlu0 %390
    %392 = vrot.lane.b32.xlu0 %v188, 112
    %v393 = vpop.permute.xlu0 %392
    %394 = vrot.lane.b32.xlu0 %v183, 80
    %v395 = vpop.permute.xlu0 %394
    %396 = vrot.lane.b32.xlu0 %v188, 80
    %v397 = vpop.permute.xlu0 %396
    %v398 = vsel %vm197, %v391, 0
    %v400 = vsel %vm197, %v393, 0
    %v402 = vsel %vm197, %v395, 0
    %v404 = vsel %vm197, %v397, 0
    %406 = vmatprep.subr.mxu0 0.0
    %407 = vmatpush1.xpose.msra.mxu0 %v402
    %408 = vmatprep.subr.mxu0 0.0
    %409 = vmatpush1.xpose.msra.mxu0 %v404
    %410 = vmatprep.subr.mxu0 0.0
    %411 = vmatpush1.xpose.msra.mxu0 0.0
    %412 = vmatprep.subr.mxu0 0.0
    %413 = vmatpush1.xpose.msra.mxu0 0.0
    %414 = vmatprep.subr.mxu0 0.0
    %415 = vmatpush1.xpose.msra.mxu0 0.0
    %416 = vmatprep.subr.mxu0 0.0
    %417 = vmatpush1.xpose.msra.mxu0 0.0
    %418 = vmatprep.subr.mxu0 0.0
    %419 = vmatpush1.xpose.msra.mxu0 0.0
    %420 = vmatprep.subr.mxu0 0.0
    %421 = vmatpush1.xpose.msra.mxu0 0.0
    %422 = vmatprep.subr.mxu0 0.0
    %423 = vmatpush1.xpose.msra.mxu0 0.0
    %424 = vmatprep.subr.mxu0 0.0
    %425 = vmatpush1.xpose.msra.mxu0 0.0
    %426 = vmatprep.subr.mxu0 0.0
    %427 = vmatpush1.xpose.msra.mxu0 0.0
    %428 = vmatprep.subr.mxu0 0.0
    %429 = vmatpush1.xpose.msra.mxu0 0.0
    %430 = vmatprep.subr.mxu0 0.0
    %431 = vmatpush1.xpose.msra.mxu0 0.0
    %432 = vmatprep.subr.mxu0 0.0
    %433 = vmatpush1.xpose.msra.mxu0 0.0
    %434 = vmatprep.subr.mxu0 0.0
    %435 = vmatpush1.xpose.msra.mxu0 0.0
    %436 = vmatprep.subr.mxu0 0.0
    %437 = vmatpush1.xpose.msra.mxu0 0.0
    %438 = vmatprep.subr.mxu0 0.0
    %439 = vmatpush1.xpose.msra.mxu0 0.0
    %440 = vmatprep.subr.mxu0 0.0
    %441 = vmatpush1.xpose.msra.mxu0 0.0
    %442 = vmatprep.subr.mxu0 0.0
    %443 = vmatpush1.xpose.msra.mxu0 0.0
    %444 = vmatprep.subr.mxu0 0.0
    %445 = vmatpush1.xpose.msra.mxu0 0.0
    %446 = vmatprep.subr.mxu0 0.0
    %447 = vmatpush1.xpose.msra.mxu0 0.0
    %448 = vmatprep.subr.mxu0 0.0
    %449 = vmatpush1.xpose.msra.mxu0 0.0
    %450 = vmatprep.subr.mxu0 0.0
    %451 = vmatpush1.xpose.msra.mxu0 0.0
    %452 = vmatprep.subr.mxu0 0.0
    %453 = vmatpush1.xpose.msra.mxu0 0.0
    %454 = vmatprep.subr.mxu0 0.0
    %455 = vmatpush1.xpose.msra.mxu0 0.0
    %456 = vmatprep.subr.mxu0 0.0
    %457 = vmatpush1.xpose.msra.mxu0 0.0
    %458 = vmatprep.subr.mxu0 0.0
    %459 = vmatpush1.xpose.msra.mxu0 0.0
    %460 = vmatprep.subr.mxu0 0.0
    %461 = vmatpush1.xpose.msra.mxu0 0.0
    %462 = vmatprep.subr.mxu0 0.0
    %463 = vmatpush1.xpose.msra.mxu0 0.0
    %464 = vmatprep.subr.mxu0 0.0
    %465 = vmatpush1.xpose.msra.mxu0 0.0
    %466 = vmatprep.subr.mxu0 0.0
    %467 = vmatpush1.xpose.msra.mxu0 0.0
    %468 = vmatprep.subr.mxu0 0.0
    %469 = vmatpush1.xpose.msra.mxu0 0.0
    %470 = vmatprep.mubr.f32.mxu0 0.0
    %471 = vmatmul.mubr.f32.gmra.mrb[0].mxu0 %v398
    %v472 = vpop.f32.mrb[0].mxu0
    %v473 = vadd.f32 %v73, %v472
    %v474 = vpop.f32.mrb[0].mxu0
    %475 = vmatprep.mubr.f32.mxu0 0.0
    %476 = vmatmul.mubr.f32.gmra.mrb[0].mxu0 %v400
    %v477 = vpop.f32.mrb[0].mxu0
    %v478 = vadd.f32 %v74, %v477
    %v479 = vpop.f32.mrb[0].mxu0
    %480 = vdwg.mxu0
    %v481 = vsel %vm197, %v473, -inf
    %482 = vmax.xlane.f32.xlu0 %v481
    %v483 = vpop.xlane.xlu0 %482
    %v484 = vsel %vm197, %v478, -inf
    %485 = vmax.xlane.f32.xlu0 %v484
    %v486 = vpop.xlane.xlu0 %485
    %v487 = vsub.f32 %v473, %v483
    %v488 = vsub.f32 %v478, %v486
    %v489 = vmul.f32 %v487, 1.442695
    %v490 = vpow.pop %v489
    %v491 = vmul.f32 %v488, 1.442695
    %v492 = vpow.pop %v491
    %v493 = vsel %vm197, %v490, 0.0
    %494 = vadd.xlane.f32.xlu0 %v493
    %v495 = vpop.xlane.xlu0 %494
    %v496 = vsel %vm197, %v492, 0.0
    %497 = vadd.xlane.f32.xlu0 %v496
    %v498 = vpop.xlane.xlu0 %497
    %v499 = vrcp.pop %v495
    %v500 = vmul.f32 %v490, %v499
    %v501 = vrcp.pop %v498
    %v502 = vmul.f32 %v492, %v501
    %503 = vrot.lane.b32.xlu0 %v183, 48
    %v504 = vpop.permute.xlu0 %503
    %505 = vrot.lane.b32.xlu0 %v188, 48
    %v506 = vpop.permute.xlu0 %505
    %v510 = vsel %vm197, %v500, 0
    %v513 = vsel %vm197, %v502, 0
    %515 = vmatprep.subr.mxu0 0.0
    %516 = vmatpush1.msra.mxu0 %v504
    %517 = vmatprep.subr.mxu0 0.0
    %518 = vmatpush1.msra.mxu0 %v506
    %519 = vmatprep.subr.mxu0 0.0
    %520 = vmatpush1.msra.mxu0 0.0
    %521 = vmatprep.subr.mxu0 0.0
    %522 = vmatpush1.msra.mxu0 0.0
    %523 = vmatprep.subr.mxu0 0.0
    %524 = vmatpush1.msra.mxu0 0.0
    %525 = vmatprep.subr.mxu0 0.0
    %526 = vmatpush1.msra.mxu0 0.0
    %527 = vmatprep.subr.mxu0 0.0
    %528 = vmatpush1.msra.mxu0 0.0
    %529 = vmatprep.subr.mxu0 0.0
    %530 = vmatpush1.msra.mxu0 0.0
    %531 = vmatprep.subr.mxu0 0.0
    %532 = vmatpush1.msra.mxu0 0.0
    %533 = vmatprep.subr.mxu0 0.0
    %534 = vmatpush1.msra.mxu0 0.0
    %535 = vmatprep.subr.mxu0 0.0
    %536 = vmatpush1.msra.mxu0 0.0
    %537 = vmatprep.subr.mxu0 0.0
    %538 = vmatpush1.msra.mxu0 0.0
    %539 = vmatprep.subr.mxu0 0.0
    %540 = vmatpush1.msra.mxu0 0.0
    %541 = vmatprep.subr.mxu0 0.0
    %542 = vmatpush1.msra.mxu0 0.0
    %543 = vmatprep.subr.mxu0 0.0
    %544 = vmatpush1.msra.mxu0 0.0
    %545 = vmatprep.subr.mxu0 0.0
    %546 = vmatpush1.msra.mxu0 0.0
    %547 = vmatprep.subr.mxu0 0.0
    %548 = vmatpush1.msra.mxu0 0.0
    %549 = vmatprep.subr.mxu0 0.0
    %550 = vmatpush1.msra.mxu0 0.0
    %551 = vmatprep.subr.mxu0 0.0
    %552 = vmatpush1.msra.mxu0 0.0
    %553 = vmatprep.subr.mxu0 0.0
    %554 = vmatpush1.msra.mxu0 0.0
    %555 = vmatprep.subr.mxu0 0.0
    %556 = vmatpush1.msra.mxu0 0.0
    %557 = vmatprep.subr.mxu0 0.0
    %558 = vmatpush1.msra.mxu0 0.0
    %559 = vmatprep.subr.mxu0 0.0
    %560 = vmatpush1.msra.mxu0 0.0
    %561 = vmatprep.subr.mxu0 0.0
    %562 = vmatpush1.msra.mxu0 0.0
    %563 = vmatprep.subr.mxu0 0.0
    %564 = vmatpush1.msra.mxu0 0.0
    %565 = vmatprep.subr.mxu0 0.0
    %566 = vmatpush1.msra.mxu0 0.0
    %567 = vmatprep.subr.mxu0 0.0
    %568 = vmatpush1.msra.mxu0 0.0
    %569 = vmatprep.subr.mxu0 0.0
    %570 = vmatpush1.msra.mxu0 0.0
    %571 = vmatprep.subr.mxu0 0.0
    %572 = vmatpush1.msra.mxu0 0.0
    %573 = vmatprep.subr.mxu0 0.0
    %574 = vmatpush1.msra.mxu0 0.0
    %575 = vmatprep.subr.mxu0 0.0
    %576 = vmatpush1.msra.mxu0 0.0
    %577 = vmatprep.subr.mxu0 0.0
    %578 = vmatpush1.msra.mxu0 0.0
    %579 = vmatprep.mubr.f32.mxu0 0.0
    %580 = vmatmul.mubr.f32.gmra.mrb[0].mxu0 %v510
    %v581 = vpop.f32.mrb[0].mxu0
    %v582 = vadd.f32 0.0, %v581
    %v583 = vpop.f32.mrb[0].mxu0
    %584 = vmatprep.mubr.f32.mxu0 0.0
    %585 = vmatmul.mubr.f32.gmra.mrb[0].mxu0 %v513
    %v586 = vpop.f32.mrb[0].mxu0
    %v587 = vadd.f32 0.0, %v586
    %v588 = vpop.f32.mrb[0].mxu0
    %589 = vdwg.mxu0
    %592 = vrot.lane.b32.xlu0 %v582, 16
    %v593 = vpop.permute.xlu0 %592
    %594 = vrot.lane.b32.xlu0 %v587, 16
    %v595 = vpop.permute.xlu0 %594
    %v598 = vsel %vm197, %v382, %v593
    %v599 = vsel %vm197, %v387, %v595
    %v601 = vsel %vm109, %v598, 0
    %v604 = vsel %vm109, %v599, 0
    %606 = vmatprep.subr.mxu0 0.0
    %607 = vmatpush1.msra.mxu0 %v81
    %608 = vmatprep.subr.mxu0 0.0
    %609 = vmatpush1.msra.mxu0 %v82
    %610 = vmatprep.subr.mxu0 0.0
    %611 = vmatpush1.msra.mxu0 %v83
    %612 = vmatprep.subr.mxu0 0.0
    %613 = vmatpush1.msra.mxu0 %v84
    %614 = vmatprep.subr.mxu0 0.0
    %615 = vmatpush1.msra.mxu0 0.0
    %616 = vmatprep.subr.mxu0 0.0
    %617 = vmatpush1.msra.mxu0 0.0
    %618 = vmatprep.subr.mxu0 0.0
    %619 = vmatpush1.msra.mxu0 0.0
    %620 = vmatprep.subr.mxu0 0.0
    %621 = vmatpush1.msra.mxu0 0.0
    %622 = vmatprep.subr.mxu0 0.0
    %623 = vmatpush1.msra.mxu0 0.0
    %624 = vmatprep.subr.mxu0 0.0
    %625 = vmatpush1.msra.mxu0 0.0
    %626 = vmatprep.subr.mxu0 0.0
    %627 = vmatpush1.msra.mxu0 0.0
    %628 = vmatprep.subr.mxu0 0.0
    %629 = vmatpush1.msra.mxu0 0.0
    %630 = vmatprep.subr.mxu0 0.0
    %631 = vmatpush1.msra.mxu0 0.0
    %632 = vmatprep.subr.mxu0 0.0
    %633 = vmatpush1.msra.mxu0 0.0
    %634 = vmatprep.subr.mxu0 0.0
    %635 = vmatpush1.msra.mxu0 0.0
    %636 = vmatprep.subr.mxu0 0.0
    %637 = vmatpush1.msra.mxu0 0.0
    %638 = vmatprep.subr.mxu0 0.0
    %639 = vmatpush1.msra.mxu0 0.0
    %640 = vmatprep.subr.mxu0 0.0
    %641 = vmatpush1.msra.mxu0 0.0
    %642 = vmatprep.subr.mxu0 0.0
    %643 = vmatpush1.msra.mxu0 0.0
    %644 = vmatprep.subr.mxu0 0.0
    %645 = vmatpush1.msra.mxu0 0.0
    %646 = vmatprep.subr.mxu0 0.0
    %647 = vmatpush1.msra.mxu0 0.0
    %648 = vmatprep.subr.mxu0 0.0
    %649 = vmatpush1.msra.mxu0 0.0
    %650 = vmatprep.subr.mxu0 0.0
    %651 = vmatpush1.msra.mxu0 0.0
    %652 = vmatprep.subr.mxu0 0.0
    %653 = vmatpush1.msra.mxu0 0.0
    %654 = vmatprep.subr.mxu0 0.0
    %655 = vmatpush1.msra.mxu0 0.0
    %656 = vmatprep.subr.mxu0 0.0
    %657 = vmatpush1.msra.mxu0 0.0
    %658 = vmatprep.subr.mxu0 0.0
    %659 = vmatpush1.msra.mxu0 0.0
    %660 = vmatprep.subr.mxu0 0.0
    %661 = vmatpush1.msra.mxu0 0.0
    %662 = vmatprep.subr.mxu0 0.0
    %663 = vmatpush1.msra.mxu0 0.0
    %664 = vmatprep.subr.mxu0 0.0
    %665 = vmatpush1.msra.mxu0 0.0
    %666 = vmatprep.subr.mxu0 0.0
    %667 = vmatpush1.msra.mxu0 0.0
    %668 = vmatprep.subr.mxu0 0.0
    %669 = vmatpush1.msra.mxu0 0.0
    %670 = vmatprep.mubr.f32.mxu0 0.0
    %671 = vmatmul.mubr.f32.gmra.mrb[0].mxu0 %v601
    %v672 = vpop.f32.mrb[0].mxu0
    %v673 = vadd.f32 0.0, %v672
    %v674 = vpop.f32.mrb[0].mxu0
    %675 = vmatprep.mubr.f32.mxu0 0.0
    %676 = vmatmul.mubr.f32.gmra.mrb[0].mxu0 %v604
    %v677 = vpop.f32.mrb[0].mxu0
    %v678 = vadd.f32 0.0, %v677
    %v679 = vpop.f32.mrb[0].mxu0
    %680 = vdwg.mxu0
    %v681 = vlaneseq
    %v682 = vshrl.u32 %v681, 7
    %v683 = vsub.s32 0, %v682
    %v684 = vrot.slane %v98, %v683
    %v685 = vadd.f32 %v673, %v684
    %v686 = vadd.f32 %v678, %v684
    %v687 = vadd.f32 %v75, %v685
    %v688 = vadd.f32 %v76, %v686
    %v689 = vsel %vm109, %v687, 0.0
    %690 = vadd.xlane.f32.xlu0 %v689
    %v691 = vpop.xlane.xlu0 %690
    %v692 = vsel %vm109, %v688, 0.0
    %693 = vadd.xlane.f32.xlu0 %v692
    %v694 = vpop.xlane.xlu0 %693
    %v695 = vrcp.pop 32.0
    %v696 = vmul.f32 %v691, %v695
    %v697 = vmul.f32 %v694, %v695
    %v698 = vsub.f32 %v687, %v696
    %v699 = vsub.f32 %v688, %v697
    %v700 = vmul.f32 %v698, %v698
    %v701 = vmul.f32 %v699, %v699
    %v702 = vsel %vm109, %v700, 0.0
    %703 = vadd.xlane.f32.xlu0 %v702
    %v704 = vpop.xlane.xlu0 %703
    %v705 = vsel %vm109, %v701, 0.0
    %706 = vadd.xlane.f32.xlu0 %v705
    %v707 = vpop.xlane.xlu0 %706
    %v708 = vmul.f32 %v704, %v695
    %v709 = vmul.f32 %v707, %v695
    %v710 = vadd.f32 %v708, 1e-05
    %v711 = vadd.f32 %v709, 1e-05
    %v712 = vrsqrt.pop %v710
    %v713 = vrsqrt.pop %v711
    %v714 = vmul.f32 %v698, %v712
    %v715 = vmul.f32 %v699, %v713
    %v716 = vlaneseq
    %v717 = vshrl.u32 %v716, 7
    %v718 = vsub.s32 0, %v717
    %v719 = vrot.slane %v101, %v718
    %v720 = vmul.f32 %v714, %v719
    %v721 = vmul.f32 %v715, %v719
    %v722 = vlaneseq
    %v723 = vshrl.u32 %v722, 7
    %v724 = vsub.s32 0, %v723
    %v725 = vrot.slane %v102, %v724
    %v726 = vadd.f32 %v720, %v725
    %v727 = vadd.f32 %v721, %v725
    %v728 = vlaneseq
    %v729 = vshrl.u32 %v728, 7
    %v730 = vsub.s32 0, %v729
    %v731 = vrot.slane %v99, %v730
    %v733 = vsel %vm109, %v726, 0
    %v736 = vsel %vm109, %v727, 0
    %738 = vmatprep.subr.mxu0 0.0
    %739 = vmatpush1.msra.mxu0 %v85
    %740 = vmatprep.subr.mxu0 0.0
    %741 = vmatpush1.msra.mxu0 %v86
    %742 = vmatprep.subr.mxu0 0.0
    %743 = vmatpush1.msra.mxu0 %v87
    %744 = vmatprep.subr.mxu0 0.0
    %745 = vmatpush1.msra.mxu0 %v88
    %746 = vmatprep.subr.mxu0 0.0
    %747 = vmatpush1.msra.mxu0 0.0
    %748 = vmatprep.subr.mxu0 0.0
    %749 = vmatpush1.msra.mxu0 0.0
    %750 = vmatprep.subr.mxu0 0.0
    %751 = vmatpush1.msra.mxu0 0.0
    %752 = vmatprep.subr.mxu0 0.0
    %753 = vmatpush1.msra.mxu0 0.0
    %754 = vmatprep.subr.mxu0 0.0
    %755 = vmatpush1.msra.mxu0 0.0
    %756 = vmatprep.subr.mxu0 0.0
    %757 = vmatpush1.msra.mxu0 0.0
    %758 = vmatprep.subr.mxu0 0.0
    %759 = vmatpush1.msra.mxu0 0.0
    %760 = vmatprep.subr.mxu0 0.0
    %761 = vmatpush1.msra.mxu0 0.0
    %762 = vmatprep.subr.mxu0 0.0
    %763 = vmatpush1.msra.mxu0 0.0
    %764 = vmatprep.subr.mxu0 0.0
    %765 = vmatpush1.msra.mxu0 0.0
    %766 = vmatprep.subr.mxu0 0.0
    %767 = vmatpush1.msra.mxu0 0.0
    %768 = vmatprep.subr.mxu0 0.0
    %769 = vmatpush1.msra.mxu0 0.0
    %770 = vmatprep.subr.mxu0 0.0
    %771 = vmatpush1.msra.mxu0 0.0
    %772 = vmatprep.subr.mxu0 0.0
    %773 = vmatpush1.msra.mxu0 0.0
    %774 = vmatprep.subr.mxu0 0.0
    %775 = vmatpush1.msra.mxu0 0.0
    %776 = vmatprep.subr.mxu0 0.0
    %777 = vmatpush1.msra.mxu0 0.0
    %778 = vmatprep.subr.mxu0 0.0
    %779 = vmatpush1.msra.mxu0 0.0
    %780 = vmatprep.subr.mxu0 0.0
    %781 = vmatpush1.msra.mxu0 0.0
    %782 = vmatprep.subr.mxu0 0.0
    %783 = vmatpush1.msra.mxu0 0.0
    %784 = vmatprep.subr.mxu0 0.0
    %785 = vmatpush1.msra.mxu0 0.0
    %786 = vmatprep.subr.mxu0 0.0
    %787 = vmatpush1.msra.mxu0 0.0
    %788 = vmatprep.subr.mxu0 0.0
    %789 = vmatpush1.msra.mxu0 0.0
    %790 = vmatprep.subr.mxu0 0.0
    %791 = vmatpush1.msra.mxu0 0.0
    %792 = vmatprep.subr.mxu0 0.0
    %793 = vmatpush1.msra.mxu0 0.0
    %794 = vmatprep.subr.mxu0 0.0
    %795 = vmatpush1.msra.mxu0 0.0
    %796 = vmatprep.subr.mxu0 0.0
    %797 = vmatpush1.msra.mxu0 0.0
    %798 = vmatprep.subr.mxu0 0.0
    %799 = vmatpush1.msra.mxu0 0.0
    %800 = vmatprep.subr.mxu0 0.0
    %801 = vmatpush1.msra.mxu0 0.0
    %802 = vmatprep.mubr.f32.mxu0 0.0
    %803 = vmatmul.mubr.f32.gmra.mrb[0].mxu0 %v733
    %v804 = vpop.f32.mrb[0].mxu0
    %v805 = vadd.f32 %v731, %v804
    %v806 = vpop.f32.mrb[0].mxu0
    %807 = vmatprep.mubr.f32.mxu0 0.0
    %808 = vmatmul.mubr.f32.gmra.mrb[0].mxu0 %v736
    %v809 = vpop.f32.mrb[0].mxu0
    %v810 = vadd.f32 %v731, %v809
    %v811 = vpop.f32.mrb[0].mxu0
    %812 = vdwg.mxu0
    %v813 = vmax.f32 %v805, 0.0
    %v814 = vmax.f32 %v810, 0.0
    %vm815 = vcmask 523264
    %v817 = vsel %vm815, %v813, 0
    %v820 = vsel %vm815, %v814, 0
    %822 = vmatprep.subr.mxu0 0.0
    %823 = vmatpush1.msra.mxu0 %v89
    %824 = vmatprep.subr.mxu0 0.0
    %825 = vmatpush1.msra.mxu0 %v90
    %826 = vmatprep.subr.mxu0 0.0
    %827 = vmatpush1.msra.mxu0 %v91
    %828 = vmatprep.subr.mxu0 0.0
    %829 = vmatpush1.msra.mxu0 %v92
    %830 = vmatprep.subr.mxu0 0.0
    %831 = vmatpush1.msra.mxu0 %v93
    %832 = vmatprep.subr.mxu0 0.0
    %833 = vmatpush1.msra.mxu0 %v94
    %834 = vmatprep.subr.mxu0 0.0
    %835 = vmatpush1.msra.mxu0 %v95
    %836 = vmatprep.subr.mxu0 0.0
    %837 = vmatpush1.msra.mxu0 %v96
    %838 = vmatprep.subr.mxu0 0.0
    %839 = vmatpush1.msra.mxu0 0.0
    %840 = vmatprep.subr.mxu0 0.0
    %841 = vmatpush1.msra.mxu0 0.0
    %842 = vmatprep.subr.mxu0 0.0
    %843 = vmatpush1.msra.mxu0 0.0
    %844 = vmatprep.subr.mxu0 0.0
    %845 = vmatpush1.msra.mxu0 0.0
    %846 = vmatprep.subr.mxu0 0.0
    %847 = vmatpush1.msra.mxu0 0.0
    %848 = vmatprep.subr.mxu0 0.0
    %849 = vmatpush1.msra.mxu0 0.0
    %850 = vmatprep.subr.mxu0 0.0
    %851 = vmatpush1.msra.mxu0 0.0
    %852 = vmatprep.subr.mxu0 0.0
    %853 = vmatpush1.msra.mxu0 0.0
    %854 = vmatprep.subr.mxu0 0.0
    %855 = vmatpush1.msra.mxu0 0.0
    %856 = vmatprep.subr.mxu0 0.0
    %857 = vmatpush1.msra.mxu0 0.0
    %858 = vmatprep.subr.mxu0 0.0
    %859 = vmatpush1.msra.mxu0 0.0
    %860 = vmatprep.subr.mxu0 0.0
    %861 = vmatpush1.msra.mxu0 0.0
    %862 = vmatprep.subr.mxu0 0.0
    %863 = vmatpush1.msra.mxu0 0.0
    %864 = vmatprep.subr.mxu0 0.0
    %865 = vmatpush1.msra.mxu0 0.0
    %866 = vmatprep.subr.mxu0 0.0
    %867 = vmatpush1.msra.mxu0 0.0
    %868 = vmatprep.subr.mxu0 0.0
    %869 = vmatpush1.msra.mxu0 0.0
    %870 = vmatprep.subr.mxu0 0.0
    %871 = vmatpush1.msra.mxu0 0.0
    %872 = vmatprep.subr.mxu0 0.0
    %873 = vmatpush1.msra.mxu0 0.0
    %874 = vmatprep.subr.mxu0 0.0
    %875 = vmatpush1.msra.mxu0 0.0
    %876 = vmatprep.subr.mxu0 0.0
    %877 = vmatpush1.msra.mxu0 0.0
    %878 = vmatprep.subr.mxu0 0.0
    %879 = vmatpush1.msra.mxu0 0.0
    %880 = vmatprep.subr.mxu0 0.0
    %881 = vmatpush1.msra.mxu0 0.0
    %882 = vmatprep.subr.mxu0 0.0
    %883 = vmatpush1.msra.mxu0 0.0
    %884 = vmatprep.subr.mxu0 0.0
    %885 = vmatpush1.msra.mxu0 0.0
    %886 = vmatprep.mubr.f32.mxu0 0.0
    %887 = vmatmul.mubr.f32.gmra.mrb[0].mxu0 %v817
    %v888 = vpop.f32.mrb[0].mxu0
    %v889 = vadd.f32 0.0, %v888
    %v890 = vpop.f32.mrb[0].mxu0
    %891 = vmatprep.mubr.f32.mxu0 0.0
    %892 = vmatmul.mubr.f32.gmra.mrb[0].mxu0 %v820
    %v893 = vpop.f32.mrb[0].mxu0
    %v894 = vadd.f32 0.0, %v893
    %v895 = vpop.f32.mrb[0].mxu0
    %896 = vdwg.mxu0
    %v897 = vlaneseq
    %v898 = vshrl.u32 %v897, 7
    %v899 = vsub.s32 0, %v898
    %v900 = vrot.slane %v100, %v899
    %v901 = vadd.f32 %v889, %v900
    %v902 = vadd.f32 %v894, %v900
    %v903 = vadd.f32 %v726, %v901
    %v904 = vadd.f32 %v727, %v902
    %v905 = vsel %vm109, %v903, 0.0
    %906 = vadd.xlane.f32.xlu0 %v905
    %v907 = vpop.xlane.xlu0 %906
    %v908 = vsel %vm109, %v904, 0.0
    %909 = vadd.xlane.f32.xlu0 %v908
    %v910 = vpop.xlane.xlu0 %909
    %v911 = vmul.f32 %v907, %v695
    %v912 = vmul.f32 %v910, %v695
    %v913 = vsub.f32 %v903, %v911
    %v914 = vsub.f32 %v904, %v912
    %v915 = vmul.f32 %v913, %v913
    %v916 = vmul.f32 %v914, %v914
    %v917 = vsel %vm109, %v915, 0.0
    %918 = vadd.xlane.f32.xlu0 %v917
    %v919 = vpop.xlane.xlu0 %918
    %v920 = vsel %vm109, %v916, 0.0
    %921 = vadd.xlane.f32.xlu0 %v920
    %v922 = vpop.xlane.xlu0 %921
    %v923 = vmul.f32 %v919, %v695
    %v924 = vmul.f32 %v922, %v695
    %v925 = vadd.f32 %v923, 1e-05
    %v926 = vadd.f32 %v924, 1e-05
    %v927 = vrsqrt.pop %v925
    %v928 = vrsqrt.pop %v926
    %v929 = vmul.f32 %v913, %v927
    %v930 = vmul.f32 %v914, %v928
    %v931 = vlaneseq
    %v932 = vshrl.u32 %v931, 7
    %v933 = vsub.s32 0, %v932
    %v934 = vrot.slane %v103, %v933
    %v935 = vmul.f32 %v929, %v934
    %v936 = vmul.f32 %v930, %v934
    %v937 = vlaneseq
    %v938 = vshrl.u32 %v937, 7
    %v939 = vsub.s32 0, %v938
    %v940 = vrot.slane %v104, %v939
    %v941 = vadd.f32 %v935, %v940
    %v942 = vadd.f32 %v936, %v940
    %s943 = scalar_lea.vmem [#allocation7], 160
    %v944 = vld [vmem:[%s943] sm:$0xff]
    %v945 = vld [vmem:[%s943 + $0x8] sm:$0xff]
    %v946 = vld [vmem:[%s943 + $0x10] sm:$0xff]
    %v947 = vld [vmem:[%s943 + $0x18] sm:$0xff]
    %v948 = vld [vmem:[%s943 + $0x20] sm:$0xff]
    %v949 = vld [vmem:[%s943 + $0x28] sm:$0xff]
    %v950 = vld [vmem:[%s943 + $0x30] sm:$0xff]
    %v951 = vld [vmem:[%s943 + $0x38] sm:$0xff]
    %v952 = vld [vmem:[%s943 + $0x40] sm:$0xff]
    %v953 = vld [vmem:[%s943 + $0x48] sm:$0xff]
    %v954 = vld [vmem:[%s943 + $0x50] sm:$0xff]
    %v955 = vld [vmem:[%s943 + $0x58] sm:$0xff]
    %v956 = vld [vmem:[%s943 + $0x60] sm:$0xff]
    %v957 = vld [vmem:[%s943 + $0x68] sm:$0xff]
    %v958 = vld [vmem:[%s943 + $0x70] sm:$0xff]
    %v959 = vld [vmem:[%s943 + $0x78] sm:$0xff]
    %v960 = vld [vmem:[%s943 + $0x80] sm:$0xff]
    %v961 = vld [vmem:[%s943 + $0x88] sm:$0xff]
    %v962 = vld [vmem:[%s943 + $0x90] sm:$0xff]
    %v963 = vld [vmem:[%s943 + $0x98] sm:$0xff]
    %s964 = scalar_lea.vmem [#allocation8], 8
    %v965 = vld [vmem:[%s964] sm:$0x1]
    %v966 = vld [vmem:[%s964 + $0x1] sm:$0x1]
    %v967 = vld [vmem:[%s964 + $0x2] sm:$0x1]
    %v968 = vld [vmem:[%s964 + $0x3] sm:$0x1]
    %v969 = vld [vmem:[%s964 + $0x4] sm:$0x1]
    %v970 = vld [vmem:[%s964 + $0x5] sm:$0x1]
    %v971 = vld [vmem:[%s964 + $0x6] sm:$0x1]
    %v972 = vld [vmem:[%s964 + $0x7] sm:$0x1]
    %v973 = vlaneseq
    %v974 = vshrl.u32 %v973, 7
    %v975 = vsub.s32 0, %v974
    %v976 = vrot.slane %v965, %v975
    %v978 = vsel %vm109, %v941, 0
    %v981 = vsel %vm109, %v942, 0
    %983 = vmatprep.subr.mxu0 0.0
    %984 = vmatpush1.msra.mxu0 %v944
    %985 = vmatprep.subr.mxu0 0.0
    %986 = vmatpush1.msra.mxu0 %v945
    %987 = vmatprep.subr.mxu0 0.0
    %988 = vmatpush1.msra.mxu0 %v946
    %989 = vmatprep.subr.mxu0 0.0
    %990 = vmatpush1.msra.mxu0 %v947
    %991 = vmatprep.subr.mxu0 0.0
    %992 = vmatpush1.msra.mxu0 0.0
    %993 = vmatprep.subr.mxu0 0.0
    %994 = vmatpush1.msra.mxu0 0.0
    %995 = vmatprep.subr.mxu0 0.0
    %996 = vmatpush1.msra.mxu0 0.0
    %997 = vmatprep.subr.mxu0 0.0
    %998 = vmatpush1.msra.mxu0 0.0
    %999 = vmatprep.subr.mxu0 0.0
    %1000 = vmatpush1.msra.mxu0 0.0
    %1001 = vmatprep.subr.mxu0 0.0
    %1002 = vmatpush1.msra.mxu0 0.0
    %1003 = vmatprep.subr.mxu0 0.0
    %1004 = vmatpush1.msra.mxu0 0.0
    %1005 = vmatprep.subr.mxu0 0.0
    %1006 = vmatpush1.msra.mxu0 0.0
    %1007 = vmatprep.subr.mxu0 0.0
    %1008 = vmatpush1.msra.mxu0 0.0
    %1009 = vmatprep.subr.mxu0 0.0
    %1010 = vmatpush1.msra.mxu0 0.0
    %1011 = vmatprep.subr.mxu0 0.0
    %1012 = vmatpush1.msra.mxu0 0.0
    %1013 = vmatprep.subr.mxu0 0.0
    %1014 = vmatpush1.msra.mxu0 0.0
    %1015 = vmatprep.subr.mxu0 0.0
    %1016 = vmatpush1.msra.mxu0 0.0
    %1017 = vmatprep.subr.mxu0 0.0
    %1018 = vmatpush1.msra.mxu0 0.0
    %1019 = vmatprep.subr.mxu0 0.0
    %1020 = vmatpush1.msra.mxu0 0.0
    %1021 = vmatprep.subr.mxu0 0.0
    %1022 = vmatpush1.msra.mxu0 0.0
    %1023 = vmatprep.subr.mxu0 0.0
    %1024 = vmatpush1.msra.mxu0 0.0
    %1025 = vmatprep.subr.mxu0 0.0
    %1026 = vmatpush1.msra.mxu0 0.0
    %1027 = vmatprep.subr.mxu0 0.0
    %1028 = vmatpush1.msra.mxu0 0.0
    %1029 = vmatprep.subr.mxu0 0.0
    %1030 = vmatpush1.msra.mxu0 0.0
    %1031 = vmatprep.subr.mxu0 0.0
    %1032 = vmatpush1.msra.mxu0 0.0
    %1033 = vmatprep.subr.mxu0 0.0
    %1034 = vmatpush1.msra.mxu0 0.0
    %1035 = vmatprep.subr.mxu0 0.0
    %1036 = vmatpush1.msra.mxu0 0.0
    %1037 = vmatprep.subr.mxu0 0.0
    %1038 = vmatpush1.msra.mxu0 0.0
    %1039 = vmatprep.subr.mxu0 0.0
    %1040 = vmatpush1.msra.mxu0 0.0
    %1041 = vmatprep.subr.mxu0 0.0
    %1042 = vmatpush1.msra.mxu0 0.0
    %1043 = vmatprep.subr.mxu0 0.0
    %1044 = vmatpush1.msra.mxu0 0.0
    %1045 = vmatprep.subr.mxu0 0.0
    %1046 = vmatpush1.msra.mxu0 0.0
    %1047 = vmatprep.mubr.f32.mxu0 0.0
    %1048 = vmatmul.mubr.f32.gmra.mrb[0].mxu0 %v978
    %v1049 = vpop.f32.mrb[0].mxu0
    %v1050 = vadd.f32 %v976, %v1049
    %v1051 = vpop.f32.mrb[0].mxu0
    %1052 = vmatprep.mubr.f32.mxu0 0.0
    %1053 = vmatmul.mubr.f32.gmra.mrb[0].mxu0 %v981
    %v1054 = vpop.f32.mrb[0].mxu0
    %v1055 = vadd.f32 %v976, %v1054
    %v1056 = vpop.f32.mrb[0].mxu0
    %1057 = vdwg.mxu0
    %1060 = vrot.lane.b32.xlu0 %v1050, 96
    %v1061 = vpop.permute.xlu0 %1060
    %1062 = vrot.lane.b32.xlu0 %v1055, 96
    %v1063 = vpop.permute.xlu0 %1062
    %v1064 = vsel %vm197, %v1050, 0
    %v1066 = vsel %vm197, %v1055, 0
    %v1068 = vsel %vm197, %v1061, 0
    %v1070 = vsel %vm197, %v1063, 0
    %1072 = vmatprep.subr.mxu0 0.0
    %1073 = vmatpush1.xpose.msra.mxu0 %v1068
    %1074 = vmatprep.subr.mxu0 0.0
    %1075 = vmatpush1.xpose.msra.mxu0 %v1070
    %1076 = vmatprep.subr.mxu0 0.0
    %1077 = vmatpush1.xpose.msra.mxu0 0.0
    %1078 = vmatprep.subr.mxu0 0.0
    %1079 = vmatpush1.xpose.msra.mxu0 0.0
    %1080 = vmatprep.subr.mxu0 0.0
    %1081 = vmatpush1.xpose.msra.mxu0 0.0
    %1082 = vmatprep.subr.mxu0 0.0
    %1083 = vmatpush1.xpose.msra.mxu0 0.0
    %1084 = vmatprep.subr.mxu0 0.0
    %1085 = vmatpush1.xpose.msra.mxu0 0.0
    %1086 = vmatprep.subr.mxu0 0.0
    %1087 = vmatpush1.xpose.msra.mxu0 0.0
    %1088 = vmatprep.subr.mxu0 0.0
    %1089 = vmatpush1.xpose.msra.mxu0 0.0
    %1090 = vmatprep.subr.mxu0 0.0
    %1091 = vmatpush1.xpose.msra.mxu0 0.0
    %1092 = vmatprep.subr.mxu0 0.0
    %1093 = vmatpush1.xpose.msra.mxu0 0.0
    %1094 = vmatprep.subr.mxu0 0.0
    %1095 = vmatpush1.xpose.msra.mxu0 0.0
    %1096 = vmatprep.subr.mxu0 0.0
    %1097 = vmatpush1.xpose.msra.mxu0 0.0
    %1098 = vmatprep.subr.mxu0 0.0
    %1099 = vmatpush1.xpose.msra.mxu0 0.0
    %1100 = vmatprep.subr.mxu0 0.0
    %1101 = vmatpush1.xpose.msra.mxu0 0.0
    %1102 = vmatprep.subr.mxu0 0.0
    %1103 = vmatpush1.xpose.msra.mxu0 0.0
    %1104 = vmatprep.subr.mxu0 0.0
    %1105 = vmatpush1.xpose.msra.mxu0 0.0
    %1106 = vmatprep.subr.mxu0 0.0
    %1107 = vmatpush1.xpose.msra.mxu0 0.0
    %1108 = vmatprep.subr.mxu0 0.0
    %1109 = vmatpush1.xpose.msra.mxu0 0.0
    %1110 = vmatprep.subr.mxu0 0.0
    %1111 = vmatpush1.xpose.msra.mxu0 0.0
    %1112 = vmatprep.subr.mxu0 0.0
    %1113 = vmatpush1.xpose.msra.mxu0 0.0
    %1114 = vmatprep.subr.mxu0 0.0
    %1115 = vmatpush1.xpose.msra.mxu0 0.0
    %1116 = vmatprep.subr.mxu0 0.0
    %1117 = vmatpush1.xpose.msra.mxu0 0.0
    %1118 = vmatprep.subr.mxu0 0.0
    %1119 = vmatpush1.xpose.msra.mxu0 0.0
    %1120 = vmatprep.subr.mxu0 0.0
    %1121 = vmatpush1.xpose.msra.mxu0 0.0
    %1122 = vmatprep.subr.mxu0 0.0
    %1123 = vmatpush1.xpose.msra.mxu0 0.0
    %1124 = vmatprep.subr.mxu0 0.0
    %1125 = vmatpush1.xpose.msra.mxu0 0.0
    %1126 = vmatprep.subr.mxu0 0.0
    %1127 = vmatpush1.xpose.msra.mxu0 0.0
    %1128 = vmatprep.subr.mxu0 0.0
    %1129 = vmatpush1.xpose.msra.mxu0 0.0
    %1130 = vmatprep.subr.mxu0 0.0
    %1131 = vmatpush1.xpose.msra.mxu0 0.0
    %1132 = vmatprep.subr.mxu0 0.0
    %1133 = vmatpush1.xpose.msra.mxu0 0.0
    %1134 = vmatprep.subr.mxu0 0.0
    %1135 = vmatpush1.xpose.msra.mxu0 0.0
    %1136 = vmatprep.mubr.f32.mxu0 0.0
    %1137 = vmatmul.mubr.f32.gmra.mrb[0].mxu0 %v1064
    %v1138 = vpop.f32.mrb[0].mxu0
    %v1139 = vadd.f32 %v73, %v1138
    %v1140 = vpop.f32.mrb[0].mxu0
    %1141 = vmatprep.mubr.f32.mxu0 0.0
    %1142 = vmatmul.mubr.f32.gmra.mrb[0].mxu0 %v1066
    %v1143 = vpop.f32.mrb[0].mxu0
    %v1144 = vadd.f32 %v74, %v1143
    %v1145 = vpop.f32.mrb[0].mxu0
    %1146 = vdwg.mxu0
    %v1147 = vsel %vm197, %v1139, -inf
    %1148 = vmax.xlane.f32.xlu0 %v1147
    %v1149 = vpop.xlane.xlu0 %1148
    %v1150 = vsel %vm197, %v1144, -inf
    %1151 = vmax.xlane.f32.xlu0 %v1150
    %v1152 = vpop.xlane.xlu0 %1151
    %v1153 = vsub.f32 %v1139, %v1149
    %v1154 = vsub.f32 %v1144, %v1152
    %v1155 = vmul.f32 %v1153, 1.442695
    %v1156 = vpow.pop %v1155
    %v1157 = vmul.f32 %v1154, 1.442695
    %v1158 = vpow.pop %v1157
    %v1159 = vsel %vm197, %v1156, 0.0
    %1160 = vadd.xlane.f32.xlu0 %v1159
    %v1161 = vpop.xlane.xlu0 %1160
    %v1162 = vsel %vm197, %v1158, 0.0
    %1163 = vadd.xlane.f32.xlu0 %v1162
    %v1164 = vpop.xlane.xlu0 %1163
    %v1165 = vrcp.pop %v1161
    %v1166 = vmul.f32 %v1156, %v1165
    %v1167 = vrcp.pop %v1164
    %v1168 = vmul.f32 %v1158, %v1167
    %1169 = vrot.lane.b32.xlu0 %v1050, 64
    %v1170 = vpop.permute.xlu0 %1169
    %1171 = vrot.lane.b32.xlu0 %v1055, 64
    %v1172 = vpop.permute.xlu0 %1171
    %v1176 = vsel %vm197, %v1166, 0
    %v1179 = vsel %vm197, %v1168, 0
    %1181 = vmatprep.subr.mxu0 0.0
    %1182 = vmatpush1.msra.mxu0 %v1170
    %1183 = vmatprep.subr.mxu0 0.0
    %1184 = vmatpush1.msra.mxu0 %v1172
    %1185 = vmatprep.subr.mxu0 0.0
    %1186 = vmatpush1.msra.mxu0 0.0
    %1187 = vmatprep.subr.mxu0 0.0
    %1188 = vmatpush1.msra.mxu0 0.0
    %1189 = vmatprep.subr.mxu0 0.0
    %1190 = vmatpush1.msra.mxu0 0.0
    %1191 = vmatprep.subr.mxu0 0.0
    %1192 = vmatpush1.msra.mxu0 0.0
    %1193 = vmatprep.subr.mxu0 0.0
    %1194 = vmatpush1.msra.mxu0 0.0
    %1195 = vmatprep.subr.mxu0 0.0
    %1196 = vmatpush1.msra.mxu0 0.0
    %1197 = vmatprep.subr.mxu0 0.0
    %1198 = vmatpush1.msra.mxu0 0.0
    %1199 = vmatprep.subr.mxu0 0.0
    %1200 = vmatpush1.msra.mxu0 0.0
    %1201 = vmatprep.subr.mxu0 0.0
    %1202 = vmatpush1.msra.mxu0 0.0
    %1203 = vmatprep.subr.mxu0 0.0
    %1204 = vmatpush1.msra.mxu0 0.0
    %1205 = vmatprep.subr.mxu0 0.0
    %1206 = vmatpush1.msra.mxu0 0.0
    %1207 = vmatprep.subr.mxu0 0.0
    %1208 = vmatpush1.msra.mxu0 0.0
    %1209 = vmatprep.subr.mxu0 0.0
    %1210 = vmatpush1.msra.mxu0 0.0
    %1211 = vmatprep.subr.mxu0 0.0
    %1212 = vmatpush1.msra.mxu0 0.0
    %1213 = vmatprep.subr.mxu0 0.0
    %1214 = vmatpush1.msra.mxu0 0.0
    %1215 = vmatprep.subr.mxu0 0.0
    %1216 = vmatpush1.msra.mxu0 0.0
    %1217 = vmatprep.subr.mxu0 0.0
    %1218 = vmatpush1.msra.mxu0 0.0
    %1219 = vmatprep.subr.mxu0 0.0
    %1220 = vmatpush1.msra.mxu0 0.0
    %1221 = vmatprep.subr.mxu0 0.0
    %1222 = vmatpush1.msra.mxu0 0.0
    %1223 = vmatprep.subr.mxu0 0.0
    %1224 = vmatpush1.msra.mxu0 0.0
    %1225 = vmatprep.subr.mxu0 0.0
    %1226 = vmatpush1.msra.mxu0 0.0
    %1227 = vmatprep.subr.mxu0 0.0
    %1228 = vmatpush1.msra.mxu0 0.0
    %1229 = vmatprep.subr.mxu0 0.0
    %1230 = vmatpush1.msra.mxu0 0.0
    %1231 = vmatprep.subr.mxu0 0.0
    %1232 = vmatpush1.msra.mxu0 0.0
    %1233 = vmatprep.subr.mxu0 0.0
    %1234 = vmatpush1.msra.mxu0 0.0
    %1235 = vmatprep.subr.mxu0 0.0
    %1236 = vmatpush1.msra.mxu0 0.0
    %1237 = vmatprep.subr.mxu0 0.0
    %1238 = vmatpush1.msra.mxu0 0.0
    %1239 = vmatprep.subr.mxu0 0.0
    %1240 = vmatpush1.msra.mxu0 0.0
    %1241 = vmatprep.subr.mxu0 0.0
    %1242 = vmatpush1.msra.mxu0 0.0
    %1243 = vmatprep.subr.mxu0 0.0
    %1244 = vmatpush1.msra.mxu0 0.0
    %1245 = vmatprep.mubr.f32.mxu0 0.0
    %1246 = vmatmul.mubr.f32.gmra.mrb[0].mxu0 %v1176
    %v1247 = vpop.f32.mrb[0].mxu0
    %v1248 = vadd.f32 0.0, %v1247
    %v1249 = vpop.f32.mrb[0].mxu0
    %1250 = vmatprep.mubr.f32.mxu0 0.0
    %1251 = vmatmul.mubr.f32.gmra.mrb[0].mxu0 %v1179
    %v1252 = vpop.f32.mrb[0].mxu0
    %v1253 = vadd.f32 0.0, %v1252
    %v1254 = vpop.f32.mrb[0].mxu0
    %1255 = vdwg.mxu0
    %1256 = vrot.lane.b32.xlu0 %v1050, 112
    %v1257 = vpop.permute.xlu0 %1256
    %1258 = vrot.lane.b32.xlu0 %v1055, 112
    %v1259 = vpop.permute.xlu0 %1258
    %1260 = vrot.lane.b32.xlu0 %v1050, 80
    %v1261 = vpop.permute.xlu0 %1260
    %1262 = vrot.lane.b32.xlu0 %v1055, 80
    %v1263 = vpop.permute.xlu0 %1262
    %v1264 = vsel %vm197, %v1257, 0
    %v1266 = vsel %vm197, %v1259, 0
    %v1268 = vsel %vm197, %v1261, 0
    %v1270 = vsel %vm197, %v1263, 0
    %1272 = vmatprep.subr.mxu0 0.0
    %1273 = vmatpush1.xpose.msra.mxu0 %v1268
    %1274 = vmatprep.subr.mxu0 0.0
    %1275 = vmatpush1.xpose.msra.mxu0 %v1270
    %1276 = vmatprep.subr.mxu0 0.0
    %1277 = vmatpush1.xpose.msra.mxu0 0.0
    %1278 = vmatprep.subr.mxu0 0.0
    %1279 = vmatpush1.xpose.msra.mxu0 0.0
    %1280 = vmatprep.subr.mxu0 0.0
    %1281 = vmatpush1.xpose.msra.mxu0 0.0
    %1282 = vmatprep.subr.mxu0 0.0
    %1283 = vmatpush1.xpose.msra.mxu0 0.0
    %1284 = vmatprep.subr.mxu0 0.0
    %1285 = vmatpush1.xpose.msra.mxu0 0.0
    %1286 = vmatprep.subr.mxu0 0.0
    %1287 = vmatpush1.xpose.msra.mxu0 0.0
    %1288 = vmatprep.subr.mxu0 0.0
    %1289 = vmatpush1.xpose.msra.mxu0 0.0
    %1290 = vmatprep.subr.mxu0 0.0
    %1291 = vmatpush1.xpose.msra.mxu0 0.0
    %1292 = vmatprep.subr.mxu0 0.0
    %1293 = vmatpush1.xpose.msra.mxu0 0.0
    %1294 = vmatprep.subr.mxu0 0.0
    %1295 = vmatpush1.xpose.msra.mxu0 0.0
    %1296 = vmatprep.subr.mxu0 0.0
    %1297 = vmatpush1.xpose.msra.mxu0 0.0
    %1298 = vmatprep.subr.mxu0 0.0
    %1299 = vmatpush1.xpose.msra.mxu0 0.0
    %1300 = vmatprep.subr.mxu0 0.0
    %1301 = vmatpush1.xpose.msra.mxu0 0.0
    %1302 = vmatprep.subr.mxu0 0.0
    %1303 = vmatpush1.xpose.msra.mxu0 0.0
    %1304 = vmatprep.subr.mxu0 0.0
    %1305 = vmatpush1.xpose.msra.mxu0 0.0
    %1306 = vmatprep.subr.mxu0 0.0
    %1307 = vmatpush1.xpose.msra.mxu0 0.0
    %1308 = vmatprep.subr.mxu0 0.0
    %1309 = vmatpush1.xpose.msra.mxu0 0.0
    %1310 = vmatprep.subr.mxu0 0.0
    %1311 = vmatpush1.xpose.msra.mxu0 0.0
    %1312 = vmatprep.subr.mxu0 0.0
    %1313 = vmatpush1.xpose.msra.mxu0 0.0
    %1314 = vmatprep.subr.mxu0 0.0
    %1315 = vmatpush1.xpose.msra.mxu0 0.0
    %1316 = vmatprep.subr.mxu0 0.0
    %1317 = vmatpush1.xpose.msra.mxu0 0.0
    %1318 = vmatprep.subr.mxu0 0.0
    %1319 = vmatpush1.xpose.msra.mxu0 0.0
    %1320 = vmatprep.subr.mxu0 0.0
    %1321 = vmatpush1.xpose.msra.mxu0 0.0
    %1322 = vmatprep.subr.mxu0 0.0
    %1323 = vmatpush1.xpose.msra.mxu0 0.0
    %1324 = vmatprep.subr.mxu0 0.0
    %1325 = vmatpush1.xpose.msra.mxu0 0.0
    %1326 = vmatprep.subr.mxu0 0.0
    %1327 = vmatpush1.xpose.msra.mxu0 0.0
    %1328 = vmatprep.subr.mxu0 0.0
    %1329 = vmatpush1.xpose.msra.mxu0 0.0
    %1330 = vmatprep.subr.mxu0 0.0
    %1331 = vmatpush1.xpose.msra.mxu0 0.0
    %1332 = vmatprep.subr.mxu0 0.0
    %1333 = vmatpush1.xpose.msra.mxu0 0.0
    %1334 = vmatprep.subr.mxu0 0.0
    %1335 = vmatpush1.xpose.msra.mxu0 0.0
    %1336 = vmatprep.mubr.f32.mxu0 0.0
    %1337 = vmatmul.mubr.f32.gmra.mrb[0].mxu0 %v1264
    %v1338 = vpop.f32.mrb[0].mxu0
    %v1339 = vadd.f32 %v73, %v1338
    %v1340 = vpop.f32.mrb[0].mxu0
    %1341 = vmatprep.mubr.f32.mxu0 0.0
    %1342 = vmatmul.mubr.f32.gmra.mrb[0].mxu0 %v1266
    %v1343 = vpop.f32.mrb[0].mxu0
    %v1344 = vadd.f32 %v74, %v1343
    %v1345 = vpop.f32.mrb[0].mxu0
    %1346 = vdwg.mxu0
    %v1347 = vsel %vm197, %v1339, -inf
    %1348 = vmax.xlane.f32.xlu0 %v1347
    %v1349 = vpop.xlane.xlu0 %1348
    %v1350 = vsel %vm197, %v1344, -inf
    %1351 = vmax.xlane.f32.xlu0 %v1350
    %v1352 = vpop.xlane.xlu0 %1351
    %v1353 = vsub.f32 %v1339, %v1349
    %v1354 = vsub.f32 %v1344, %v1352
    %v1355 = vmul.f32 %v1353, 1.442695
    %v1356 = vpow.pop %v1355
    %v1357 = vmul.f32 %v1354, 1.442695
    %v1358 = vpow.pop %v1357
    %v1359 = vsel %vm197, %v1356, 0.0
    %1360 = vadd.xlane.f32.xlu0 %v1359
    %v1361 = vpop.xlane.xlu0 %1360
    %v1362 = vsel %vm197, %v1358, 0.0
    %1363 = vadd.xlane.f32.xlu0 %v1362
    %v1364 = vpop.xlane.xlu0 %1363
    %v1365 = vrcp.pop %v1361
    %v1366 = vmul.f32 %v1356, %v1365
    %v1367 = vrcp.pop %v1364
    %v1368 = vmul.f32 %v1358, %v1367
    %1369 = vrot.lane.b32.xlu0 %v1050, 48
    %v1370 = vpop.permute.xlu0 %1369
    %1371 = vrot.lane.b32.xlu0 %v1055, 48
    %v1372 = vpop.permute.xlu0 %1371
    %v1376 = vsel %vm197, %v1366, 0
    %v1379 = vsel %vm197, %v1368, 0
    %1381 = vmatprep.subr.mxu0 0.0
    %1382 = vmatpush1.msra.mxu0 %v1370
    %1383 = vmatprep.subr.mxu0 0.0
    %1384 = vmatpush1.msra.mxu0 %v1372
    %1385 = vmatprep.subr.mxu0 0.0
    %1386 = vmatpush1.msra.mxu0 0.0
    %1387 = vmatprep.subr.mxu0 0.0
    %1388 = vmatpush1.msra.mxu0 0.0
    %1389 = vmatprep.subr.mxu0 0.0
    %1390 = vmatpush1.msra.mxu0 0.0
    %1391 = vmatprep.subr.mxu0 0.0
    %1392 = vmatpush1.msra.mxu0 0.0
    %1393 = vmatprep.subr.mxu0 0.0
    %1394 = vmatpush1.msra.mxu0 0.0
    %1395 = vmatprep.subr.mxu0 0.0
    %1396 = vmatpush1.msra.mxu0 0.0
    %1397 = vmatprep.subr.mxu0 0.0
    %1398 = vmatpush1.msra.mxu0 0.0
    %1399 = vmatprep.subr.mxu0 0.0
    %1400 = vmatpush1.msra.mxu0 0.0
    %1401 = vmatprep.subr.mxu0 0.0
    %1402 = vmatpush1.msra.mxu0 0.0
    %1403 = vmatprep.subr.mxu0 0.0
    %1404 = vmatpush1.msra.mxu0 0.0
    %1405 = vmatprep.subr.mxu0 0.0
    %1406 = vmatpush1.msra.mxu0 0.0
    %1407 = vmatprep.subr.mxu0 0.0
    %1408 = vmatpush1.msra.mxu0 0.0
    %1409 = vmatprep.subr.mxu0 0.0
    %1410 = vmatpush1.msra.mxu0 0.0
    %1411 = vmatprep.subr.mxu0 0.0
    %1412 = vmatpush1.msra.mxu0 0.0
    %1413 = vmatprep.subr.mxu0 0.0
    %1414 = vmatpush1.msra.mxu0 0.0
    %1415 = vmatprep.subr.mxu0 0.0
    %1416 = vmatpush1.msra.mxu0 0.0
    %1417 = vmatprep.subr.mxu0 0.0
    %1418 = vmatpush1.msra.mxu0 0.0
    %1419 = vmatprep.subr.mxu0 0.0
    %1420 = vmatpush1.msra.mxu0 0.0
    %1421 = vmatprep.subr.mxu0 0.0
    %1422 = vmatpush1.msra.mxu0 0.0
    %1423 = vmatprep.subr.mxu0 0.0
    %1424 = vmatpush1.msra.mxu0 0.0
    %1425 = vmatprep.subr.mxu0 0.0
    %1426 = vmatpush1.msra.mxu0 0.0
    %1427 = vmatprep.subr.mxu0 0.0
    %1428 = vmatpush1.msra.mxu0 0.0
    %1429 = vmatprep.subr.mxu0 0.0
    %1430 = vmatpush1.msra.mxu0 0.0
    %1431 = vmatprep.subr.mxu0 0.0
    %1432 = vmatpush1.msra.mxu0 0.0
    %1433 = vmatprep.subr.mxu0 0.0
    %1434 = vmatpush1.msra.mxu0 0.0
    %1435 = vmatprep.subr.mxu0 0.0
    %1436 = vmatpush1.msra.mxu0 0.0
    %1437 = vmatprep.subr.mxu0 0.0
    %1438 = vmatpush1.msra.mxu0 0.0
    %1439 = vmatprep.subr.mxu0 0.0
    %1440 = vmatpush1.msra.mxu0 0.0
    %1441 = vmatprep.subr.mxu0 0.0
    %1442 = vmatpush1.msra.mxu0 0.0
    %1443 = vmatprep.subr.mxu0 0.0
    %1444 = vmatpush1.msra.mxu0 0.0
    %1445 = vmatprep.mubr.f32.mxu0 0.0
    %1446 = vmatmul.mubr.f32.gmra.mrb[0].mxu0 %v1376
    %v1447 = vpop.f32.mrb[0].mxu0
    %v1448 = vadd.f32 0.0, %v1447
    %v1449 = vpop.f32.mrb[0].mxu0
    %1450 = vmatprep.mubr.f32.mxu0 0.0
    %1451 = vmatmul.mubr.f32.gmra.mrb[0].mxu0 %v1379
    %v1452 = vpop.f32.mrb[0].mxu0
    %v1453 = vadd.f32 0.0, %v1452
    %v1454 = vpop.f32.mrb[0].mxu0
    %1455 = vdwg.mxu0
    %1458 = vrot.lane.b32.xlu0 %v1448, 16
    %v1459 = vpop.permute.xlu0 %1458
    %1460 = vrot.lane.b32.xlu0 %v1453, 16
    %v1461 = vpop.permute.xlu0 %1460
    %v1464 = vsel %vm197, %v1248, %v1459
    %v1465 = vsel %vm197, %v1253, %v1461
    %v1467 = vsel %vm109, %v1464, 0
    %v1470 = vsel %vm109, %v1465, 0
    %1472 = vmatprep.subr.mxu0 0.0
    %1473 = vmatpush1.msra.mxu0 %v948
    %1474 = vmatprep.subr.mxu0 0.0
    %1475 = vmatpush1.msra.mxu0 %v949
    %1476 = vmatprep.subr.mxu0 0.0
    %1477 = vmatpush1.msra.mxu0 %v950
    %1478 = vmatprep.subr.mxu0 0.0
    %1479 = vmatpush1.msra.mxu0 %v951
    %1480 = vmatprep.subr.mxu0 0.0
    %1481 = vmatpush1.msra.mxu0 0.0
    %1482 = vmatprep.subr.mxu0 0.0
    %1483 = vmatpush1.msra.mxu0 0.0
    %1484 = vmatprep.subr.mxu0 0.0
    %1485 = vmatpush1.msra.mxu0 0.0
    %1486 = vmatprep.subr.mxu0 0.0
    %1487 = vmatpush1.msra.mxu0 0.0
    %1488 = vmatprep.subr.mxu0 0.0
    %1489 = vmatpush1.msra.mxu0 0.0
    %1490 = vmatprep.subr.mxu0 0.0
    %1491 = vmatpush1.msra.mxu0 0.0
    %1492 = vmatprep.subr.mxu0 0.0
    %1493 = vmatpush1.msra.mxu0 0.0
    %1494 = vmatprep.subr.mxu0 0.0
    %1495 = vmatpush1.msra.mxu0 0.0
    %1496 = vmatprep.subr.mxu0 0.0
    %1497 = vmatpush1.msra.mxu0 0.0
    %1498 = vmatprep.subr.mxu0 0.0
    %1499 = vmatpush1.msra.mxu0 0.0
    %1500 = vmatprep.subr.mxu0 0.0
    %1501 = vmatpush1.msra.mxu0 0.0
    %1502 = vmatprep.subr.mxu0 0.0
    %1503 = vmatpush1.msra.mxu0 0.0
    %1504 = vmatprep.subr.mxu0 0.0
    %1505 = vmatpush1.msra.mxu0 0.0
    %1506 = vmatprep.subr.mxu0 0.0
    %1507 = vmatpush1.msra.mxu0 0.0
    %1508 = vmatprep.subr.mxu0 0.0
    %1509 = vmatpush1.msra.mxu0 0.0
    %1510 = vmatprep.subr.mxu0 0.0
    %1511 = vmatpush1.msra.mxu0 0.0
    %1512 = vmatprep.subr.mxu0 0.0
    %1513 = vmatpush1.msra.mxu0 0.0
    %1514 = vmatprep.subr.mxu0 0.0
    %1515 = vmatpush1.msra.mxu0 0.0
    %1516 = vmatprep.subr.mxu0 0.0
    %1517 = vmatpush1.msra.mxu0 0.0
    %1518 = vmatprep.subr.mxu0 0.0
    %1519 = vmatpush1.msra.mxu0 0.0
    %1520 = vmatprep.subr.mxu0 0.0
    %1521 = vmatpush1.msra.mxu0 0.0
    %1522 = vmatprep.subr.mxu0 0.0
    %1523 = vmatpush1.msra.mxu0 0.0
    %1524 = vmatprep.subr.mxu0 0.0
    %1525 = vmatpush1.msra.mxu0 0.0
    %1526 = vmatprep.subr.mxu0 0.0
    %1527 = vmatpush1.msra.mxu0 0.0
    %1528 = vmatprep.subr.mxu0 0.0
    %1529 = vmatpush1.msra.mxu0 0.0
    %1530 = vmatprep.subr.mxu0 0.0
    %1531 = vmatpush1.msra.mxu0 0.0
    %1532 = vmatprep.subr.mxu0 0.0
    %1533 = vmatpush1.msra.mxu0 0.0
    %1534 = vmatprep.subr.mxu0 0.0
    %1535 = vmatpush1.msra.mxu0 0.0
    %1536 = vmatprep.mubr.f32.mxu0 0.0
    %1537 = vmatmul.mubr.f32.gmra.mrb[0].mxu0 %v1467
    %v1538 = vpop.f32.mrb[0].mxu0
    %v1539 = vadd.f32 0.0, %v1538
    %v1540 = vpop.f32.mrb[0].mxu0
    %1541 = vmatprep.mubr.f32.mxu0 0.0
    %1542 = vmatmul.mubr.f32.gmra.mrb[0].mxu0 %v1470
    %v1543 = vpop.f32.mrb[0].mxu0
    %v1544 = vadd.f32 0.0, %v1543
    %v1545 = vpop.f32.mrb[0].mxu0
    %1546 = vdwg.mxu0
    %v1547 = vlaneseq
    %v1548 = vshrl.u32 %v1547, 7
    %v1549 = vsub.s32 0, %v1548
    %v1550 = vrot.slane %v966, %v1549
    %v1551 = vadd.f32 %v1539, %v1550
    %v1552 = vadd.f32 %v1544, %v1550
    %v1553 = vadd.f32 %v941, %v1551
    %v1554 = vadd.f32 %v942, %v1552
    %v1555 = vsel %vm109, %v1553, 0.0
    %1556 = vadd.xlane.f32.xlu0 %v1555
    %v1557 = vpop.xlane.xlu0 %1556
    %v1558 = vsel %vm109, %v1554, 0.0
    %1559 = vadd.xlane.f32.xlu0 %v1558
    %v1560 = vpop.xlane.xlu0 %1559
    %v1561 = vmul.f32 %v1557, %v695
    %v1562 = vmul.f32 %v1560, %v695
    %v1563 = vsub.f32 %v1553, %v1561
    %v1564 = vsub.f32 %v1554, %v1562
    %v1565 = vmul.f32 %v1563, %v1563
    %v1566 = vmul.f32 %v1564, %v1564
    %v1567 = vsel %vm109, %v1565, 0.0
    %1568 = vadd.xlane.f32.xlu0 %v1567
    %v1569 = vpop.xlane.xlu0 %1568
    %v1570 = vsel %vm109, %v1566, 0.0
    %1571 = vadd.xlane.f32.xlu0 %v1570
    %v1572 = vpop.xlane.xlu0 %1571
    %v1573 = vmul.f32 %v1569, %v695
    %v1574 = vmul.f32 %v1572, %v695
    %v1575 = vadd.f32 %v1573, 1e-05
    %v1576 = vadd.f32 %v1574, 1e-05
    %v1577 = vrsqrt.pop %v1575
    %v1578 = vrsqrt.pop %v1576
    %v1579 = vmul.f32 %v1563, %v1577
    %v1580 = vmul.f32 %v1564, %v1578
    %v1581 = vlaneseq
    %v1582 = vshrl.u32 %v1581, 7
    %v1583 = vsub.s32 0, %v1582
    %v1584 = vrot.slane %v969, %v1583
    %v1585 = vmul.f32 %v1579, %v1584
    %v1586 = vmul.f32 %v1580, %v1584
    %v1587 = vlaneseq
    %v1588 = vshrl.u32 %v1587, 7
    %v1589 = vsub.s32 0, %v1588
    %v1590 = vrot.slane %v970, %v1589
    %v1591 = vadd.f32 %v1585, %v1590
    %v1592 = vadd.f32 %v1586, %v1590
    %v1593 = vlaneseq
    %v1594 = vshrl.u32 %v1593, 7
    %v1595 = vsub.s32 0, %v1594
    %v1596 = vrot.slane %v967, %v1595
    %v1598 = vsel %vm109, %v1591, 0
    %v1601 = vsel %vm109, %v1592, 0
    %1603 = vmatprep.subr.mxu0 0.0
    %1604 = vmatpush1.msra.mxu0 %v952
    %1605 = vmatprep.subr.mxu0 0.0
    %1606 = vmatpush1.msra.mxu0 %v953
    %1607 = vmatprep.subr.mxu0 0.0
    %1608 = vmatpush1.msra.mxu0 %v954
    %1609 = vmatprep.subr.mxu0 0.0
    %1610 = vmatpush1.msra.mxu0 %v955
    %1611 = vmatprep.subr.mxu0 0.0
    %1612 = vmatpush1.msra.mxu0 0.0
    %1613 = vmatprep.subr.mxu0 0.0
    %1614 = vmatpush1.msra.mxu0 0.0
    %1615 = vmatprep.subr.mxu0 0.0
    %1616 = vmatpush1.msra.mxu0 0.0
    %1617 = vmatprep.subr.mxu0 0.0
    %1618 = vmatpush1.msra.mxu0 0.0
    %1619 = vmatprep.subr.mxu0 0.0
    %1620 = vmatpush1.msra.mxu0 0.0
    %1621 = vmatprep.subr.mxu0 0.0
    %1622 = vmatpush1.msra.mxu0 0.0
    %1623 = vmatprep.subr.mxu0 0.0
    %1624 = vmatpush1.msra.mxu0 0.0
    %1625 = vmatprep.subr.mxu0 0.0
    %1626 = vmatpush1.msra.mxu0 0.0
    %1627 = vmatprep.subr.mxu0 0.0
    %1628 = vmatpush1.msra.mxu0 0.0
    %1629 = vmatprep.subr.mxu0 0.0
    %1630 = vmatpush1.msra.mxu0 0.0
    %1631 = vmatprep.subr.mxu0 0.0
    %1632 = vmatpush1.msra.mxu0 0.0
    %1633 = vmatprep.subr.mxu0 0.0
    %1634 = vmatpush1.msra.mxu0 0.0
    %1635 = vmatprep.subr.mxu0 0.0
    %1636 = vmatpush1.msra.mxu0 0.0
    %1637 = vmatprep.subr.mxu0 0.0
    %1638 = vmatpush1.msra.mxu0 0.0
    %1639 = vmatprep.subr.mxu0 0.0
    %1640 = vmatpush1.msra.mxu0 0.0
    %1641 = vmatprep.subr.mxu0 0.0
    %1642 = vmatpush1.msra.mxu0 0.0
    %1643 = vmatprep.subr.mxu0 0.0
    %1644 = vmatpush1.msra.mxu0 0.0
    %1645 = vmatprep.subr.mxu0 0.0
    %1646 = vmatpush1.msra.mxu0 0.0
    %1647 = vmatprep.subr.mxu0 0.0
    %1648 = vmatpush1.msra.mxu0 0.0
    %1649 = vmatprep.subr.mxu0 0.0
    %1650 = vmatpush1.msra.mxu0 0.0
    %1651 = vmatprep.subr.mxu0 0.0
    %1652 = vmatpush1.msra.mxu0 0.0
    %1653 = vmatprep.subr.mxu0 0.0
    %1654 = vmatpush1.msra.mxu0 0.0
    %1655 = vmatprep.subr.mxu0 0.0
    %1656 = vmatpush1.msra.mxu0 0.0
    %1657 = vmatprep.subr.mxu0 0.0
    %1658 = vmatpush1.msra.mxu0 0.0
    %1659 = vmatprep.subr.mxu0 0.0
    %1660 = vmatpush1.msra.mxu0 0.0
    %1661 = vmatprep.subr.mxu0 0.0
    %1662 = vmatpush1.msra.mxu0 0.0
    %1663 = vmatprep.subr.mxu0 0.0
    %1664 = vmatpush1.msra.mxu0 0.0
    %1665 = vmatprep.subr.mxu0 0.0
    %1666 = vmatpush1.msra.mxu0 0.0
    %1667 = vmatprep.mubr.f32.mxu0 0.0
    %1668 = vmatmul.mubr.f32.gmra.mrb[0].mxu0 %v1598
    %v1669 = vpop.f32.mrb[0].mxu0
    %v1670 = vadd.f32 %v1596, %v1669
    %v1671 = vpop.f32.mrb[0].mxu0
    %1672 = vmatprep.mubr.f32.mxu0 0.0
    %1673 = vmatmul.mubr.f32.gmra.mrb[0].mxu0 %v1601
    %v1674 = vpop.f32.mrb[0].mxu0
    %v1675 = vadd.f32 %v1596, %v1674
    %v1676 = vpop.f32.mrb[0].mxu0
    %1677 = vdwg.mxu0
    %v1678 = vmax.f32 %v1670, 0.0
    %v1679 = vmax.f32 %v1675, 0.0
    %v1681 = vsel %vm815, %v1678, 0
    %v1684 = vsel %vm815, %v1679, 0
    %1686 = vmatprep.subr.mxu0 0.0
    %1687 = vmatpush1.msra.mxu0 %v956
    %1688 = vmatprep.subr.mxu0 0.0
    %1689 = vmatpush1.msra.mxu0 %v957
    %1690 = vmatprep.subr.mxu0 0.0
    %1691 = vmatpush1.msra.mxu0 %v958
    %1692 = vmatprep.subr.mxu0 0.0
    %1693 = vmatpush1.msra.mxu0 %v959
    %1694 = vmatprep.subr.mxu0 0.0
    %1695 = vmatpush1.msra.mxu0 %v960
    %1696 = vmatprep.subr.mxu0 0.0
    %1697 = vmatpush1.msra.mxu0 %v961
    %1698 = vmatprep.subr.mxu0 0.0
    %1699 = vmatpush1.msra.mxu0 %v962
    %1700 = vmatprep.subr.mxu0 0.0
    %1701 = vmatpush1.msra.mxu0 %v963
    %1702 = vmatprep.subr.mxu0 0.0
    %1703 = vmatpush1.msra.mxu0 0.0
    %1704 = vmatprep.subr.mxu0 0.0
    %1705 = vmatpush1.msra.mxu0 0.0
    %1706 = vmatprep.subr.mxu0 0.0
    %1707 = vmatpush1.msra.mxu0 0.0
    %1708 = vmatprep.subr.mxu0 0.0
    %1709 = vmatpush1.msra.mxu0 0.0
    %1710 = vmatprep.subr.mxu0 0.0
    %1711 = vmatpush1.msra.mxu0 0.0
    %1712 = vmatprep.subr.mxu0 0.0
    %1713 = vmatpush1.msra.mxu0 0.0
    %1714 = vmatprep.subr.mxu0 0.0
    %1715 = vmatpush1.msra.mxu0 0.0
    %1716 = vmatprep.subr.mxu0 0.0
    %1717 = vmatpush1.msra.mxu0 0.0
    %1718 = vmatprep.subr.mxu0 0.0
    %1719 = vmatpush1.msra.mxu0 0.0
    %1720 = vmatprep.subr.mxu0 0.0
    %1721 = vmatpush1.msra.mxu0 0.0
    %1722 = vmatprep.subr.mxu0 0.0
    %1723 = vmatpush1.msra.mxu0 0.0
    %1724 = vmatprep.subr.mxu0 0.0
    %1725 = vmatpush1.msra.mxu0 0.0
    %1726 = vmatprep.subr.mxu0 0.0
    %1727 = vmatpush1.msra.mxu0 0.0
    %1728 = vmatprep.subr.mxu0 0.0
    %1729 = vmatpush1.msra.mxu0 0.0
    %1730 = vmatprep.subr.mxu0 0.0
    %1731 = vmatpush1.msra.mxu0 0.0
    %1732 = vmatprep.subr.mxu0 0.0
    %1733 = vmatpush1.msra.mxu0 0.0
    %1734 = vmatprep.subr.mxu0 0.0
    %1735 = vmatpush1.msra.mxu0 0.0
    %1736 = vmatprep.subr.mxu0 0.0
    %1737 = vmatpush1.msra.mxu0 0.0
    %1738 = vmatprep.subr.mxu0 0.0
    %1739 = vmatpush1.msra.mxu0 0.0
    %1740 = vmatprep.subr.mxu0 0.0
    %1741 = vmatpush1.msra.mxu0 0.0
    %1742 = vmatprep.subr.mxu0 0.0
    %1743 = vmatpush1.msra.mxu0 0.0
    %1744 = vmatprep.subr.mxu0 0.0
    %1745 = vmatpush1.msra.mxu0 0.0
    %1746 = vmatprep.subr.mxu0 0.0
    %1747 = vmatpush1.msra.mxu0 0.0
    %1748 = vmatprep.subr.mxu0 0.0
    %1749 = vmatpush1.msra.mxu0 0.0
    %1750 = vmatprep.mubr.f32.mxu0 0.0
    %1751 = vmatmul.mubr.f32.gmra.mrb[0].mxu0 %v1681
    %v1752 = vpop.f32.mrb[0].mxu0
    %v1753 = vadd.f32 0.0, %v1752
    %v1754 = vpop.f32.mrb[0].mxu0
    %1755 = vmatprep.mubr.f32.mxu0 0.0
    %1756 = vmatmul.mubr.f32.gmra.mrb[0].mxu0 %v1684
    %v1757 = vpop.f32.mrb[0].mxu0
    %v1758 = vadd.f32 0.0, %v1757
    %v1759 = vpop.f32.mrb[0].mxu0
    %1760 = vdwg.mxu0
    %v1761 = vlaneseq
    %v1762 = vshrl.u32 %v1761, 7
    %v1763 = vsub.s32 0, %v1762
    %v1764 = vrot.slane %v968, %v1763
    %v1765 = vadd.f32 %v1753, %v1764
    %v1766 = vadd.f32 %v1758, %v1764
    %v1767 = vadd.f32 %v1591, %v1765
    %v1768 = vadd.f32 %v1592, %v1766
    %v1769 = vsel %vm109, %v1767, 0.0
    %1770 = vadd.xlane.f32.xlu0 %v1769
    %v1771 = vpop.xlane.xlu0 %1770
    %v1772 = vsel %vm109, %v1768, 0.0
    %1773 = vadd.xlane.f32.xlu0 %v1772
    %v1774 = vpop.xlane.xlu0 %1773
    %v1775 = vmul.f32 %v1771, %v695
    %v1776 = vmul.f32 %v1774, %v695
    %v1777 = vsub.f32 %v1767, %v1775
    %v1778 = vsub.f32 %v1768, %v1776
    %v1779 = vmul.f32 %v1777, %v1777
    %v1780 = vmul.f32 %v1778, %v1778
    %v1781 = vsel %vm109, %v1779, 0.0
    %1782 = vadd.xlane.f32.xlu0 %v1781
    %v1783 = vpop.xlane.xlu0 %1782
    %v1784 = vsel %vm109, %v1780, 0.0
    %1785 = vadd.xlane.f32.xlu0 %v1784
    %v1786 = vpop.xlane.xlu0 %1785
    %v1787 = vmul.f32 %v1783, %v695
    %v1788 = vmul.f32 %v1786, %v695
    %v1789 = vadd.f32 %v1787, 1e-05
    %v1790 = vadd.f32 %v1788, 1e-05
    %v1791 = vrsqrt.pop %v1789
    %v1792 = vrsqrt.pop %v1790
    %v1793 = vmul.f32 %v1777, %v1791
    %v1794 = vmul.f32 %v1778, %v1792
    %v1795 = vlaneseq
    %v1796 = vshrl.u32 %v1795, 7
    %v1797 = vsub.s32 0, %v1796
    %v1798 = vrot.slane %v971, %v1797
    %v1799 = vmul.f32 %v1793, %v1798
    %v1800 = vmul.f32 %v1794, %v1798
    %v1801 = vlaneseq
    %v1802 = vshrl.u32 %v1801, 7
    %v1803 = vsub.s32 0, %v1802
    %v1804 = vrot.slane %v972, %v1803
    %v1805 = vadd.f32 %v1799, %v1804
    %v1806 = vadd.f32 %v1800, %v1804
    %s1807 = scalar_lea.vmem [#allocation7], 320
    %v1808 = vld [vmem:[%s1807] sm:$0xff]
    %v1809 = vld [vmem:[%s1807 + $0x8] sm:$0xff]
    %v1810 = vld [vmem:[%s1807 + $0x10] sm:$0xff]
    %v1811 = vld [vmem:[%s1807 + $0x18] sm:$0xff]
    %v1812 = vld [vmem:[%s1807 + $0x20] sm:$0xff]
    %v1813 = vld [vmem:[%s1807 + $0x28] sm:$0xff]
    %v1814 = vld [vmem:[%s1807 + $0x30] sm:$0xff]
    %v1815 = vld [vmem:[%s1807 + $0x38] sm:$0xff]
    %v1816 = vld [vmem:[%s1807 + $0x40] sm:$0xff]
    %v1817 = vld [vmem:[%s1807 + $0x48] sm:$0xff]
    %v1818 = vld [vmem:[%s1807 + $0x50] sm:$0xff]
    %v1819 = vld [vmem:[%s1807 + $0x58] sm:$0xff]
    %v1820 = vld [vmem:[%s1807 + $0x60] sm:$0xff]
    %v1821 = vld [vmem:[%s1807 + $0x68] sm:$0xff]
    %v1822 = vld [vmem:[%s1807 + $0x70] sm:$0xff]
    %v1823 = vld [vmem:[%s1807 + $0x78] sm:$0xff]
    %v1824 = vld [vmem:[%s1807 + $0x80] sm:$0xff]
    %v1825 = vld [vmem:[%s1807 + $0x88] sm:$0xff]
    %v1826 = vld [vmem:[%s1807 + $0x90] sm:$0xff]
    %v1827 = vld [vmem:[%s1807 + $0x98] sm:$0xff]
    %s1828 = scalar_lea.vmem [#allocation8], 16
    %v1829 = vld [vmem:[%s1828] sm:$0x1]
    %v1830 = vld [vmem:[%s1828 + $0x1] sm:$0x1]
    %v1831 = vld [vmem:[%s1828 + $0x2] sm:$0x1]
    %v1832 = vld [vmem:[%s1828 + $0x3] sm:$0x1]
    %v1833 = vld [vmem:[%s1828 + $0x4] sm:$0x1]
    %v1834 = vld [vmem:[%s1828 + $0x5] sm:$0x1]
    %v1835 = vld [vmem:[%s1828 + $0x6] sm:$0x1]
    %v1836 = vld [vmem:[%s1828 + $0x7] sm:$0x1]
    %v1837 = vlaneseq
    %v1838 = vshrl.u32 %v1837, 7
    %v1839 = vsub.s32 0, %v1838
    %v1840 = vrot.slane %v1829, %v1839
    %v1842 = vsel %vm109, %v1805, 0
    %v1845 = vsel %vm109, %v1806, 0
    %1847 = vmatprep.subr.mxu0 0.0
    %1848 = vmatpush1.msra.mxu0 %v1808
    %1849 = vmatprep.subr.mxu0 0.0
    %1850 = vmatpush1.msra.mxu0 %v1809
    %1851 = vmatprep.subr.mxu0 0.0
    %1852 = vmatpush1.msra.mxu0 %v1810
    %1853 = vmatprep.subr.mxu0 0.0
    %1854 = vmatpush1.msra.mxu0 %v1811
    %1855 = vmatprep.subr.mxu0 0.0
    %1856 = vmatpush1.msra.mxu0 0.0
    %1857 = vmatprep.subr.mxu0 0.0
    %1858 = vmatpush1.msra.mxu0 0.0
    %1859 = vmatprep.subr.mxu0 0.0
    %1860 = vmatpush1.msra.mxu0 0.0
    %1861 = vmatprep.subr.mxu0 0.0
    %1862 = vmatpush1.msra.mxu0 0.0
    %1863 = vmatprep.subr.mxu0 0.0
    %1864 = vmatpush1.msra.mxu0 0.0
    %1865 = vmatprep.subr.mxu0 0.0
    %1866 = vmatpush1.msra.mxu0 0.0
    %1867 = vmatprep.subr.mxu0 0.0
    %1868 = vmatpush1.msra.mxu0 0.0
    %1869 = vmatprep.subr.mxu0 0.0
    %1870 = vmatpush1.msra.mxu0 0.0
    %1871 = vmatprep.subr.mxu0 0.0
    %1872 = vmatpush1.msra.mxu0 0.0
    %1873 = vmatprep.subr.mxu0 0.0
    %1874 = vmatpush1.msra.mxu0 0.0
    %1875 = vmatprep.subr.mxu0 0.0
    %1876 = vmatpush1.msra.mxu0 0.0
    %1877 = vmatprep.subr.mxu0 0.0
    %1878 = vmatpush1.msra.mxu0 0.0
    %1879 = vmatprep.subr.mxu0 0.0
    %1880 = vmatpush1.msra.mxu0 0.0
    %1881 = vmatprep.subr.mxu0 0.0
    %1882 = vmatpush1.msra.mxu0 0.0
    %1883 = vmatprep.subr.mxu0 0.0
    %1884 = vmatpush1.msra.mxu0 0.0
    %1885 = vmatprep.subr.mxu0 0.0
    %1886 = vmatpush1.msra.mxu0 0.0
    %1887 = vmatprep.subr.mxu0 0.0
    %1888 = vmatpush1.msra.mxu0 0.0
    %1889 = vmatprep.subr.mxu0 0.0
    %1890 = vmatpush1.msra.mxu0 0.0
    %1891 = vmatprep.subr.mxu0 0.0
    %1892 = vmatpush1.msra.mxu0 0.0
    %1893 = vmatprep.subr.mxu0 0.0
    %1894 = vmatpush1.msra.mxu0 0.0
    %1895 = vmatprep.subr.mxu0 0.0
    %1896 = vmatpush1.msra.mxu0 0.0
    %1897 = vmatprep.subr.mxu0 0.0
    %1898 = vmatpush1.msra.mxu0 0.0
    %1899 = vmatprep.subr.mxu0 0.0
    %1900 = vmatpush1.msra.mxu0 0.0
    %1901 = vmatprep.subr.mxu0 0.0
    %1902 = vmatpush1.msra.mxu0 0.0
    %1903 = vmatprep.subr.mxu0 0.0
    %1904 = vmatpush1.msra.mxu0 0.0
    %1905 = vmatprep.subr.mxu0 0.0
    %1906 = vmatpush1.msra.mxu0 0.0
    %1907 = vmatprep.subr.mxu0 0.0
    %1908 = vmatpush1.msra.mxu0 0.0
    %1909 = vmatprep.subr.mxu0 0.0
    %1910 = vmatpush1.msra.mxu0 0.0
    %1911 = vmatprep.mubr.f32.mxu0 0.0
    %1912 = vmatmul.mubr.f32.gmra.mrb[0].mxu0 %v1842
    %v1913 = vpop.f32.mrb[0].mxu0
    %v1914 = vadd.f32 %v1840, %v1913
    %v1915 = vpop.f32.mrb[0].mxu0
    %1916 = vmatprep.mubr.f32.mxu0 0.0
    %1917 = vmatmul.mubr.f32.gmra.mrb[0].mxu0 %v1845
    %v1918 = vpop.f32.mrb[0].mxu0
    %v1919 = vadd.f32 %v1840, %v1918
    %v1920 = vpop.f32.mrb[0].mxu0
    %1921 = vdwg.mxu0
    %1924 = vrot.lane.b32.xlu0 %v1914, 96
    %v1925 = vpop.permute.xlu0 %1924
    %1926 = vrot.lane.b32.xlu0 %v1919, 96
    %v1927 = vpop.permute.xlu0 %1926
    %v1928 = vsel %vm197, %v1914, 0
    %v1930 = vsel %vm197, %v1919, 0
    %v1932 = vsel %vm197, %v1925, 0
    %v1934 = vsel %vm197, %v1927, 0
    %1936 = vmatprep.subr.mxu0 0.0
    %1937 = vmatpush1.xpose.msra.mxu0 %v1932
    %1938 = vmatprep.subr.mxu0 0.0
    %1939 = vmatpush1.xpose.msra.mxu0 %v1934
    %1940 = vmatprep.subr.mxu0 0.0
    %1941 = vmatpush1.xpose.msra.mxu0 0.0
    %1942 = vmatprep.subr.mxu0 0.0
    %1943 = vmatpush1.xpose.msra.mxu0 0.0
    %1944 = vmatprep.subr.mxu0 0.0
    %1945 = vmatpush1.xpose.msra.mxu0 0.0
    %1946 = vmatprep.subr.mxu0 0.0
    %1947 = vmatpush1.xpose.msra.mxu0 0.0
    %1948 = vmatprep.subr.mxu0 0.0
    %1949 = vmatpush1.xpose.msra.mxu0 0.0
    %1950 = vmatprep.subr.mxu0 0.0
    %1951 = vmatpush1.xpose.msra.mxu0 0.0
    %1952 = vmatprep.subr.mxu0 0.0
    %1953 = vmatpush1.xpose.msra.mxu0 0.0
    %1954 = vmatprep.subr.mxu0 0.0
    %1955 = vmatpush1.xpose.msra.mxu0 0.0
    %1956 = vmatprep.subr.mxu0 0.0
    %1957 = vmatpush1.xpose.msra.mxu0 0.0
    %1958 = vmatprep.subr.mxu0 0.0
    %1959 = vmatpush1.xpose.msra.mxu0 0.0
    %1960 = vmatprep.subr.mxu0 0.0
    %1961 = vmatpush1.xpose.msra.mxu0 0.0
    %1962 = vmatprep.subr.mxu0 0.0
    %1963 = vmatpush1.xpose.msra.mxu0 0.0
    %1964 = vmatprep.subr.mxu0 0.0
    %1965 = vmatpush1.xpose.msra.mxu0 0.0
    %1966 = vmatprep.subr.mxu0 0.0
    %1967 = vmatpush1.xpose.msra.mxu0 0.0
    %1968 = vmatprep.subr.mxu0 0.0
    %1969 = vmatpush1.xpose.msra.mxu0 0.0
    %1970 = vmatprep.subr.mxu0 0.0
    %1971 = vmatpush1.xpose.msra.mxu0 0.0
    %1972 = vmatprep.subr.mxu0 0.0
    %1973 = vmatpush1.xpose.msra.mxu0 0.0
    %1974 = vmatprep.subr.mxu0 0.0
    %1975 = vmatpush1.xpose.msra.mxu0 0.0
    %1976 = vmatprep.subr.mxu0 0.0
    %1977 = vmatpush1.xpose.msra.mxu0 0.0
    %1978 = vmatprep.subr.mxu0 0.0
    %1979 = vmatpush1.xpose.msra.mxu0 0.0
    %1980 = vmatprep.subr.mxu0 0.0
    %1981 = vmatpush1.xpose.msra.mxu0 0.0
    %1982 = vmatprep.subr.mxu0 0.0
    %1983 = vmatpush1.xpose.msra.mxu0 0.0
    %1984 = vmatprep.subr.mxu0 0.0
    %1985 = vmatpush1.xpose.msra.mxu0 0.0
    %1986 = vmatprep.subr.mxu0 0.0
    %1987 = vmatpush1.xpose.msra.mxu0 0.0
    %1988 = vmatprep.subr.mxu0 0.0
    %1989 = vmatpush1.xpose.msra.mxu0 0.0
    %1990 = vmatprep.subr.mxu0 0.0
    %1991 = vmatpush1.xpose.msra.mxu0 0.0
    %1992 = vmatprep.subr.mxu0 0.0
    %1993 = vmatpush1.xpose.msra.mxu0 0.0
    %1994 = vmatprep.subr.mxu0 0.0
    %1995 = vmatpush1.xpose.msra.mxu0 0.0
    %1996 = vmatprep.subr.mxu0 0.0
    %1997 = vmatpush1.xpose.msra.mxu0 0.0
    %1998 = vmatprep.subr.mxu0 0.0
    %1999 = vmatpush1.xpose.msra.mxu0 0.0
    %2000 = vmatprep.mubr.f32.mxu0 0.0
    %2001 = vmatmul.mubr.f32.gmra.mrb[0].mxu0 %v1928
    %v2002 = vpop.f32.mrb[0].mxu0
    %v2003 = vadd.f32 %v73, %v2002
    %v2004 = vpop.f32.mrb[0].mxu0
    %2005 = vmatprep.mubr.f32.mxu0 0.0
    %2006 = vmatmul.mubr.f32.gmra.mrb[0].mxu0 %v1930
    %v2007 = vpop.f32.mrb[0].mxu0
    %v2008 = vadd.f32 %v74, %v2007
    %v2009 = vpop.f32.mrb[0].mxu0
    %2010 = vdwg.mxu0
    %v2011 = vsel %vm197, %v2003, -inf
    %2012 = vmax.xlane.f32.xlu0 %v2011
    %v2013 = vpop.xlane.xlu0 %2012
    %v2014 = vsel %vm197, %v2008, -inf
    %2015 = vmax.xlane.f32.xlu0 %v2014
    %v2016 = vpop.xlane.xlu0 %2015
    %v2017 = vsub.f32 %v2003, %v2013
    %v2018 = vsub.f32 %v2008, %v2016
    %v2019 = vmul.f32 %v2017, 1.442695
    %v2020 = vpow.pop %v2019
    %v2021 = vmul.f32 %v2018, 1.442695
    %v2022 = vpow.pop %v2021
    %v2023 = vsel %vm197, %v2020, 0.0
    %2024 = vadd.xlane.f32.xlu0 %v2023
    %v2025 = vpop.xlane.xlu0 %2024
    %v2026 = vsel %vm197, %v2022, 0.0
    %2027 = vadd.xlane.f32.xlu0 %v2026
    %v2028 = vpop.xlane.xlu0 %2027
    %v2029 = vrcp.pop %v2025
    %v2030 = vmul.f32 %v2020, %v2029
    %v2031 = vrcp.pop %v2028
    %v2032 = vmul.f32 %v2022, %v2031
    %2033 = vrot.lane.b32.xlu0 %v1914, 64
    %v2034 = vpop.permute.xlu0 %2033
    %2035 = vrot.lane.b32.xlu0 %v1919, 64
    %v2036 = vpop.permute.xlu0 %2035
    %v2040 = vsel %vm197, %v2030, 0
    %v2043 = vsel %vm197, %v2032, 0
    %2045 = vmatprep.subr.mxu0 0.0
    %2046 = vmatpush1.msra.mxu0 %v2034
    %2047 = vmatprep.subr.mxu0 0.0
    %2048 = vmatpush1.msra.mxu0 %v2036
    %2049 = vmatprep.subr.mxu0 0.0
    %2050 = vmatpush1.msra.mxu0 0.0
    %2051 = vmatprep.subr.mxu0 0.0
    %2052 = vmatpush1.msra.mxu0 0.0
    %2053 = vmatprep.subr.mxu0 0.0
    %2054 = vmatpush1.msra.mxu0 0.0
    %2055 = vmatprep.subr.mxu0 0.0
    %2056 = vmatpush1.msra.mxu0 0.0
    %2057 = vmatprep.subr.mxu0 0.0
    %2058 = vmatpush1.msra.mxu0 0.0
    %2059 = vmatprep.subr.mxu0 0.0
    %2060 = vmatpush1.msra.mxu0 0.0
    %2061 = vmatprep.subr.mxu0 0.0
    %2062 = vmatpush1.msra.mxu0 0.0
    %2063 = vmatprep.subr.mxu0 0.0
    %2064 = vmatpush1.msra.mxu0 0.0
    %2065 = vmatprep.subr.mxu0 0.0
    %2066 = vmatpush1.msra.mxu0 0.0
    %2067 = vmatprep.subr.mxu0 0.0
    %2068 = vmatpush1.msra.mxu0 0.0
    %2069 = vmatprep.subr.mxu0 0.0
    %2070 = vmatpush1.msra.mxu0 0.0
    %2071 = vmatprep.subr.mxu0 0.0
    %2072 = vmatpush1.msra.mxu0 0.0
    %2073 = vmatprep.subr.mxu0 0.0
    %2074 = vmatpush1.msra.mxu0 0.0
    %2075 = vmatprep.subr.mxu0 0.0
    %2076 = vmatpush1.msra.mxu0 0.0
    %2077 = vmatprep.subr.mxu0 0.0
    %2078 = vmatpush1.msra.mxu0 0.0
    %2079 = vmatprep.subr.mxu0 0.0
    %2080 = vmatpush1.msra.mxu0 0.0
    %2081 = vmatprep.subr.mxu0 0.0
    %2082 = vmatpush1.msra.mxu0 0.0
    %2083 = vmatprep.subr.mxu0 0.0
    %2084 = vmatpush1.msra.mxu0 0.0
    %2085 = vmatprep.subr.mxu0 0.0
    %2086 = vmatpush1.msra.mxu0 0.0
    %2087 = vmatprep.subr.mxu0 0.0
    %2088 = vmatpush1.msra.mxu0 0.0
    %2089 = vmatprep.subr.mxu0 0.0
    %2090 = vmatpush1.msra.mxu0 0.0
    %2091 = vmatprep.subr.mxu0 0.0
    %2092 = vmatpush1.msra.mxu0 0.0
    %2093 = vmatprep.subr.mxu0 0.0
    %2094 = vmatpush1.msra.mxu0 0.0
    %2095 = vmatprep.subr.mxu0 0.0
    %2096 = vmatpush1.msra.mxu0 0.0
    %2097 = vmatprep.subr.mxu0 0.0
    %2098 = vmatpush1.msra.mxu0 0.0
    %2099 = vmatprep.subr.mxu0 0.0
    %2100 = vmatpush1.msra.mxu0 0.0
    %2101 = vmatprep.subr.mxu0 0.0
    %2102 = vmatpush1.msra.mxu0 0.0
    %2103 = vmatprep.subr.mxu0 0.0
    %2104 = vmatpush1.msra.mxu0 0.0
    %2105 = vmatprep.subr.mxu0 0.0
    %2106 = vmatpush1.msra.mxu0 0.0
    %2107 = vmatprep.subr.mxu0 0.0
    %2108 = vmatpush1.msra.mxu0 0.0
    %2109 = vmatprep.mubr.f32.mxu0 0.0
    %2110 = vmatmul.mubr.f32.gmra.mrb[0].mxu0 %v2040
    %v2111 = vpop.f32.mrb[0].mxu0
    %v2112 = vadd.f32 0.0, %v2111
    %v2113 = vpop.f32.mrb[0].mxu0
    %2114 = vmatprep.mubr.f32.mxu0 0.0
    %2115 = vmatmul.mubr.f32.gmra.mrb[0].mxu0 %v2043
    %v2116 = vpop.f32.mrb[0].mxu0
    %v2117 = vadd.f32 0.0, %v2116
    %v2118 = vpop.f32.mrb[0].mxu0
    %2119 = vdwg.mxu0
    %2120 = vrot.lane.b32.xlu0 %v1914, 112
    %v2121 = vpop.permute.xlu0 %2120
    %2122 = vrot.lane.b32.xlu0 %v1919, 112
    %v2123 = vpop.permute.xlu0 %2122
    %2124 = vrot.lane.b32.xlu0 %v1914, 80
    %v2125 = vpop.permute.xlu0 %2124
    %2126 = vrot.lane.b32.xlu0 %v1919, 80
    %v2127 = vpop.permute.xlu0 %2126
    %v2128 = vsel %vm197, %v2121, 0
    %v2130 = vsel %vm197, %v2123, 0
    %v2132 = vsel %vm197, %v2125, 0
    %v2134 = vsel %vm197, %v2127, 0
    %2136 = vmatprep.subr.mxu0 0.0
    %2137 = vmatpush1.xpose.msra.mxu0 %v2132
    %2138 = vmatprep.subr.mxu0 0.0
    %2139 = vmatpush1.xpose.msra.mxu0 %v2134
    %2140 = vmatprep.subr.mxu0 0.0
    %2141 = vmatpush1.xpose.msra.mxu0 0.0
    %2142 = vmatprep.subr.mxu0 0.0
    %2143 = vmatpush1.xpose.msra.mxu0 0.0
    %2144 = vmatprep.subr.mxu0 0.0
    %2145 = vmatpush1.xpose.msra.mxu0 0.0
    %2146 = vmatprep.subr.mxu0 0.0
    %2147 = vmatpush1.xpose.msra.mxu0 0.0
    %2148 = vmatprep.subr.mxu0 0.0
    %2149 = vmatpush1.xpose.msra.mxu0 0.0
    %2150 = vmatprep.subr.mxu0 0.0
    %2151 = vmatpush1.xpose.msra.mxu0 0.0
    %2152 = vmatprep.subr.mxu0 0.0
    %2153 = vmatpush1.xpose.msra.mxu0 0.0
    %2154 = vmatprep.subr.mxu0 0.0
    %2155 = vmatpush1.xpose.msra.mxu0 0.0
    %2156 = vmatprep.subr.mxu0 0.0
    %2157 = vmatpush1.xpose.msra.mxu0 0.0
    %2158 = vmatprep.subr.mxu0 0.0
    %2159 = vmatpush1.xpose.msra.mxu0 0.0
    %2160 = vmatprep.subr.mxu0 0.0
    %2161 = vmatpush1.xpose.msra.mxu0 0.0
    %2162 = vmatprep.subr.mxu0 0.0
    %2163 = vmatpush1.xpose.msra.mxu0 0.0
    %2164 = vmatprep.subr.mxu0 0.0
    %2165 = vmatpush1.xpose.msra.mxu0 0.0
    %2166 = vmatprep.subr.mxu0 0.0
    %2167 = vmatpush1.xpose.msra.mxu0 0.0
    %2168 = vmatprep.subr.mxu0 0.0
    %2169 = vmatpush1.xpose.msra.mxu0 0.0
    %2170 = vmatprep.subr.mxu0 0.0
    %2171 = vmatpush1.xpose.msra.mxu0 0.0
    %2172 = vmatprep.subr.mxu0 0.0
    %2173 = vmatpush1.xpose.msra.mxu0 0.0
    %2174 = vmatprep.subr.mxu0 0.0
    %2175 = vmatpush1.xpose.msra.mxu0 0.0
    %2176 = vmatprep.subr.mxu0 0.0
    %2177 = vmatpush1.xpose.msra.mxu0 0.0
    %2178 = vmatprep.subr.mxu0 0.0
    %2179 = vmatpush1.xpose.msra.mxu0 0.0
    %2180 = vmatprep.subr.mxu0 0.0
    %2181 = vmatpush1.xpose.msra.mxu0 0.0
    %2182 = vmatprep.subr.mxu0 0.0
    %2183 = vmatpush1.xpose.msra.mxu0 0.0
    %2184 = vmatprep.subr.mxu0 0.0
    %2185 = vmatpush1.xpose.msra.mxu0 0.0
    %2186 = vmatprep.subr.mxu0 0.0
    %2187 = vmatpush1.xpose.msra.mxu0 0.0
    %2188 = vmatprep.subr.mxu0 0.0
    %2189 = vmatpush1.xpose.msra.mxu0 0.0
    %2190 = vmatprep.subr.mxu0 0.0
    %2191 = vmatpush1.xpose.msra.mxu0 0.0
    %2192 = vmatprep.subr.mxu0 0.0
    %2193 = vmatpush1.xpose.msra.mxu0 0.0
    %2194 = vmatprep.subr.mxu0 0.0
    %2195 = vmatpush1.xpose.msra.mxu0 0.0
    %2196 = vmatprep.subr.mxu0 0.0
    %2197 = vmatpush1.xpose.msra.mxu0 0.0
    %2198 = vmatprep.subr.mxu0 0.0
    %2199 = vmatpush1.xpose.msra.mxu0 0.0
    %2200 = vmatprep.mubr.f32.mxu0 0.0
    %2201 = vmatmul.mubr.f32.gmra.mrb[0].mxu0 %v2128
    %v2202 = vpop.f32.mrb[0].mxu0
    %v2203 = vadd.f32 %v73, %v2202
    %v2204 = vpop.f32.mrb[0].mxu0
    %2205 = vmatprep.mubr.f32.mxu0 0.0
    %2206 = vmatmul.mubr.f32.gmra.mrb[0].mxu0 %v2130
    %v2207 = vpop.f32.mrb[0].mxu0
    %v2208 = vadd.f32 %v74, %v2207
    %v2209 = vpop.f32.mrb[0].mxu0
    %2210 = vdwg.mxu0
    %v2211 = vsel %vm197, %v2203, -inf
    %2212 = vmax.xlane.f32.xlu0 %v2211
    %v2213 = vpop.xlane.xlu0 %2212
    %v2214 = vsel %vm197, %v2208, -inf
    %2215 = vmax.xlane.f32.xlu0 %v2214
    %v2216 = vpop.xlane.xlu0 %2215
    %v2217 = vsub.f32 %v2203, %v2213
    %v2218 = vsub.f32 %v2208, %v2216
    %v2219 = vmul.f32 %v2217, 1.442695
    %v2220 = vpow.pop %v2219
    %v2221 = vmul.f32 %v2218, 1.442695
    %v2222 = vpow.pop %v2221
    %v2223 = vsel %vm197, %v2220, 0.0
    %2224 = vadd.xlane.f32.xlu0 %v2223
    %v2225 = vpop.xlane.xlu0 %2224
    %v2226 = vsel %vm197, %v2222, 0.0
    %2227 = vadd.xlane.f32.xlu0 %v2226
    %v2228 = vpop.xlane.xlu0 %2227
    %v2229 = vrcp.pop %v2225
    %v2230 = vmul.f32 %v2220, %v2229
    %v2231 = vrcp.pop %v2228
    %v2232 = vmul.f32 %v2222, %v2231
    %2233 = vrot.lane.b32.xlu0 %v1914, 48
    %v2234 = vpop.permute.xlu0 %2233
    %2235 = vrot.lane.b32.xlu0 %v1919, 48
    %v2236 = vpop.permute.xlu0 %2235
    %v2240 = vsel %vm197, %v2230, 0
    %v2243 = vsel %vm197, %v2232, 0
    %2245 = vmatprep.subr.mxu0 0.0
    %2246 = vmatpush1.msra.mxu0 %v2234
    %2247 = vmatprep.subr.mxu0 0.0
    %2248 = vmatpush1.msra.mxu0 %v2236
    %2249 = vmatprep.subr.mxu0 0.0
    %2250 = vmatpush1.msra.mxu0 0.0
    %2251 = vmatprep.subr.mxu0 0.0
    %2252 = vmatpush1.msra.mxu0 0.0
    %2253 = vmatprep.subr.mxu0 0.0
    %2254 = vmatpush1.msra.mxu0 0.0
    %2255 = vmatprep.subr.mxu0 0.0
    %2256 = vmatpush1.msra.mxu0 0.0
    %2257 = vmatprep.subr.mxu0 0.0
    %2258 = vmatpush1.msra.mxu0 0.0
    %2259 = vmatprep.subr.mxu0 0.0
    %2260 = vmatpush1.msra.mxu0 0.0
    %2261 = vmatprep.subr.mxu0 0.0
    %2262 = vmatpush1.msra.mxu0 0.0
    %2263 = vmatprep.subr.mxu0 0.0
    %2264 = vmatpush1.msra.mxu0 0.0
    %2265 = vmatprep.subr.mxu0 0.0
    %2266 = vmatpush1.msra.mxu0 0.0
    %2267 = vmatprep.subr.mxu0 0.0
    %2268 = vmatpush1.msra.mxu0 0.0
    %2269 = vmatprep.subr.mxu0 0.0
    %2270 = vmatpush1.msra.mxu0 0.0
    %2271 = vmatprep.subr.mxu0 0.0
    %2272 = vmatpush1.msra.mxu0 0.0
    %2273 = vmatprep.subr.mxu0 0.0
    %2274 = vmatpush1.msra.mxu0 0.0
    %2275 = vmatprep.subr.mxu0 0.0
    %2276 = vmatpush1.msra.mxu0 0.0
    %2277 = vmatprep.subr.mxu0 0.0
    %2278 = vmatpush1.msra.mxu0 0.0
    %2279 = vmatprep.subr.mxu0 0.0
    %2280 = vmatpush1.msra.mxu0 0.0
    %2281 = vmatprep.subr.mxu0 0.0
    %2282 = vmatpush1.msra.mxu0 0.0
    %2283 = vmatprep.subr.mxu0 0.0
    %2284 = vmatpush1.msra.mxu0 0.0
    %2285 = vmatprep.subr.mxu0 0.0
    %2286 = vmatpush1.msra.mxu0 0.0
    %2287 = vmatprep.subr.mxu0 0.0
    %2288 = vmatpush1.msra.mxu0 0.0
    %2289 = vmatprep.subr.mxu0 0.0
    %2290 = vmatpush1.msra.mxu0 0.0
    %2291 = vmatprep.subr.mxu0 0.0
    %2292 = vmatpush1.msra.mxu0 0.0
    %2293 = vmatprep.subr.mxu0 0.0
    %2294 = vmatpush1.msra.mxu0 0.0
    %2295 = vmatprep.subr.mxu0 0.0
    %2296 = vmatpush1.msra.mxu0 0.0
    %2297 = vmatprep.subr.mxu0 0.0
    %2298 = vmatpush1.msra.mxu0 0.0
    %2299 = vmatprep.subr.mxu0 0.0
    %2300 = vmatpush1.msra.mxu0 0.0
    %2301 = vmatprep.subr.mxu0 0.0
    %2302 = vmatpush1.msra.mxu0 0.0
    %2303 = vmatprep.subr.mxu0 0.0
    %2304 = vmatpush1.msra.mxu0 0.0
    %2305 = vmatprep.subr.mxu0 0.0
    %2306 = vmatpush1.msra.mxu0 0.0
    %2307 = vmatprep.subr.mxu0 0.0
    %2308 = vmatpush1.msra.mxu0 0.0
    %2309 = vmatprep.mubr.f32.mxu0 0.0
    %2310 = vmatmul.mubr.f32.gmra.mrb[0].mxu0 %v2240
    %v2311 = vpop.f32.mrb[0].mxu0
    %v2312 = vadd.f32 0.0, %v2311
    %v2313 = vpop.f32.mrb[0].mxu0
    %2314 = vmatprep.mubr.f32.mxu0 0.0
    %2315 = vmatmul.mubr.f32.gmra.mrb[0].mxu0 %v2243
    %v2316 = vpop.f32.mrb[0].mxu0
    %v2317 = vadd.f32 0.0, %v2316
    %v2318 = vpop.f32.mrb[0].mxu0
    %2319 = vdwg.mxu0
    %2322 = vrot.lane.b32.xlu0 %v2312, 16
    %v2323 = vpop.permute.xlu0 %2322
    %2324 = vrot.lane.b32.xlu0 %v2317, 16
    %v2325 = vpop.permute.xlu0 %2324
    %v2328 = vsel %vm197, %v2112, %v2323
    %v2329 = vsel %vm197, %v2117, %v2325
    %v2331 = vsel %vm109, %v2328, 0
    %v2334 = vsel %vm109, %v2329, 0
    %2336 = vmatprep.subr.mxu0 0.0
    %2337 = vmatpush1.msra.mxu0 %v1812
    %2338 = vmatprep.subr.mxu0 0.0
    %2339 = vmatpush1.msra.mxu0 %v1813
    %2340 = vmatprep.subr.mxu0 0.0
    %2341 = vmatpush1.msra.mxu0 %v1814
    %2342 = vmatprep.subr.mxu0 0.0
    %2343 = vmatpush1.msra.mxu0 %v1815
    %2344 = vmatprep.subr.mxu0 0.0
    %2345 = vmatpush1.msra.mxu0 0.0
    %2346 = vmatprep.subr.mxu0 0.0
    %2347 = vmatpush1.msra.mxu0 0.0
    %2348 = vmatprep.subr.mxu0 0.0
    %2349 = vmatpush1.msra.mxu0 0.0
    %2350 = vmatprep.subr.mxu0 0.0
    %2351 = vmatpush1.msra.mxu0 0.0
    %2352 = vmatprep.subr.mxu0 0.0
    %2353 = vmatpush1.msra.mxu0 0.0
    %2354 = vmatprep.subr.mxu0 0.0
    %2355 = vmatpush1.msra.mxu0 0.0
    %2356 = vmatprep.subr.mxu0 0.0
    %2357 = vmatpush1.msra.mxu0 0.0
    %2358 = vmatprep.subr.mxu0 0.0
    %2359 = vmatpush1.msra.mxu0 0.0
    %2360 = vmatprep.subr.mxu0 0.0
    %2361 = vmatpush1.msra.mxu0 0.0
    %2362 = vmatprep.subr.mxu0 0.0
    %2363 = vmatpush1.msra.mxu0 0.0
    %2364 = vmatprep.subr.mxu0 0.0
    %2365 = vmatpush1.msra.mxu0 0.0
    %2366 = vmatprep.subr.mxu0 0.0
    %2367 = vmatpush1.msra.mxu0 0.0
    %2368 = vmatprep.subr.mxu0 0.0
    %2369 = vmatpush1.msra.mxu0 0.0
    %2370 = vmatprep.subr.mxu0 0.0
    %2371 = vmatpush1.msra.mxu0 0.0
    %2372 = vmatprep.subr.mxu0 0.0
    %2373 = vmatpush1.msra.mxu0 0.0
    %2374 = vmatprep.subr.mxu0 0.0
    %2375 = vmatpush1.msra.mxu0 0.0
    %2376 = vmatprep.subr.mxu0 0.0
    %2377 = vmatpush1.msra.mxu0 0.0
    %2378 = vmatprep.subr.mxu0 0.0
    %2379 = vmatpush1.msra.mxu0 0.0
    %2380 = vmatprep.subr.mxu0 0.0
    %2381 = vmatpush1.msra.mxu0 0.0
    %2382 = vmatprep.subr.mxu0 0.0
    %2383 = vmatpush1.msra.mxu0 0.0
    %2384 = vmatprep.subr.mxu0 0.0
    %2385 = vmatpush1.msra.mxu0 0.0
    %2386 = vmatprep.subr.mxu0 0.0
    %2387 = vmatpush1.msra.mxu0 0.0
    %2388 = vmatprep.subr.mxu0 0.0
    %2389 = vmatpush1.msra.mxu0 0.0
    %2390 = vmatprep.subr.mxu0 0.0
    %2391 = vmatpush1.msra.mxu0 0.0
    %2392 = vmatprep.subr.mxu0 0.0
    %2393 = vmatpush1.msra.mxu0 0.0
    %2394 = vmatprep.subr.mxu0 0.0
    %2395 = vmatpush1.msra.mxu0 0.0
    %2396 = vmatprep.subr.mxu0 0.0
    %2397 = vmatpush1.msra.mxu0 0.0
    %2398 = vmatprep.subr.mxu0 0.0
    %2399 = vmatpush1.msra.mxu0 0.0
    %2400 = vmatprep.mubr.f32.mxu0 0.0
    %2401 = vmatmul.mubr.f32.gmra.mrb[0].mxu0 %v2331
    %v2402 = vpop.f32.mrb[0].mxu0
    %v2403 = vadd.f32 0.0, %v2402
    %v2404 = vpop.f32.mrb[0].mxu0
    %2405 = vmatprep.mubr.f32.mxu0 0.0
    %2406 = vmatmul.mubr.f32.gmra.mrb[0].mxu0 %v2334
    %v2407 = vpop.f32.mrb[0].mxu0
    %v2408 = vadd.f32 0.0, %v2407
    %v2409 = vpop.f32.mrb[0].mxu0
    %2410 = vdwg.mxu0
    %v2411 = vlaneseq
    %v2412 = vshrl.u32 %v2411, 7
    %v2413 = vsub.s32 0, %v2412
    %v2414 = vrot.slane %v1830, %v2413
    %v2415 = vadd.f32 %v2403, %v2414
    %v2416 = vadd.f32 %v2408, %v2414
    %v2417 = vadd.f32 %v1805, %v2415
    %v2418 = vadd.f32 %v1806, %v2416
    %v2419 = vsel %vm109, %v2417, 0.0
    %2420 = vadd.xlane.f32.xlu0 %v2419
    %v2421 = vpop.xlane.xlu0 %2420
    %v2422 = vsel %vm109, %v2418, 0.0
    %2423 = vadd.xlane.f32.xlu0 %v2422
    %v2424 = vpop.xlane.xlu0 %2423
    %v2425 = vmul.f32 %v2421, %v695
    %v2426 = vmul.f32 %v2424, %v695
    %v2427 = vsub.f32 %v2417, %v2425
    %v2428 = vsub.f32 %v2418, %v2426
    %v2429 = vmul.f32 %v2427, %v2427
    %v2430 = vmul.f32 %v2428, %v2428
    %v2431 = vsel %vm109, %v2429, 0.0
    %2432 = vadd.xlane.f32.xlu0 %v2431
    %v2433 = vpop.xlane.xlu0 %2432
    %v2434 = vsel %vm109, %v2430, 0.0
    %2435 = vadd.xlane.f32.xlu0 %v2434
    %v2436 = vpop.xlane.xlu0 %2435
    %v2437 = vmul.f32 %v2433, %v695
    %v2438 = vmul.f32 %v2436, %v695
    %v2439 = vadd.f32 %v2437, 1e-05
    %v2440 = vadd.f32 %v2438, 1e-05
    %v2441 = vrsqrt.pop %v2439
    %v2442 = vrsqrt.pop %v2440
    %v2443 = vmul.f32 %v2427, %v2441
    %v2444 = vmul.f32 %v2428, %v2442
    %v2445 = vlaneseq
    %v2446 = vshrl.u32 %v2445, 7
    %v2447 = vsub.s32 0, %v2446
    %v2448 = vrot.slane %v1833, %v2447
    %v2449 = vmul.f32 %v2443, %v2448
    %v2450 = vmul.f32 %v2444, %v2448
    %v2451 = vlaneseq
    %v2452 = vshrl.u32 %v2451, 7
    %v2453 = vsub.s32 0, %v2452
    %v2454 = vrot.slane %v1834, %v2453
    %v2455 = vadd.f32 %v2449, %v2454
    %v2456 = vadd.f32 %v2450, %v2454
    %v2457 = vlaneseq
    %v2458 = vshrl.u32 %v2457, 7
    %v2459 = vsub.s32 0, %v2458
    %v2460 = vrot.slane %v1831, %v2459
    %v2462 = vsel %vm109, %v2455, 0
    %v2465 = vsel %vm109, %v2456, 0
    %2467 = vmatprep.subr.mxu0 0.0
    %2468 = vmatpush1.msra.mxu0 %v1816
    %2469 = vmatprep.subr.mxu0 0.0
    %2470 = vmatpush1.msra.mxu0 %v1817
    %2471 = vmatprep.subr.mxu0 0.0
    %2472 = vmatpush1.msra.mxu0 %v1818
    %2473 = vmatprep.subr.mxu0 0.0
    %2474 = vmatpush1.msra.mxu0 %v1819
    %2475 = vmatprep.subr.mxu0 0.0
    %2476 = vmatpush1.msra.mxu0 0.0
    %2477 = vmatprep.subr.mxu0 0.0
    %2478 = vmatpush1.msra.mxu0 0.0
    %2479 = vmatprep.subr.mxu0 0.0
    %2480 = vmatpush1.msra.mxu0 0.0
    %2481 = vmatprep.subr.mxu0 0.0
    %2482 = vmatpush1.msra.mxu0 0.0
    %2483 = vmatprep.subr.mxu0 0.0
    %2484 = vmatpush1.msra.mxu0 0.0
    %2485 = vmatprep.subr.mxu0 0.0
    %2486 = vmatpush1.msra.mxu0 0.0
    %2487 = vmatprep.subr.mxu0 0.0
    %2488 = vmatpush1.msra.mxu0 0.0
    %2489 = vmatprep.subr.mxu0 0.0
    %2490 = vmatpush1.msra.mxu0 0.0
    %2491 = vmatprep.subr.mxu0 0.0
    %2492 = vmatpush1.msra.mxu0 0.0
    %2493 = vmatprep.subr.mxu0 0.0
    %2494 = vmatpush1.msra.mxu0 0.0
    %2495 = vmatprep.subr.mxu0 0.0
    %2496 = vmatpush1.msra.mxu0 0.0
    %2497 = vmatprep.subr.mxu0 0.0
    %2498 = vmatpush1.msra.mxu0 0.0
    %2499 = vmatprep.subr.mxu0 0.0
    %2500 = vmatpush1.msra.mxu0 0.0
    %2501 = vmatprep.subr.mxu0 0.0
    %2502 = vmatpush1.msra.mxu0 0.0
    %2503 = vmatprep.subr.mxu0 0.0
    %2504 = vmatpush1.msra.mxu0 0.0
    %2505 = vmatprep.subr.mxu0 0.0
    %2506 = vmatpush1.msra.mxu0 0.0
    %2507 = vmatprep.subr.mxu0 0.0
    %2508 = vmatpush1.msra.mxu0 0.0
    %2509 = vmatprep.subr.mxu0 0.0
    %2510 = vmatpush1.msra.mxu0 0.0
    %2511 = vmatprep.subr.mxu0 0.0
    %2512 = vmatpush1.msra.mxu0 0.0
    %2513 = vmatprep.subr.mxu0 0.0
    %2514 = vmatpush1.msra.mxu0 0.0
    %2515 = vmatprep.subr.mxu0 0.0
    %2516 = vmatpush1.msra.mxu0 0.0
    %2517 = vmatprep.subr.mxu0 0.0
    %2518 = vmatpush1.msra.mxu0 0.0
    %2519 = vmatprep.subr.mxu0 0.0
    %2520 = vmatpush1.msra.mxu0 0.0
    %2521 = vmatprep.subr.mxu0 0.0
    %2522 = vmatpush1.msra.mxu0 0.0
    %2523 = vmatprep.subr.mxu0 0.0
    %2524 = vmatpush1.msra.mxu0 0.0
    %2525 = vmatprep.subr.mxu0 0.0
    %2526 = vmatpush1.msra.mxu0 0.0
    %2527 = vmatprep.subr.mxu0 0.0
    %2528 = vmatpush1.msra.mxu0 0.0
    %2529 = vmatprep.subr.mxu0 0.0
    %2530 = vmatpush1.msra.mxu0 0.0
    %2531 = vmatprep.mubr.f32.mxu0 0.0
    %2532 = vmatmul.mubr.f32.gmra.mrb[0].mxu0 %v2462
    %v2533 = vpop.f32.mrb[0].mxu0
    %v2534 = vadd.f32 %v2460, %v2533
    %v2535 = vpop.f32.mrb[0].mxu0
    %2536 = vmatprep.mubr.f32.mxu0 0.0
    %2537 = vmatmul.mubr.f32.gmra.mrb[0].mxu0 %v2465
    %v2538 = vpop.f32.mrb[0].mxu0
    %v2539 = vadd.f32 %v2460, %v2538
    %v2540 = vpop.f32.mrb[0].mxu0
    %2541 = vdwg.mxu0
    %v2542 = vmax.f32 %v2534, 0.0
    %v2543 = vmax.f32 %v2539, 0.0
    %v2545 = vsel %vm815, %v2542, 0
    %v2548 = vsel %vm815, %v2543, 0
    %2550 = vmatprep.subr.mxu0 0.0
    %2551 = vmatpush1.msra.mxu0 %v1820
    %2552 = vmatprep.subr.mxu0 0.0
    %2553 = vmatpush1.msra.mxu0 %v1821
    %2554 = vmatprep.subr.mxu0 0.0
    %2555 = vmatpush1.msra.mxu0 %v1822
    %2556 = vmatprep.subr.mxu0 0.0
    %2557 = vmatpush1.msra.mxu0 %v1823
    %2558 = vmatprep.subr.mxu0 0.0
    %2559 = vmatpush1.msra.mxu0 %v1824
    %2560 = vmatprep.subr.mxu0 0.0
    %2561 = vmatpush1.msra.mxu0 %v1825
    %2562 = vmatprep.subr.mxu0 0.0
    %2563 = vmatpush1.msra.mxu0 %v1826
    %2564 = vmatprep.subr.mxu0 0.0
    %2565 = vmatpush1.msra.mxu0 %v1827
    %2566 = vmatprep.subr.mxu0 0.0
    %2567 = vmatpush1.msra.mxu0 0.0
    %2568 = vmatprep.subr.mxu0 0.0
    %2569 = vmatpush1.msra.mxu0 0.0
    %2570 = vmatprep.subr.mxu0 0.0
    %2571 = vmatpush1.msra.mxu0 0.0
    %2572 = vmatprep.subr.mxu0 0.0
    %2573 = vmatpush1.msra.mxu0 0.0
    %2574 = vmatprep.subr.mxu0 0.0
    %2575 = vmatpush1.msra.mxu0 0.0
    %2576 = vmatprep.subr.mxu0 0.0
    %2577 = vmatpush1.msra.mxu0 0.0
    %2578 = vmatprep.subr.mxu0 0.0
    %2579 = vmatpush1.msra.mxu0 0.0
    %2580 = vmatprep.subr.mxu0 0.0
    %2581 = vmatpush1.msra.mxu0 0.0
    %2582 = vmatprep.subr.mxu0 0.0
    %2583 = vmatpush1.msra.mxu0 0.0
    %2584 = vmatprep.subr.mxu0 0.0
    %2585 = vmatpush1.msra.mxu0 0.0
    %2586 = vmatprep.subr.mxu0 0.0
    %2587 = vmatpush1.msra.mxu0 0.0
    %2588 = vmatprep.subr.mxu0 0.0
    %2589 = vmatpush1.msra.mxu0 0.0
    %2590 = vmatprep.subr.mxu0 0.0
    %2591 = vmatpush1.msra.mxu0 0.0
    %2592 = vmatprep.subr.mxu0 0.0
    %2593 = vmatpush1.msra.mxu0 0.0
    %2594 = vmatprep.subr.mxu0 0.0
    %2595 = vmatpush1.msra.mxu0 0.0
    %2596 = vmatprep.subr.mxu0 0.0
    %2597 = vmatpush1.msra.mxu0 0.0
    %2598 = vmatprep.subr.mxu0 0.0
    %2599 = vmatpush1.msra.mxu0 0.0
    %2600 = vmatprep.subr.mxu0 0.0
    %2601 = vmatpush1.msra.mxu0 0.0
    %2602 = vmatprep.subr.mxu0 0.0
    %2603 = vmatpush1.msra.mxu0 0.0
    %2604 = vmatprep.subr.mxu0 0.0
    %2605 = vmatpush1.msra.mxu0 0.0
    %2606 = vmatprep.subr.mxu0 0.0
    %2607 = vmatpush1.msra.mxu0 0.0
    %2608 = vmatprep.subr.mxu0 0.0
    %2609 = vmatpush1.msra.mxu0 0.0
    %2610 = vmatprep.subr.mxu0 0.0
    %2611 = vmatpush1.msra.mxu0 0.0
    %2612 = vmatprep.subr.mxu0 0.0
    %2613 = vmatpush1.msra.mxu0 0.0
    %2614 = vmatprep.mubr.f32.mxu0 0.0
    %2615 = vmatmul.mubr.f32.gmra.mrb[0].mxu0 %v2545
    %v2616 = vpop.f32.mrb[0].mxu0
    %v2617 = vadd.f32 0.0, %v2616
    %v2618 = vpop.f32.mrb[0].mxu0
    %2619 = vmatprep.mubr.f32.mxu0 0.0
    %2620 = vmatmul.mubr.f32.gmra.mrb[0].mxu0 %v2548
    %v2621 = vpop.f32.mrb[0].mxu0
    %v2622 = vadd.f32 0.0, %v2621
    %v2623 = vpop.f32.mrb[0].mxu0
    %2624 = vdwg.mxu0
    %v2625 = vlaneseq
    %v2626 = vshrl.u32 %v2625, 7
    %v2627 = vsub.s32 0, %v2626
    %v2628 = vrot.slane %v1832, %v2627
    %v2629 = vadd.f32 %v2617, %v2628
    %v2630 = vadd.f32 %v2622, %v2628
    %v2631 = vadd.f32 %v2455, %v2629
    %v2632 = vadd.f32 %v2456, %v2630
    %v2633 = vsel %vm109, %v2631, 0.0
    %2634 = vadd.xlane.f32.xlu0 %v2633
    %v2635 = vpop.xlane.xlu0 %2634
    %v2636 = vsel %vm109, %v2632, 0.0
    %2637 = vadd.xlane.f32.xlu0 %v2636
    %v2638 = vpop.xlane.xlu0 %2637
    %v2639 = vmul.f32 %v2635, %v695
    %v2640 = vmul.f32 %v2638, %v695
    %v2641 = vsub.f32 %v2631, %v2639
    %v2642 = vsub.f32 %v2632, %v2640
    %v2643 = vmul.f32 %v2641, %v2641
    %v2644 = vmul.f32 %v2642, %v2642
    %v2645 = vsel %vm109, %v2643, 0.0
    %2646 = vadd.xlane.f32.xlu0 %v2645
    %v2647 = vpop.xlane.xlu0 %2646
    %v2648 = vsel %vm109, %v2644, 0.0
    %2649 = vadd.xlane.f32.xlu0 %v2648
    %v2650 = vpop.xlane.xlu0 %2649
    %v2651 = vmul.f32 %v2647, %v695
    %v2652 = vmul.f32 %v2650, %v695
    %v2653 = vadd.f32 %v2651, 1e-05
    %v2654 = vadd.f32 %v2652, 1e-05
    %v2655 = vrsqrt.pop %v2653
    %v2656 = vrsqrt.pop %v2654
    %v2657 = vmul.f32 %v2641, %v2655
    %v2658 = vmul.f32 %v2642, %v2656
    %v2659 = vlaneseq
    %v2660 = vshrl.u32 %v2659, 7
    %v2661 = vsub.s32 0, %v2660
    %v2662 = vrot.slane %v1835, %v2661
    %v2663 = vmul.f32 %v2657, %v2662
    %v2664 = vmul.f32 %v2658, %v2662
    %v2665 = vlaneseq
    %v2666 = vshrl.u32 %v2665, 7
    %v2667 = vsub.s32 0, %v2666
    %v2668 = vrot.slane %v1836, %v2667
    %v2669 = vadd.f32 %v2663, %v2668
    %v2670 = vadd.f32 %v2664, %v2668
    %s2671 = scalar_lea.vmem [#allocation7], 480
    %v2672 = vld [vmem:[%s2671] sm:$0xff]
    %v2673 = vld [vmem:[%s2671 + $0x8] sm:$0xff]
    %v2674 = vld [vmem:[%s2671 + $0x10] sm:$0xff]
    %v2675 = vld [vmem:[%s2671 + $0x18] sm:$0xff]
    %v2676 = vld [vmem:[%s2671 + $0x20] sm:$0xff]
    %v2677 = vld [vmem:[%s2671 + $0x28] sm:$0xff]
    %v2678 = vld [vmem:[%s2671 + $0x30] sm:$0xff]
    %v2679 = vld [vmem:[%s2671 + $0x38] sm:$0xff]
    %v2680 = vld [vmem:[%s2671 + $0x40] sm:$0xff]
    %v2681 = vld [vmem:[%s2671 + $0x48] sm:$0xff]
    %v2682 = vld [vmem:[%s2671 + $0x50] sm:$0xff]
    %v2683 = vld [vmem:[%s2671 + $0x58] sm:$0xff]
    %v2684 = vld [vmem:[%s2671 + $0x60] sm:$0xff]
    %v2685 = vld [vmem:[%s2671 + $0x68] sm:$0xff]
    %v2686 = vld [vmem:[%s2671 + $0x70] sm:$0xff]
    %v2687 = vld [vmem:[%s2671 + $0x78] sm:$0xff]
    %v2688 = vld [vmem:[%s2671 + $0x80] sm:$0xff]
    %v2689 = vld [vmem:[%s2671 + $0x88] sm:$0xff]
    %v2690 = vld [vmem:[%s2671 + $0x90] sm:$0xff]
    %v2691 = vld [vmem:[%s2671 + $0x98] sm:$0xff]
    %s2692 = scalar_lea.vmem [#allocation8], 24
    %v2693 = vld [vmem:[%s2692] sm:$0x1]
    %v2694 = vld [vmem:[%s2692 + $0x1] sm:$0x1]
    %v2695 = vld [vmem:[%s2692 + $0x2] sm:$0x1]
    %v2696 = vld [vmem:[%s2692 + $0x3] sm:$0x1]
    %v2697 = vld [vmem:[%s2692 + $0x4] sm:$0x1]
    %v2698 = vld [vmem:[%s2692 + $0x5] sm:$0x1]
    %v2699 = vld [vmem:[%s2692 + $0x6] sm:$0x1]
    %v2700 = vld [vmem:[%s2692 + $0x7] sm:$0x1]
    %v2701 = vlaneseq
    %v2702 = vshrl.u32 %v2701, 7
    %v2703 = vsub.s32 0, %v2702
    %v2704 = vrot.slane %v2693, %v2703
    %v2706 = vsel %vm109, %v2669, 0
    %v2709 = vsel %vm109, %v2670, 0
    %2711 = vmatprep.subr.mxu0 0.0
    %2712 = vmatpush1.msra.mxu0 %v2672
    %2713 = vmatprep.subr.mxu0 0.0
    %2714 = vmatpush1.msra.mxu0 %v2673
    %2715 = vmatprep.subr.mxu0 0.0
    %2716 = vmatpush1.msra.mxu0 %v2674
    %2717 = vmatprep.subr.mxu0 0.0
    %2718 = vmatpush1.msra.mxu0 %v2675
    %2719 = vmatprep.subr.mxu0 0.0
    %2720 = vmatpush1.msra.mxu0 0.0
    %2721 = vmatprep.subr.mxu0 0.0
    %2722 = vmatpush1.msra.mxu0 0.0
    %2723 = vmatprep.subr.mxu0 0.0
    %2724 = vmatpush1.msra.mxu0 0.0
    %2725 = vmatprep.subr.mxu0 0.0
    %2726 = vmatpush1.msra.mxu0 0.0
    %2727 = vmatprep.subr.mxu0 0.0
    %2728 = vmatpush1.msra.mxu0 0.0
    %2729 = vmatprep.subr.mxu0 0.0
    %2730 = vmatpush1.msra.mxu0 0.0
    %2731 = vmatprep.subr.mxu0 0.0
    %2732 = vmatpush1.msra.mxu0 0.0
    %2733 = vmatprep.subr.mxu0 0.0
    %2734 = vmatpush1.msra.mxu0 0.0
    %2735 = vmatprep.subr.mxu0 0.0
    %2736 = vmatpush1.msra.mxu0 0.0
    %2737 = vmatprep.subr.mxu0 0.0
    %2738 = vmatpush1.msra.mxu0 0.0
    %2739 = vmatprep.subr.mxu0 0.0
    %2740 = vmatpush1.msra.mxu0 0.0
    %2741 = vmatprep.subr.mxu0 0.0
    %2742 = vmatpush1.msra.mxu0 0.0
    %2743 = vmatprep.subr.mxu0 0.0
    %2744 = vmatpush1.msra.mxu0 0.0
    %2745 = vmatprep.subr.mxu0 0.0
    %2746 = vmatpush1.msra.mxu0 0.0
    %2747 = vmatprep.subr.mxu0 0.0
    %2748 = vmatpush1.msra.mxu0 0.0
    %2749 = vmatprep.subr.mxu0 0.0
    %2750 = vmatpush1.msra.mxu0 0.0
    %2751 = vmatprep.subr.mxu0 0.0
    %2752 = vmatpush1.msra.mxu0 0.0
    %2753 = vmatprep.subr.mxu0 0.0
    %2754 = vmatpush1.msra.mxu0 0.0
    %2755 = vmatprep.subr.mxu0 0.0
    %2756 = vmatpush1.msra.mxu0 0.0
    %2757 = vmatprep.subr.mxu0 0.0
    %2758 = vmatpush1.msra.mxu0 0.0
    %2759 = vmatprep.subr.mxu0 0.0
    %2760 = vmatpush1.msra.mxu0 0.0
    %2761 = vmatprep.subr.mxu0 0.0
    %2762 = vmatpush1.msra.mxu0 0.0
    %2763 = vmatprep.subr.mxu0 0.0
    %2764 = vmatpush1.msra.mxu0 0.0
    %2765 = vmatprep.subr.mxu0 0.0
    %2766 = vmatpush1.msra.mxu0 0.0
    %2767 = vmatprep.subr.mxu0 0.0
    %2768 = vmatpush1.msra.mxu0 0.0
    %2769 = vmatprep.subr.mxu0 0.0
    %2770 = vmatpush1.msra.mxu0 0.0
    %2771 = vmatprep.subr.mxu0 0.0
    %2772 = vmatpush1.msra.mxu0 0.0
    %2773 = vmatprep.subr.mxu0 0.0
    %2774 = vmatpush1.msra.mxu0 0.0
    %2775 = vmatprep.mubr.f32.mxu0 0.0
    %2776 = vmatmul.mubr.f32.gmra.mrb[0].mxu0 %v2706
    %v2777 = vpop.f32.mrb[0].mxu0
    %v2778 = vadd.f32 %v2704, %v2777
    %v2779 = vpop.f32.mrb[0].mxu0
    %2780 = vmatprep.mubr.f32.mxu0 0.0
    %2781 = vmatmul.mubr.f32.gmra.mrb[0].mxu0 %v2709
    %v2782 = vpop.f32.mrb[0].mxu0
    %v2783 = vadd.f32 %v2704, %v2782
    %v2784 = vpop.f32.mrb[0].mxu0
    %2785 = vdwg.mxu0
    %2788 = vrot.lane.b32.xlu0 %v2778, 96
    %v2789 = vpop.permute.xlu0 %2788
    %2790 = vrot.lane.b32.xlu0 %v2783, 96
    %v2791 = vpop.permute.xlu0 %2790
    %v2792 = vsel %vm197, %v2778, 0
    %v2794 = vsel %vm197, %v2783, 0
    %v2796 = vsel %vm197, %v2789, 0
    %v2798 = vsel %vm197, %v2791, 0
    %2800 = vmatprep.subr.mxu0 0.0
    %2801 = vmatpush1.xpose.msra.mxu0 %v2796
    %2802 = vmatprep.subr.mxu0 0.0
    %2803 = vmatpush1.xpose.msra.mxu0 %v2798
    %2804 = vmatprep.subr.mxu0 0.0
    %2805 = vmatpush1.xpose.msra.mxu0 0.0
    %2806 = vmatprep.subr.mxu0 0.0
    %2807 = vmatpush1.xpose.msra.mxu0 0.0
    %2808 = vmatprep.subr.mxu0 0.0
    %2809 = vmatpush1.xpose.msra.mxu0 0.0
    %2810 = vmatprep.subr.mxu0 0.0
    %2811 = vmatpush1.xpose.msra.mxu0 0.0
    %2812 = vmatprep.subr.mxu0 0.0
    %2813 = vmatpush1.xpose.msra.mxu0 0.0
    %2814 = vmatprep.subr.mxu0 0.0
    %2815 = vmatpush1.xpose.msra.mxu0 0.0
    %2816 = vmatprep.subr.mxu0 0.0
    %2817 = vmatpush1.xpose.msra.mxu0 0.0
    %2818 = vmatprep.subr.mxu0 0.0
    %2819 = vmatpush1.xpose.msra.mxu0 0.0
    %2820 = vmatprep.subr.mxu0 0.0
    %2821 = vmatpush1.xpose.msra.mxu0 0.0
    %2822 = vmatprep.subr.mxu0 0.0
    %2823 = vmatpush1.xpose.msra.mxu0 0.0
    %2824 = vmatprep.subr.mxu0 0.0
    %2825 = vmatpush1.xpose.msra.mxu0 0.0
    %2826 = vmatprep.subr.mxu0 0.0
    %2827 = vmatpush1.xpose.msra.mxu0 0.0
    %2828 = vmatprep.subr.mxu0 0.0
    %2829 = vmatpush1.xpose.msra.mxu0 0.0
    %2830 = vmatprep.subr.mxu0 0.0
    %2831 = vmatpush1.xpose.msra.mxu0 0.0
    %2832 = vmatprep.subr.mxu0 0.0
    %2833 = vmatpush1.xpose.msra.mxu0 0.0
    %2834 = vmatprep.subr.mxu0 0.0
    %2835 = vmatpush1.xpose.msra.mxu0 0.0
    %2836 = vmatprep.subr.mxu0 0.0
    %2837 = vmatpush1.xpose.msra.mxu0 0.0
    %2838 = vmatprep.subr.mxu0 0.0
    %2839 = vmatpush1.xpose.msra.mxu0 0.0
    %2840 = vmatprep.subr.mxu0 0.0
    %2841 = vmatpush1.xpose.msra.mxu0 0.0
    %2842 = vmatprep.subr.mxu0 0.0
    %2843 = vmatpush1.xpose.msra.mxu0 0.0
    %2844 = vmatprep.subr.mxu0 0.0
    %2845 = vmatpush1.xpose.msra.mxu0 0.0
    %2846 = vmatprep.subr.mxu0 0.0
    %2847 = vmatpush1.xpose.msra.mxu0 0.0
    %2848 = vmatprep.subr.mxu0 0.0
    %2849 = vmatpush1.xpose.msra.mxu0 0.0
    %2850 = vmatprep.subr.mxu0 0.0
    %2851 = vmatpush1.xpose.msra.mxu0 0.0
    %2852 = vmatprep.subr.mxu0 0.0
    %2853 = vmatpush1.xpose.msra.mxu0 0.0
    %2854 = vmatprep.subr.mxu0 0.0
    %2855 = vmatpush1.xpose.msra.mxu0 0.0
    %2856 = vmatprep.subr.mxu0 0.0
    %2857 = vmatpush1.xpose.msra.mxu0 0.0
    %2858 = vmatprep.subr.mxu0 0.0
    %2859 = vmatpush1.xpose.msra.mxu0 0.0
    %2860 = vmatprep.subr.mxu0 0.0
    %2861 = vmatpush1.xpose.msra.mxu0 0.0
    %2862 = vmatprep.subr.mxu0 0.0
    %2863 = vmatpush1.xpose.msra.mxu0 0.0
    %2864 = vmatprep.mubr.f32.mxu0 0.0
    %2865 = vmatmul.mubr.f32.gmra.mrb[0].mxu0 %v2792
    %v2866 = vpop.f32.mrb[0].mxu0
    %v2867 = vadd.f32 %v73, %v2866
    %v2868 = vpop.f32.mrb[0].mxu0
    %2869 = vmatprep.mubr.f32.mxu0 0.0
    %2870 = vmatmul.mubr.f32.gmra.mrb[0].mxu0 %v2794
    %v2871 = vpop.f32.mrb[0].mxu0
    %v2872 = vadd.f32 %v74, %v2871
    %v2873 = vpop.f32.mrb[0].mxu0
    %2874 = vdwg.mxu0
    %v2875 = vsel %vm197, %v2867, -inf
    %2876 = vmax.xlane.f32.xlu0 %v2875
    %v2877 = vpop.xlane.xlu0 %2876
    %v2878 = vsel %vm197, %v2872, -inf
    %2879 = vmax.xlane.f32.xlu0 %v2878
    %v2880 = vpop.xlane.xlu0 %2879
    %v2881 = vsub.f32 %v2867, %v2877
    %v2882 = vsub.f32 %v2872, %v2880
    %v2883 = vmul.f32 %v2881, 1.442695
    %v2884 = vpow.pop %v2883
    %v2885 = vmul.f32 %v2882, 1.442695
    %v2886 = vpow.pop %v2885
    %v2887 = vsel %vm197, %v2884, 0.0
    %2888 = vadd.xlane.f32.xlu0 %v2887
    %v2889 = vpop.xlane.xlu0 %2888
    %v2890 = vsel %vm197, %v2886, 0.0
    %2891 = vadd.xlane.f32.xlu0 %v2890
    %v2892 = vpop.xlane.xlu0 %2891
    %v2893 = vrcp.pop %v2889
    %v2894 = vmul.f32 %v2884, %v2893
    %v2895 = vrcp.pop %v2892
    %v2896 = vmul.f32 %v2886, %v2895
    %2897 = vrot.lane.b32.xlu0 %v2778, 64
    %v2898 = vpop.permute.xlu0 %2897
    %2899 = vrot.lane.b32.xlu0 %v2783, 64
    %v2900 = vpop.permute.xlu0 %2899
    %v2904 = vsel %vm197, %v2894, 0
    %v2907 = vsel %vm197, %v2896, 0
    %2909 = vmatprep.subr.mxu0 0.0
    %2910 = vmatpush1.msra.mxu0 %v2898
    %2911 = vmatprep.subr.mxu0 0.0
    %2912 = vmatpush1.msra.mxu0 %v2900
    %2913 = vmatprep.subr.mxu0 0.0
    %2914 = vmatpush1.msra.mxu0 0.0
    %2915 = vmatprep.subr.mxu0 0.0
    %2916 = vmatpush1.msra.mxu0 0.0
    %2917 = vmatprep.subr.mxu0 0.0
    %2918 = vmatpush1.msra.mxu0 0.0
    %2919 = vmatprep.subr.mxu0 0.0
    %2920 = vmatpush1.msra.mxu0 0.0
    %2921 = vmatprep.subr.mxu0 0.0
    %2922 = vmatpush1.msra.mxu0 0.0
    %2923 = vmatprep.subr.mxu0 0.0
    %2924 = vmatpush1.msra.mxu0 0.0
    %2925 = vmatprep.subr.mxu0 0.0
    %2926 = vmatpush1.msra.mxu0 0.0
    %2927 = vmatprep.subr.mxu0 0.0
    %2928 = vmatpush1.msra.mxu0 0.0
    %2929 = vmatprep.subr.mxu0 0.0
    %2930 = vmatpush1.msra.mxu0 0.0
    %2931 = vmatprep.subr.mxu0 0.0
    %2932 = vmatpush1.msra.mxu0 0.0
    %2933 = vmatprep.subr.mxu0 0.0
    %2934 = vmatpush1.msra.mxu0 0.0
    %2935 = vmatprep.subr.mxu0 0.0
    %2936 = vmatpush1.msra.mxu0 0.0
    %2937 = vmatprep.subr.mxu0 0.0
    %2938 = vmatpush1.msra.mxu0 0.0
    %2939 = vmatprep.subr.mxu0 0.0
    %2940 = vmatpush1.msra.mxu0 0.0
    %2941 = vmatprep.subr.mxu0 0.0
    %2942 = vmatpush1.msra.mxu0 0.0
    %2943 = vmatprep.subr.mxu0 0.0
    %2944 = vmatpush1.msra.mxu0 0.0
    %2945 = vmatprep.subr.mxu0 0.0
    %2946 = vmatpush1.msra.mxu0 0.0
    %2947 = vmatprep.subr.mxu0 0.0
    %2948 = vmatpush1.msra.mxu0 0.0
    %2949 = vmatprep.subr.mxu0 0.0
    %2950 = vmatpush1.msra.mxu0 0.0
    %2951 = vmatprep.subr.mxu0 0.0
    %2952 = vmatpush1.msra.mxu0 0.0
    %2953 = vmatprep.subr.mxu0 0.0
    %2954 = vmatpush1.msra.mxu0 0.0
    %2955 = vmatprep.subr.mxu0 0.0
    %2956 = vmatpush1.msra.mxu0 0.0
    %2957 = vmatprep.subr.mxu0 0.0
    %2958 = vmatpush1.msra.mxu0 0.0
    %2959 = vmatprep.subr.mxu0 0.0
    %2960 = vmatpush1.msra.mxu0 0.0
    %2961 = vmatprep.subr.mxu0 0.0
    %2962 = vmatpush1.msra.mxu0 0.0
    %2963 = vmatprep.subr.mxu0 0.0
    %2964 = vmatpush1.msra.mxu0 0.0
    %2965 = vmatprep.subr.mxu0 0.0
    %2966 = vmatpush1.msra.mxu0 0.0
    %2967 = vmatprep.subr.mxu0 0.0
    %2968 = vmatpush1.msra.mxu0 0.0
    %2969 = vmatprep.subr.mxu0 0.0
    %2970 = vmatpush1.msra.mxu0 0.0
    %2971 = vmatprep.subr.mxu0 0.0
    %2972 = vmatpush1.msra.mxu0 0.0
    %2973 = vmatprep.mubr.f32.mxu0 0.0
    %2974 = vmatmul.mubr.f32.gmra.mrb[0].mxu0 %v2904
    %v2975 = vpop.f32.mrb[0].mxu0
    %v2976 = vadd.f32 0.0, %v2975
    %v2977 = vpop.f32.mrb[0].mxu0
    %2978 = vmatprep.mubr.f32.mxu0 0.0
    %2979 = vmatmul.mubr.f32.gmra.mrb[0].mxu0 %v2907
    %v2980 = vpop.f32.mrb[0].mxu0
    %v2981 = vadd.f32 0.0, %v2980
    %v2982 = vpop.f32.mrb[0].mxu0
    %2983 = vdwg.mxu0
    %2984 = vrot.lane.b32.xlu0 %v2778, 112
    %v2985 = vpop.permute.xlu0 %2984
    %2986 = vrot.lane.b32.xlu0 %v2783, 112
    %v2987 = vpop.permute.xlu0 %2986
    %2988 = vrot.lane.b32.xlu0 %v2778, 80
    %v2989 = vpop.permute.xlu0 %2988
    %2990 = vrot.lane.b32.xlu0 %v2783, 80
    %v2991 = vpop.permute.xlu0 %2990
    %v2992 = vsel %vm197, %v2985, 0
    %v2994 = vsel %vm197, %v2987, 0
    %v2996 = vsel %vm197, %v2989, 0
    %v2998 = vsel %vm197, %v2991, 0
    %3000 = vmatprep.subr.mxu0 0.0
    %3001 = vmatpush1.xpose.msra.mxu0 %v2996
    %3002 = vmatprep.subr.mxu0 0.0
    %3003 = vmatpush1.xpose.msra.mxu0 %v2998
    %3004 = vmatprep.subr.mxu0 0.0
    %3005 = vmatpush1.xpose.msra.mxu0 0.0
    %3006 = vmatprep.subr.mxu0 0.0
    %3007 = vmatpush1.xpose.msra.mxu0 0.0
    %3008 = vmatprep.subr.mxu0 0.0
    %3009 = vmatpush1.xpose.msra.mxu0 0.0
    %3010 = vmatprep.subr.mxu0 0.0
    %3011 = vmatpush1.xpose.msra.mxu0 0.0
    %3012 = vmatprep.subr.mxu0 0.0
    %3013 = vmatpush1.xpose.msra.mxu0 0.0
    %3014 = vmatprep.subr.mxu0 0.0
    %3015 = vmatpush1.xpose.msra.mxu0 0.0
    %3016 = vmatprep.subr.mxu0 0.0
    %3017 = vmatpush1.xpose.msra.mxu0 0.0
    %3018 = vmatprep.subr.mxu0 0.0
    %3019 = vmatpush1.xpose.msra.mxu0 0.0
    %3020 = vmatprep.subr.mxu0 0.0
    %3021 = vmatpush1.xpose.msra.mxu0 0.0
    %3022 = vmatprep.subr.mxu0 0.0
    %3023 = vmatpush1.xpose.msra.mxu0 0.0
    %3024 = vmatprep.subr.mxu0 0.0
    %3025 = vmatpush1.xpose.msra.mxu0 0.0
    %3026 = vmatprep.subr.mxu0 0.0
    %3027 = vmatpush1.xpose.msra.mxu0 0.0
    %3028 = vmatprep.subr.mxu0 0.0
    %3029 = vmatpush1.xpose.msra.mxu0 0.0
    %3030 = vmatprep.subr.mxu0 0.0
    %3031 = vmatpush1.xpose.msra.mxu0 0.0
    %3032 = vmatprep.subr.mxu0 0.0
    %3033 = vmatpush1.xpose.msra.mxu0 0.0
    %3034 = vmatprep.subr.mxu0 0.0
    %3035 = vmatpush1.xpose.msra.mxu0 0.0
    %3036 = vmatprep.subr.mxu0 0.0
    %3037 = vmatpush1.xpose.msra.mxu0 0.0
    %3038 = vmatprep.subr.mxu0 0.0
    %3039 = vmatpush1.xpose.msra.mxu0 0.0
    %3040 = vmatprep.subr.mxu0 0.0
    %3041 = vmatpush1.xpose.msra.mxu0 0.0
    %3042 = vmatprep.subr.mxu0 0.0
    %3043 = vmatpush1.xpose.msra.mxu0 0.0
    %3044 = vmatprep.subr.mxu0 0.0
    %3045 = vmatpush1.xpose.msra.mxu0 0.0
    %3046 = vmatprep.subr.mxu0 0.0
    %3047 = vmatpush1.xpose.msra.mxu0 0.0
    %3048 = vmatprep.subr.mxu0 0.0
    %3049 = vmatpush1.xpose.msra.mxu0 0.0
    %3050 = vmatprep.subr.mxu0 0.0
    %3051 = vmatpush1.xpose.msra.mxu0 0.0
    %3052 = vmatprep.subr.mxu0 0.0
    %3053 = vmatpush1.xpose.msra.mxu0 0.0
    %3054 = vmatprep.subr.mxu0 0.0
    %3055 = vmatpush1.xpose.msra.mxu0 0.0
    %3056 = vmatprep.subr.mxu0 0.0
    %3057 = vmatpush1.xpose.msra.mxu0 0.0
    %3058 = vmatprep.subr.mxu0 0.0
    %3059 = vmatpush1.xpose.msra.mxu0 0.0
    %3060 = vmatprep.subr.mxu0 0.0
    %3061 = vmatpush1.xpose.msra.mxu0 0.0
    %3062 = vmatprep.subr.mxu0 0.0
    %3063 = vmatpush1.xpose.msra.mxu0 0.0
    %3064 = vmatprep.mubr.f32.mxu0 0.0
    %3065 = vmatmul.mubr.f32.gmra.mrb[0].mxu0 %v2992
    %v3066 = vpop.f32.mrb[0].mxu0
    %v3067 = vadd.f32 %v73, %v3066
    %v3068 = vpop.f32.mrb[0].mxu0
    %3069 = vmatprep.mubr.f32.mxu0 0.0
    %3070 = vmatmul.mubr.f32.gmra.mrb[0].mxu0 %v2994
    %v3071 = vpop.f32.mrb[0].mxu0
    %v3072 = vadd.f32 %v74, %v3071
    %v3073 = vpop.f32.mrb[0].mxu0
    %3074 = vdwg.mxu0
    %v3075 = vsel %vm197, %v3067, -inf
    %3076 = vmax.xlane.f32.xlu0 %v3075
    %v3077 = vpop.xlane.xlu0 %3076
    %v3078 = vsel %vm197, %v3072, -inf
    %3079 = vmax.xlane.f32.xlu0 %v3078
    %v3080 = vpop.xlane.xlu0 %3079
    %v3081 = vsub.f32 %v3067, %v3077
    %v3082 = vsub.f32 %v3072, %v3080
    %v3083 = vmul.f32 %v3081, 1.442695
    %v3084 = vpow.pop %v3083
    %v3085 = vmul.f32 %v3082, 1.442695
    %v3086 = vpow.pop %v3085
    %v3087 = vsel %vm197, %v3084, 0.0
    %3088 = vadd.xlane.f32.xlu0 %v3087
    %v3089 = vpop.xlane.xlu0 %3088
    %v3090 = vsel %vm197, %v3086, 0.0
    %3091 = vadd.xlane.f32.xlu0 %v3090
    %v3092 = vpop.xlane.xlu0 %3091
    %v3093 = vrcp.pop %v3089
    %v3094 = vmul.f32 %v3084, %v3093
    %v3095 = vrcp.pop %v3092
    %v3096 = vmul.f32 %v3086, %v3095
    %3097 = vrot.lane.b32.xlu0 %v2778, 48
    %v3098 = vpop.permute.xlu0 %3097
    %3099 = vrot.lane.b32.xlu0 %v2783, 48
    %v3100 = vpop.permute.xlu0 %3099
    %v3104 = vsel %vm197, %v3094, 0
    %v3107 = vsel %vm197, %v3096, 0
    %3109 = vmatprep.subr.mxu0 0.0
    %3110 = vmatpush1.msra.mxu0 %v3098
    %3111 = vmatprep.subr.mxu0 0.0
    %3112 = vmatpush1.msra.mxu0 %v3100
    %3113 = vmatprep.subr.mxu0 0.0
    %3114 = vmatpush1.msra.mxu0 0.0
    %3115 = vmatprep.subr.mxu0 0.0
    %3116 = vmatpush1.msra.mxu0 0.0
    %3117 = vmatprep.subr.mxu0 0.0
    %3118 = vmatpush1.msra.mxu0 0.0
    %3119 = vmatprep.subr.mxu0 0.0
    %3120 = vmatpush1.msra.mxu0 0.0
    %3121 = vmatprep.subr.mxu0 0.0
    %3122 = vmatpush1.msra.mxu0 0.0
    %3123 = vmatprep.subr.mxu0 0.0
    %3124 = vmatpush1.msra.mxu0 0.0
    %3125 = vmatprep.subr.mxu0 0.0
    %3126 = vmatpush1.msra.mxu0 0.0
    %3127 = vmatprep.subr.mxu0 0.0
    %3128 = vmatpush1.msra.mxu0 0.0
    %3129 = vmatprep.subr.mxu0 0.0
    %3130 = vmatpush1.msra.mxu0 0.0
    %3131 = vmatprep.subr.mxu0 0.0
    %3132 = vmatpush1.msra.mxu0 0.0
    %3133 = vmatprep.subr.mxu0 0.0
    %3134 = vmatpush1.msra.mxu0 0.0
    %3135 = vmatprep.subr.mxu0 0.0
    %3136 = vmatpush1.msra.mxu0 0.0
    %3137 = vmatprep.subr.mxu0 0.0
    %3138 = vmatpush1.msra.mxu0 0.0
    %3139 = vmatprep.subr.mxu0 0.0
    %3140 = vmatpush1.msra.mxu0 0.0
    %3141 = vmatprep.subr.mxu0 0.0
    %3142 = vmatpush1.msra.mxu0 0.0
    %3143 = vmatprep.subr.mxu0 0.0
    %3144 = vmatpush1.msra.mxu0 0.0
    %3145 = vmatprep.subr.mxu0 0.0
    %3146 = vmatpush1.msra.mxu0 0.0
    %3147 = vmatprep.subr.mxu0 0.0
    %3148 = vmatpush1.msra.mxu0 0.0
    %3149 = vmatprep.subr.mxu0 0.0
    %3150 = vmatpush1.msra.mxu0 0.0
    %3151 = vmatprep.subr.mxu0 0.0
    %3152 = vmatpush1.msra.mxu0 0.0
    %3153 = vmatprep.subr.mxu0 0.0
    %3154 = vmatpush1.msra.mxu0 0.0
    %3155 = vmatprep.subr.mxu0 0.0
    %3156 = vmatpush1.msra.mxu0 0.0
    %3157 = vmatprep.subr.mxu0 0.0
    %3158 = vmatpush1.msra.mxu0 0.0
    %3159 = vmatprep.subr.mxu0 0.0
    %3160 = vmatpush1.msra.mxu0 0.0
    %3161 = vmatprep.subr.mxu0 0.0
    %3162 = vmatpush1.msra.mxu0 0.0
    %3163 = vmatprep.subr.mxu0 0.0
    %3164 = vmatpush1.msra.mxu0 0.0
    %3165 = vmatprep.subr.mxu0 0.0
    %3166 = vmatpush1.msra.mxu0 0.0
    %3167 = vmatprep.subr.mxu0 0.0
    %3168 = vmatpush1.msra.mxu0 0.0
    %3169 = vmatprep.subr.mxu0 0.0
    %3170 = vmatpush1.msra.mxu0 0.0
    %3171 = vmatprep.subr.mxu0 0.0
    %3172 = vmatpush1.msra.mxu0 0.0
    %3173 = vmatprep.mubr.f32.mxu0 0.0
    %3174 = vmatmul.mubr.f32.gmra.mrb[0].mxu0 %v3104
    %v3175 = vpop.f32.mrb[0].mxu0
    %v3176 = vadd.f32 0.0, %v3175
    %v3177 = vpop.f32.mrb[0].mxu0
    %3178 = vmatprep.mubr.f32.mxu0 0.0
    %3179 = vmatmul.mubr.f32.gmra.mrb[0].mxu0 %v3107
    %v3180 = vpop.f32.mrb[0].mxu0
    %v3181 = vadd.f32 0.0, %v3180
    %v3182 = vpop.f32.mrb[0].mxu0
    %3183 = vdwg.mxu0
    %3186 = vrot.lane.b32.xlu0 %v3176, 16
    %v3187 = vpop.permute.xlu0 %3186
    %3188 = vrot.lane.b32.xlu0 %v3181, 16
    %v3189 = vpop.permute.xlu0 %3188
    %v3192 = vsel %vm197, %v2976, %v3187
    %v3193 = vsel %vm197, %v2981, %v3189
    %v3195 = vsel %vm109, %v3192, 0
    %v3198 = vsel %vm109, %v3193, 0
    %3200 = vmatprep.subr.mxu0 0.0
    %3201 = vmatpush1.msra.mxu0 %v2676
    %3202 = vmatprep.subr.mxu0 0.0
    %3203 = vmatpush1.msra.mxu0 %v2677
    %3204 = vmatprep.subr.mxu0 0.0
    %3205 = vmatpush1.msra.mxu0 %v2678
    %3206 = vmatprep.subr.mxu0 0.0
    %3207 = vmatpush1.msra.mxu0 %v2679
    %3208 = vmatprep.subr.mxu0 0.0
    %3209 = vmatpush1.msra.mxu0 0.0
    %3210 = vmatprep.subr.mxu0 0.0
    %3211 = vmatpush1.msra.mxu0 0.0
    %3212 = vmatprep.subr.mxu0 0.0
    %3213 = vmatpush1.msra.mxu0 0.0
    %3214 = vmatprep.subr.mxu0 0.0
    %3215 = vmatpush1.msra.mxu0 0.0
    %3216 = vmatprep.subr.mxu0 0.0
    %3217 = vmatpush1.msra.mxu0 0.0
    %3218 = vmatprep.subr.mxu0 0.0
    %3219 = vmatpush1.msra.mxu0 0.0
    %3220 = vmatprep.subr.mxu0 0.0
    %3221 = vmatpush1.msra.mxu0 0.0
    %3222 = vmatprep.subr.mxu0 0.0
    %3223 = vmatpush1.msra.mxu0 0.0
    %3224 = vmatprep.subr.mxu0 0.0
    %3225 = vmatpush1.msra.mxu0 0.0
    %3226 = vmatprep.subr.mxu0 0.0
    %3227 = vmatpush1.msra.mxu0 0.0
    %3228 = vmatprep.subr.mxu0 0.0
    %3229 = vmatpush1.msra.mxu0 0.0
    %3230 = vmatprep.subr.mxu0 0.0
    %3231 = vmatpush1.msra.mxu0 0.0
    %3232 = vmatprep.subr.mxu0 0.0
    %3233 = vmatpush1.msra.mxu0 0.0
    %3234 = vmatprep.subr.mxu0 0.0
    %3235 = vmatpush1.msra.mxu0 0.0
    %3236 = vmatprep.subr.mxu0 0.0
    %3237 = vmatpush1.msra.mxu0 0.0
    %3238 = vmatprep.subr.mxu0 0.0
    %3239 = vmatpush1.msra.mxu0 0.0
    %3240 = vmatprep.subr.mxu0 0.0
    %3241 = vmatpush1.msra.mxu0 0.0
    %3242 = vmatprep.subr.mxu0 0.0
    %3243 = vmatpush1.msra.mxu0 0.0
    %3244 = vmatprep.subr.mxu0 0.0
    %3245 = vmatpush1.msra.mxu0 0.0
    %3246 = vmatprep.subr.mxu0 0.0
    %3247 = vmatpush1.msra.mxu0 0.0
    %3248 = vmatprep.subr.mxu0 0.0
    %3249 = vmatpush1.msra.mxu0 0.0
    %3250 = vmatprep.subr.mxu0 0.0
    %3251 = vmatpush1.msra.mxu0 0.0
    %3252 = vmatprep.subr.mxu0 0.0
    %3253 = vmatpush1.msra.mxu0 0.0
    %3254 = vmatprep.subr.mxu0 0.0
    %3255 = vmatpush1.msra.mxu0 0.0
    %3256 = vmatprep.subr.mxu0 0.0
    %3257 = vmatpush1.msra.mxu0 0.0
    %3258 = vmatprep.subr.mxu0 0.0
    %3259 = vmatpush1.msra.mxu0 0.0
    %3260 = vmatprep.subr.mxu0 0.0
    %3261 = vmatpush1.msra.mxu0 0.0
    %3262 = vmatprep.subr.mxu0 0.0
    %3263 = vmatpush1.msra.mxu0 0.0
    %3264 = vmatprep.mubr.f32.mxu0 0.0
    %3265 = vmatmul.mubr.f32.gmra.mrb[0].mxu0 %v3195
    %v3266 = vpop.f32.mrb[0].mxu0
    %v3267 = vadd.f32 0.0, %v3266
    %v3268 = vpop.f32.mrb[0].mxu0
    %3269 = vmatprep.mubr.f32.mxu0 0.0
    %3270 = vmatmul.mubr.f32.gmra.mrb[0].mxu0 %v3198
    %v3271 = vpop.f32.mrb[0].mxu0
    %v3272 = vadd.f32 0.0, %v3271
    %v3273 = vpop.f32.mrb[0].mxu0
    %3274 = vdwg.mxu0
    %v3275 = vlaneseq
    %v3276 = vshrl.u32 %v3275, 7
    %v3277 = vsub.s32 0, %v3276
    %v3278 = vrot.slane %v2694, %v3277
    %v3279 = vadd.f32 %v3267, %v3278
    %v3280 = vadd.f32 %v3272, %v3278
    %v3281 = vadd.f32 %v2669, %v3279
    %v3282 = vadd.f32 %v2670, %v3280
    %v3283 = vsel %vm109, %v3281, 0.0
    %3284 = vadd.xlane.f32.xlu0 %v3283
    %v3285 = vpop.xlane.xlu0 %3284
    %v3286 = vsel %vm109, %v3282, 0.0
    %3287 = vadd.xlane.f32.xlu0 %v3286
    %v3288 = vpop.xlane.xlu0 %3287
    %v3289 = vmul.f32 %v3285, %v695
    %v3290 = vmul.f32 %v3288, %v695
    %v3291 = vsub.f32 %v3281, %v3289
    %v3292 = vsub.f32 %v3282, %v3290
    %v3293 = vmul.f32 %v3291, %v3291
    %v3294 = vmul.f32 %v3292, %v3292
    %v3295 = vsel %vm109, %v3293, 0.0
    %3296 = vadd.xlane.f32.xlu0 %v3295
    %v3297 = vpop.xlane.xlu0 %3296
    %v3298 = vsel %vm109, %v3294, 0.0
    %3299 = vadd.xlane.f32.xlu0 %v3298
    %v3300 = vpop.xlane.xlu0 %3299
    %v3301 = vmul.f32 %v3297, %v695
    %v3302 = vmul.f32 %v3300, %v695
    %v3303 = vadd.f32 %v3301, 1e-05
    %v3304 = vadd.f32 %v3302, 1e-05
    %v3305 = vrsqrt.pop %v3303
    %v3306 = vrsqrt.pop %v3304
    %v3307 = vmul.f32 %v3291, %v3305
    %v3308 = vmul.f32 %v3292, %v3306
    %v3309 = vlaneseq
    %v3310 = vshrl.u32 %v3309, 7
    %v3311 = vsub.s32 0, %v3310
    %v3312 = vrot.slane %v2697, %v3311
    %v3313 = vmul.f32 %v3307, %v3312
    %v3314 = vmul.f32 %v3308, %v3312
    %v3315 = vlaneseq
    %v3316 = vshrl.u32 %v3315, 7
    %v3317 = vsub.s32 0, %v3316
    %v3318 = vrot.slane %v2698, %v3317
    %v3319 = vadd.f32 %v3313, %v3318
    %v3320 = vadd.f32 %v3314, %v3318
    %v3321 = vlaneseq
    %v3322 = vshrl.u32 %v3321, 7
    %v3323 = vsub.s32 0, %v3322
    %v3324 = vrot.slane %v2695, %v3323
    %v3326 = vsel %vm109, %v3319, 0
    %v3329 = vsel %vm109, %v3320, 0
    %3331 = vmatprep.subr.mxu0 0.0
    %3332 = vmatpush1.msra.mxu0 %v2680
    %3333 = vmatprep.subr.mxu0 0.0
    %3334 = vmatpush1.msra.mxu0 %v2681
    %3335 = vmatprep.subr.mxu0 0.0
    %3336 = vmatpush1.msra.mxu0 %v2682
    %3337 = vmatprep.subr.mxu0 0.0
    %3338 = vmatpush1.msra.mxu0 %v2683
    %3339 = vmatprep.subr.mxu0 0.0
    %3340 = vmatpush1.msra.mxu0 0.0
    %3341 = vmatprep.subr.mxu0 0.0
    %3342 = vmatpush1.msra.mxu0 0.0
    %3343 = vmatprep.subr.mxu0 0.0
    %3344 = vmatpush1.msra.mxu0 0.0
    %3345 = vmatprep.subr.mxu0 0.0
    %3346 = vmatpush1.msra.mxu0 0.0
    %3347 = vmatprep.subr.mxu0 0.0
    %3348 = vmatpush1.msra.mxu0 0.0
    %3349 = vmatprep.subr.mxu0 0.0
    %3350 = vmatpush1.msra.mxu0 0.0
    %3351 = vmatprep.subr.mxu0 0.0
    %3352 = vmatpush1.msra.mxu0 0.0
    %3353 = vmatprep.subr.mxu0 0.0
    %3354 = vmatpush1.msra.mxu0 0.0
    %3355 = vmatprep.subr.mxu0 0.0
    %3356 = vmatpush1.msra.mxu0 0.0
    %3357 = vmatprep.subr.mxu0 0.0
    %3358 = vmatpush1.msra.mxu0 0.0
    %3359 = vmatprep.subr.mxu0 0.0
    %3360 = vmatpush1.msra.mxu0 0.0
    %3361 = vmatprep.subr.mxu0 0.0
    %3362 = vmatpush1.msra.mxu0 0.0
    %3363 = vmatprep.subr.mxu0 0.0
    %3364 = vmatpush1.msra.mxu0 0.0
    %3365 = vmatprep.subr.mxu0 0.0
    %3366 = vmatpush1.msra.mxu0 0.0
    %3367 = vmatprep.subr.mxu0 0.0
    %3368 = vmatpush1.msra.mxu0 0.0
    %3369 = vmatprep.subr.mxu0 0.0
    %3370 = vmatpush1.msra.mxu0 0.0
    %3371 = vmatprep.subr.mxu0 0.0
    %3372 = vmatpush1.msra.mxu0 0.0
    %3373 = vmatprep.subr.mxu0 0.0
    %3374 = vmatpush1.msra.mxu0 0.0
    %3375 = vmatprep.subr.mxu0 0.0
    %3376 = vmatpush1.msra.mxu0 0.0
    %3377 = vmatprep.subr.mxu0 0.0
    %3378 = vmatpush1.msra.mxu0 0.0
    %3379 = vmatprep.subr.mxu0 0.0
    %3380 = vmatpush1.msra.mxu0 0.0
    %3381 = vmatprep.subr.mxu0 0.0
    %3382 = vmatpush1.msra.mxu0 0.0
    %3383 = vmatprep.subr.mxu0 0.0
    %3384 = vmatpush1.msra.mxu0 0.0
    %3385 = vmatprep.subr.mxu0 0.0
    %3386 = vmatpush1.msra.mxu0 0.0
    %3387 = vmatprep.subr.mxu0 0.0
    %3388 = vmatpush1.msra.mxu0 0.0
    %3389 = vmatprep.subr.mxu0 0.0
    %3390 = vmatpush1.msra.mxu0 0.0
    %3391 = vmatprep.subr.mxu0 0.0
    %3392 = vmatpush1.msra.mxu0 0.0
    %3393 = vmatprep.subr.mxu0 0.0
    %3394 = vmatpush1.msra.mxu0 0.0
    %3395 = vmatprep.mubr.f32.mxu0 0.0
    %3396 = vmatmul.mubr.f32.gmra.mrb[0].mxu0 %v3326
    %v3397 = vpop.f32.mrb[0].mxu0
    %v3398 = vadd.f32 %v3324, %v3397
    %v3399 = vpop.f32.mrb[0].mxu0
    %3400 = vmatprep.mubr.f32.mxu0 0.0
    %3401 = vmatmul.mubr.f32.gmra.mrb[0].mxu0 %v3329
    %v3402 = vpop.f32.mrb[0].mxu0
    %v3403 = vadd.f32 %v3324, %v3402
    %v3404 = vpop.f32.mrb[0].mxu0
    %3405 = vdwg.mxu0
    %v3406 = vmax.f32 %v3398, 0.0
    %v3407 = vmax.f32 %v3403, 0.0
    %v3409 = vsel %vm815, %v3406, 0
    %v3412 = vsel %vm815, %v3407, 0
    %3414 = vmatprep.subr.mxu0 0.0
    %3415 = vmatpush1.msra.mxu0 %v2684
    %3416 = vmatprep.subr.mxu0 0.0
    %3417 = vmatpush1.msra.mxu0 %v2685
    %3418 = vmatprep.subr.mxu0 0.0
    %3419 = vmatpush1.msra.mxu0 %v2686
    %3420 = vmatprep.subr.mxu0 0.0
    %3421 = vmatpush1.msra.mxu0 %v2687
    %3422 = vmatprep.subr.mxu0 0.0
    %3423 = vmatpush1.msra.mxu0 %v2688
    %3424 = vmatprep.subr.mxu0 0.0
    %3425 = vmatpush1.msra.mxu0 %v2689
    %3426 = vmatprep.subr.mxu0 0.0
    %3427 = vmatpush1.msra.mxu0 %v2690
    %3428 = vmatprep.subr.mxu0 0.0
    %3429 = vmatpush1.msra.mxu0 %v2691
    %3430 = vmatprep.subr.mxu0 0.0
    %3431 = vmatpush1.msra.mxu0 0.0
    %3432 = vmatprep.subr.mxu0 0.0
    %3433 = vmatpush1.msra.mxu0 0.0
    %3434 = vmatprep.subr.mxu0 0.0
    %3435 = vmatpush1.msra.mxu0 0.0
    %3436 = vmatprep.subr.mxu0 0.0
    %3437 = vmatpush1.msra.mxu0 0.0
    %3438 = vmatprep.subr.mxu0 0.0
    %3439 = vmatpush1.msra.mxu0 0.0
    %3440 = vmatprep.subr.mxu0 0.0
    %3441 = vmatpush1.msra.mxu0 0.0
    %3442 = vmatprep.subr.mxu0 0.0
    %3443 = vmatpush1.msra.mxu0 0.0
    %3444 = vmatprep.subr.mxu0 0.0
    %3445 = vmatpush1.msra.mxu0 0.0
    %3446 = vmatprep.subr.mxu0 0.0
    %3447 = vmatpush1.msra.mxu0 0.0
    %3448 = vmatprep.subr.mxu0 0.0
    %3449 = vmatpush1.msra.mxu0 0.0
    %3450 = vmatprep.subr.mxu0 0.0
    %3451 = vmatpush1.msra.mxu0 0.0
    %3452 = vmatprep.subr.mxu0 0.0
    %3453 = vmatpush1.msra.mxu0 0.0
    %3454 = vmatprep.subr.mxu0 0.0
    %3455 = vmatpush1.msra.mxu0 0.0
    %3456 = vmatprep.subr.mxu0 0.0
    %3457 = vmatpush1.msra.mxu0 0.0
    %3458 = vmatprep.subr.mxu0 0.0
    %3459 = vmatpush1.msra.mxu0 0.0
    %3460 = vmatprep.subr.mxu0 0.0
    %3461 = vmatpush1.msra.mxu0 0.0
    %3462 = vmatprep.subr.mxu0 0.0
    %3463 = vmatpush1.msra.mxu0 0.0
    %3464 = vmatprep.subr.mxu0 0.0
    %3465 = vmatpush1.msra.mxu0 0.0
    %3466 = vmatprep.subr.mxu0 0.0
    %3467 = vmatpush1.msra.mxu0 0.0
    %3468 = vmatprep.subr.mxu0 0.0
    %3469 = vmatpush1.msra.mxu0 0.0
    %3470 = vmatprep.subr.mxu0 0.0
    %3471 = vmatpush1.msra.mxu0 0.0
    %3472 = vmatprep.subr.mxu0 0.0
    %3473 = vmatpush1.msra.mxu0 0.0
    %3474 = vmatprep.subr.mxu0 0.0
    %3475 = vmatpush1.msra.mxu0 0.0
    %3476 = vmatprep.subr.mxu0 0.0
    %3477 = vmatpush1.msra.mxu0 0.0
    %3478 = vmatprep.mubr.f32.mxu0 0.0
    %3479 = vmatmul.mubr.f32.gmra.mrb[0].mxu0 %v3409
    %v3480 = vpop.f32.mrb[0].mxu0
    %v3481 = vadd.f32 0.0, %v3480
    %v3482 = vpop.f32.mrb[0].mxu0
    %3483 = vmatprep.mubr.f32.mxu0 0.0
    %3484 = vmatmul.mubr.f32.gmra.mrb[0].mxu0 %v3412
    %v3485 = vpop.f32.mrb[0].mxu0
    %v3486 = vadd.f32 0.0, %v3485
    %v3487 = vpop.f32.mrb[0].mxu0
    %3488 = vdwg.mxu0
    %v3489 = vlaneseq
    %v3490 = vshrl.u32 %v3489, 7
    %v3491 = vsub.s32 0, %v3490
    %v3492 = vrot.slane %v2696, %v3491
    %v3493 = vadd.f32 %v3481, %v3492
    %v3494 = vadd.f32 %v3486, %v3492
    %v3495 = vadd.f32 %v3319, %v3493
    %v3496 = vadd.f32 %v3320, %v3494
    %v3497 = vsel %vm109, %v3495, 0.0
    %3498 = vadd.xlane.f32.xlu0 %v3497
    %v3499 = vpop.xlane.xlu0 %3498
    %v3500 = vsel %vm109, %v3496, 0.0
    %3501 = vadd.xlane.f32.xlu0 %v3500
    %v3502 = vpop.xlane.xlu0 %3501
    %v3503 = vmul.f32 %v3499, %v695
    %v3504 = vmul.f32 %v3502, %v695
    %v3505 = vsub.f32 %v3495, %v3503
    %v3506 = vsub.f32 %v3496, %v3504
    %v3507 = vmul.f32 %v3505, %v3505
    %v3508 = vmul.f32 %v3506, %v3506
    %v3509 = vsel %vm109, %v3507, 0.0
    %3510 = vadd.xlane.f32.xlu0 %v3509
    %v3511 = vpop.xlane.xlu0 %3510
    %v3512 = vsel %vm109, %v3508, 0.0
    %3513 = vadd.xlane.f32.xlu0 %v3512
    %v3514 = vpop.xlane.xlu0 %3513
    %v3515 = vmul.f32 %v3511, %v695
    %v3516 = vmul.f32 %v3514, %v695
    %v3517 = vadd.f32 %v3515, 1e-05
    %v3518 = vadd.f32 %v3516, 1e-05
    %v3519 = vrsqrt.pop %v3517
    %v3520 = vrsqrt.pop %v3518
    %v3521 = vmul.f32 %v3505, %v3519
    %v3522 = vmul.f32 %v3506, %v3520
    %v3523 = vlaneseq
    %v3524 = vshrl.u32 %v3523, 7
    %v3525 = vsub.s32 0, %v3524
    %v3526 = vrot.slane %v2699, %v3525
    %v3527 = vmul.f32 %v3521, %v3526
    %v3528 = vmul.f32 %v3522, %v3526
    %v3529 = vlaneseq
    %v3530 = vshrl.u32 %v3529, 7
    %v3531 = vsub.s32 0, %v3530
    %v3532 = vrot.slane %v2700, %v3531
    %v3533 = vadd.f32 %v3527, %v3532
    %v3534 = vadd.f32 %v3528, %v3532
    %3535 = vst.msk [vmem:[#allocation10] sm:$0xff] %vm109, %v3533
    %3536 = vst.msk [vmem:[#allocation10 + $0x8] sm:$0xff] %vm109, %v3534
    // Predicated region
    $region34: #{tpu_custom_call.1} parent=1 // pred_check
      _
    $region35: #{tpu_custom_call.1} parent=1 // pred_check_branch
      %3538 = sbr.rel (0) target = $region37
    $region36: #{tpu_custom_call.1} parent=1 // pred_region
      %s3540 = ssub.s32 256, 256
      %3541 = vsyncadd [#allocation4], %s3540
      %s3542 = sshll.u32 [#allocation10], 4
      %s3543 = int_to_ptr.vmem [resolvable:$true] %s3542
      %3548 = dma.vmem_to_hbm [thread:$0]  %s3543, 256, %s4, [#allocation4], 128, 128, 8
    $region37: #{tpu_custom_call.1} parent=1 // pred_fallthru
      _
    // Predicated region
    $region38: #{tpu_custom_call.1} parent=1 // pred_check
      _
    $region39: #{tpu_custom_call.1} parent=1 // pred_check_branch
      %3550 = sbr.rel (0) target = $region41
    $region40: #{tpu_custom_call.1} parent=1 // pred_region
      %3551 = dma.done [#allocation4], 256
    $region41: #{tpu_custom_call.1} parent=1 // pred_fallthru
      _
    %3552 = vsyncpa [#allocation3], 1
    %3553 = vsyncpa [#allocation6], 1
    %3554 = vsyncpa [#allocation9], 1
    %3555 = vsyncpa [#allocation4], 1

</llo_original>
